<compile_context>
chip_gen: v7x
topology: tpu7x:2x2x1
jax: 0.10.0
libtpu: 0.0.40
codegen_flags: <defaults>
</compile_context>

<pallas_src>
import numpy as np
import jax
import jax.numpy as jnp
from jax import lax
from jax.experimental import pallas as pl
from jax.experimental.pallas import tpu as pltpu

LANE = 128   # TPU lane width; channel / hidden / output dims zero-padded to this.


# ------------------------------ fused forward --------------------------------

def cnn_forward(params, x, block_b=None):
    n, cin, h, w = x.shape
    assert cin == 1, "module spec: Conv2d(1, 16, 3)"
    c1w, c1b = params["conv1_w"], params["conv1_b"]
    c2w, c2b = params["conv2_w"], params["conv2_b"]
    f1w, f1b = params["fc1_w"], params["fc1_b"]
    f2w, f2b = params["fc2_w"], params["fc2_b"]

    cout1, _, kh, kw = c1w.shape
    cout2 = c2w.shape[0]
    num_hidden = f1w.shape[0]
    num_outputs = f2w.shape[0]
    assert kh == 3 and kw == 3

    hc1, wc1 = h - kh + 1, w - kw + 1        # conv1 output spatial
    hp1, wp1 = hc1 // 2, wc1 // 2            # pool1 output spatial
    hc2, wc2 = hp1 - kh + 1, wp1 - kw + 1    # conv2 output spatial
    hp2, wp2 = hc2 // 2, wc2 // 2            # pool2 output spatial

    assert max(cout1, cout2, num_hidden, num_outputs) <= LANE
    assert f1w.shape[1] == cout2 * hp2 * wp2

    HW = h * w
    NTAP = kh * kw                           # 9
    PW = ((wp1 + 7) // 8) * 8                # padded pool1 row stride (7 -> 8)
    assert wp1 <= PW and hp1 <= PW
    P1S = PW * PW                            # per-image pool1 / conv2-slab stride (64)
    SLAB2 = (hc2 - 1) * PW + wc2             # conv2 row-slab length per image (37)
    SLAB2P = ((SLAB2 + 7) // 8) * 8          # padded to 8 rows (40)
    # conv2 tap reads stay inside each image's P1S region:
    assert SLAB2P - 1 + (kh - 1) * PW + (kw - 1) < P1S
    NR = hp2 * wp2                           # pool2 positions per image (4)

    # images per grid step
    if block_b is None:
        if n % 32 == 0:
            block_b = 32
        elif n % 8 == 0:
            block_b = 8
        else:
            block_b = n
    B = block_b
    assert n % B == 0
    assert B == n or B % 8 == 0

    L2P = (B - 1) * P1S + SLAB2P             # conv2 matmul rows per block
    C1CHUNK = 128                            # conv1 row-chunk (register-sized)
    C2CHUNK = 128                            # conv2 row-chunk

    f32 = jnp.float32

    # -------- layout prep (module boundary only, tiny XLA glue) --------
    # conv1 im2col: 9 column-shifted copies of the flat single-channel image.
    xf = x.reshape(n, HW).astype(f32)
    cols = [jnp.pad(xf[:, di * w + dj:], ((0, 0), (0, di * w + dj)))
            for di in range(kh) for dj in range(kw)]
    patches = jnp.stack(cols, axis=-1).reshape(n * HW, NTAP)     # (N*H*W, 9)

    def pad_b(b):
        return jnp.pad(b, (0, LANE - b.shape[0])).reshape(1, LANE).astype(f32)

    # conv1 weights: (16,1,3,3) -> (9, LANE)   [k=di*3+dj, cout]
    w1m = jnp.transpose(c1w.reshape(cout1, NTAP), (1, 0))
    w1m = jnp.pad(w1m, ((0, 0), (0, LANE - cout1))).astype(f32)

    # conv2 weights: (32,16,3,3) -> (9, LANE, LANE)   [k, cin, cout]
    w2m = jnp.transpose(c2w, (2, 3, 1, 0)).reshape(NTAP, cout1, cout2)
    w2m = jnp.pad(w2m, ((0, 0), (0, LANE - cout1), (0, LANE - cout2))).astype(f32)

    # fc1: torch flatten order (c, i, j) -> per spatial position r blocks [c, hidden]
    f1 = f1w.reshape(num_hidden, cout2, hp2, wp2)
    f1 = jnp.transpose(f1, (2, 3, 1, 0)).reshape(NR, cout2, num_hidden)
    f1p = jnp.pad(f1, ((0, 0), (0, LANE - cout2), (0, LANE - num_hidden))).astype(f32)

    f2p = jnp.pad(f2w.T, ((0, LANE - num_hidden), (0, LANE - num_outputs))).astype(f32)

    b1p, b2p, fb1p, fb2p = pad_b(c1b), pad_b(c2b), pad_b(f1b), pad_b(f2b)

    # ------------------------------ fused kernel ------------------------------
    def kernel(x_ref, w1_ref, b1_ref, w2_ref, b2_ref,
               f1w_ref, f1b_ref, f2w_ref, f2b_ref, out_ref,
               s1, p1, s2):
        # conv1: one im2col matmul (K=9) per 128-row chunk, fused bias + ReLU.
        b1row = b1_ref[...]
        for c0 in range(0, B * HW, C1CHUNK):
            sz = min(C1CHUNK, B * HW - c0)
            y = jnp.dot(x_ref[pl.ds(c0, sz), :], w1_ref[...],
                        preferred_element_type=jnp.float32)
            s1[pl.ds(c0, sz), :] = jnp.maximum(y + b1row, 0.0)

        # maxpool1 (2x2, stride 2): stride-2 row gathers + full-vreg VPU maxes,
        # compacted into an 8-padded per-image grid (row stride PW=8).
        p1[...] = jnp.zeros_like(p1)
        for b in range(B):
            for i in range(hp1):
                src = b * HW + (2 * i) * w
                r00 = s1[pl.ds(src, PW, stride=2), :]
                r01 = s1[pl.ds(src + 1, PW, stride=2), :]
                r10 = s1[pl.ds(src + w, PW, stride=2), :]
                r11 = s1[pl.ds(src + w + 1, PW, stride=2), :]
                p1[pl.ds(b * P1S + i * PW, PW), :] = jnp.maximum(
                    jnp.maximum(r00, r01), jnp.maximum(r10, r11))

        # conv2 (3x3 valid): 9 shifted-slab MXU matmuls over all B images at
        # once, accumulated in registers, fused bias + ReLU on the store.
        b2row = b2_ref[...]
        for c0 in range(0, L2P, C2CHUNK):
            sz = min(C2CHUNK, L2P - c0)
            acc = None
            for k in range(NTAP):
                di, dj = divmod(k, kw)
                lhs = p1[pl.ds(c0 + di * PW + dj, sz), :]
                prod = jnp.dot(lhs, w2_ref[k], preferred_element_type=jnp.float32)
                acc = prod if acc is None else acc + prod
            s2[pl.ds(c0, sz), :] = jnp.maximum(acc + b2row, 0.0)

        # maxpool2 fused with fc1: per spatial position r, gather the (B,128)
        # window rows across images with stride-P1S loads, max, one MXU dot.
        hacc = None
        for r in range(NR):
            pi, pj = divmod(r, wp2)
            base = (2 * pi) * PW + 2 * pj
            v00 = s2[pl.ds(base, B, stride=P1S), :]
            v01 = s2[pl.ds(base + 1, B, stride=P1S), :]
            v10 = s2[pl.ds(base + PW, B, stride=P1S), :]
            v11 = s2[pl.ds(base + PW + 1, B, stride=P1S), :]
            v = jnp.maximum(jnp.maximum(v00, v01), jnp.maximum(v10, v11))
            prod = jnp.dot(v, f1w_ref[r], preferred_element_type=jnp.float32)
            hacc = prod if hacc is None else hacc + prod
        hidden = jnp.maximum(hacc + f1b_ref[...], 0.0)           # (B, LANE)

        # fc2 + masked log_softmax epilogue (padded lanes excluded).
        logits = jnp.dot(hidden, f2w_ref[...],
                         preferred_element_type=jnp.float32) + f2b_ref[...]
        lane = lax.broadcasted_iota(jnp.int32, (B, LANE), 1)
        logits = jnp.where(lane < num_outputs, logits, -1e30)
        mx = jnp.max(logits, axis=-1, keepdims=True)
        lse = jnp.log(jnp.sum(jnp.exp(logits - mx), axis=-1, keepdims=True))
        out_ref[...] = logits - mx - lse

    grid_spec = pltpu.PrefetchScalarGridSpec(
        num_scalar_prefetch=0,
        grid=(n // B,),
        in_specs=[
            pl.BlockSpec((B * HW, NTAP), lambda g: (g, 0)),       # im2col patches
            pl.BlockSpec((NTAP, LANE), lambda g: (0, 0)),         # conv1 w
            pl.BlockSpec((1, LANE), lambda g: (0, 0)),            # conv1 b
            pl.BlockSpec((NTAP, LANE, LANE), lambda g: (0, 0, 0)),  # conv2 w
            pl.BlockSpec((1, LANE), lambda g: (0, 0)),            # conv2 b
            pl.BlockSpec((NR, LANE, LANE), lambda g: (0, 0, 0)),  # fc1 w
            pl.BlockSpec((1, LANE), lambda g: (0, 0)),            # fc1 b
            pl.BlockSpec((LANE, LANE), lambda g: (0, 0)),         # fc2 w
            pl.BlockSpec((1, LANE), lambda g: (0, 0)),            # fc2 b
        ],
        out_specs=pl.BlockSpec((B, LANE), lambda g: (g, 0)),
        scratch_shapes=[
            pltpu.VMEM((B * HW, LANE), jnp.float32),      # conv1 output
            pltpu.VMEM((B * P1S, LANE), jnp.float32),     # pool1 output (8-padded)
            pltpu.VMEM((B * P1S, LANE), jnp.float32),     # conv2 output slab
        ],
    )

    out = pl.pallas_call(
        kernel,
        out_shape=jax.ShapeDtypeStruct((n, LANE), jnp.float32),
        grid_spec=grid_spec,
        compiler_params=pltpu.CompilerParams(
            dimension_semantics=("parallel",)),
    )(patches, w1m, b1p, w2m, b2p, f1p, fb1p, f2p, fb2p)

    return out[:, :num_outputs]


# -------------------------------- params -------------------------------------

def init_params(key, inputs_shape=(2, 1, 16, 16), num_outputs=10, num_hidden=32):
    _, cin, h, w = inputs_shape
    k = jax.random.split(key, 8)
    h1, w1 = (h - 2) // 2, (w - 2) // 2
    h2, w2 = (h1 - 2) // 2, (w1 - 2) // 2
    flat = 32 * h2 * w2
    return {
        "conv1_w": 0.1 * jax.random.normal(k[0], (16, cin, 3, 3), jnp.float32),
        "conv1_b": 0.1 * jax.random.normal(k[1], (16,), jnp.float32),
        "conv2_w": 0.1 * jax.random.normal(k[2], (32, 16, 3, 3), jnp.float32),
        "conv2_b": 0.1 * jax.random.normal(k[3], (32,), jnp.float32),
        "fc1_w": 0.1 * jax.random.normal(k[4], (num_hidden, flat), jnp.float32),
        "fc1_b": 0.1 * jax.random.normal(k[5], (num_hidden,), jnp.float32),
        "fc2_w": 0.1 * jax.random.normal(k[6], (num_outputs, num_hidden), jnp.float32),
        "fc2_b": 0.1 * jax.random.normal(k[7], (num_outputs,), jnp.float32),
    }


# ------------------------------- reference -----------------------------------

def cnn_reference(params, x):
    def conv(x, w, b):
        y = lax.conv_general_dilated(
            x, w, window_strides=(1, 1), padding="VALID",
            dimension_numbers=("NCHW", "OIHW", "NCHW"))
        return jax.nn.relu(y + b[None, :, None, None])

    def pool(x):
        return lax.reduce_window(x, -jnp.inf, lax.max,
                                 window_dimensions=(1, 1, 2, 2),
                                 window_strides=(1, 1, 2, 2),
                                 padding="VALID")

    x = pool(conv(x, params["conv1_w"], params["conv1_b"]))
    x = pool(conv(x, params["conv2_w"], params["conv2_b"]))
    x = x.reshape(x.shape[0], -1)
    x = jax.nn.relu(x @ params["fc1_w"].T + params["fc1_b"])
    x = x @ params["fc2_w"].T + params["fc2_b"]
    return jax.nn.log_softmax(x, axis=1)


# ---------------------------------- main --------------------------------------

if __name__ == "__main__":
    key = jax.random.PRNGKey(0)
    kx, kp = jax.random.split(key)

    inputs_shape = (2, 1, 16, 16)   # small NCHW test shape
    num_outputs, num_hidden = 10, 32

    x = jax.random.normal(kx, inputs_shape, jnp.float32)
    params = init_params(kp, inputs_shape, num_outputs, num_hidden)

    fwd = jax.jit(cnn_forward)
    out = jax.block_until_ready(fwd(params, x))

    ref = jax.block_until_ready(cnn_reference(params, x))
    np.testing.assert_allclose(np.asarray(out), np.asarray(ref),
                               rtol=1e-4, atol=1e-4)
    assert out.shape == (inputs_shape[0], num_outputs)

    print("KERNEL_OK")
</pallas_src>

<mosaic_0001>
module attributes {stable_mosaic.version = 11 : i64} {
  func.func @kernel(%arg0: i32, %arg1: memref<512x9xf32, #tpu.memory_space<vmem>>, %arg2: memref<9x128xf32, #tpu.memory_space<vmem>>, %arg3: memref<1x128xf32, #tpu.memory_space<vmem>>, %arg4: memref<9x128x128xf32, #tpu.memory_space<vmem>>, %arg5: memref<1x128xf32, #tpu.memory_space<vmem>>, %arg6: memref<4x128x128xf32, #tpu.memory_space<vmem>>, %arg7: memref<1x128xf32, #tpu.memory_space<vmem>>, %arg8: memref<128x128xf32, #tpu.memory_space<vmem>>, %arg9: memref<1x128xf32, #tpu.memory_space<vmem>>, %arg10: memref<2x128xf32, #tpu.memory_space<vmem>>, %arg11: memref<512x128xf32, #tpu.memory_space<vmem>>, %arg12: memref<128x128xf32, #tpu.memory_space<vmem>>, %arg13: memref<128x128xf32, #tpu.memory_space<vmem>>) attributes {dimension_semantics = [#tpu.dimension_semantics<parallel>], iteration_bounds = array<i64: 1>, scalar_prefetch = 0 : i64, scratch_operands = 3 : i64, tpu.core_type = #tpu.core_type<tc>, window_params = [{transform_indices = @transform_0, window_bounds = array<i64: 512, 9>}, {pipeline_mode = #tpu.pipeline_mode<synchronous>, transform_indices = @transform_1, window_bounds = array<i64: 9, 128>}, {pipeline_mode = #tpu.pipeline_mode<synchronous>, transform_indices = @transform_2, window_bounds = array<i64: 1, 128>}, {pipeline_mode = #tpu.pipeline_mode<synchronous>, transform_indices = @transform_3, window_bounds = array<i64: 9, 128, 128>}, {pipeline_mode = #tpu.pipeline_mode<synchronous>, transform_indices = @transform_4, window_bounds = array<i64: 1, 128>}, {pipeline_mode = #tpu.pipeline_mode<synchronous>, transform_indices = @transform_5, window_bounds = array<i64: 4, 128, 128>}, {pipeline_mode = #tpu.pipeline_mode<synchronous>, transform_indices = @transform_6, window_bounds = array<i64: 1, 128>}, {pipeline_mode = #tpu.pipeline_mode<synchronous>, transform_indices = @transform_7, window_bounds = array<i64: 128, 128>}, {pipeline_mode = #tpu.pipeline_mode<synchronous>, transform_indices = @transform_8, window_bounds = array<i64: 1, 128>}, {transform_indices = @transform_9, window_bounds = array<i64: 2, 128>}]} {
    %c0 = arith.constant 0 : index
    %c0_0 = arith.constant 0 : index
    %0 = vector.load %arg3[%c0, %c0_0] : memref<1x128xf32, #tpu.memory_space<vmem>>, vector<1x128xf32>
    %c0_1 = arith.constant 0 : index
    %c0_2 = arith.constant 0 : index
    %1 = vector.load %arg1[%c0_1, %c0_2] : memref<512x9xf32, #tpu.memory_space<vmem>>, vector<128x9xf32>
    %c0_3 = arith.constant 0 : index
    %c0_4 = arith.constant 0 : index
    %2 = vector.load %arg2[%c0_3, %c0_4] : memref<9x128xf32, #tpu.memory_space<vmem>>, vector<9x128xf32>
    %cst = arith.constant dense<0.000000e+00> : vector<128x128xf32>
    %3 = tpu.matmul %1, %2, %cst {dimension_numbers = #tpu.dot_dimension_numbers<[1], [0], [0], [1], [0, 0, 1, 1], [], []>} : vector<128x9xf32>, vector<9x128xf32>, vector<128x128xf32> -> vector<128x128xf32>
    %4 = vector.broadcast %0 : vector<1x128xf32> to vector<128x128xf32>
    %5 = arith.addf %3, %4 : vector<128x128xf32>
    %cst_5 = arith.constant 0.000000e+00 : f32
    %6 = vector.broadcast %cst_5 : f32 to vector<128x128xf32>
    %7 = arith.maximumf %5, %6 : vector<128x128xf32>
    %c0_6 = arith.constant 0 : index
    %c0_7 = arith.constant 0 : index
    %8 = vector.load %arg11[%c0_6, %c0_7] : memref<512x128xf32, #tpu.memory_space<vmem>>, vector<128x128xf32>
    tpu.vector_store %arg11[%c0_6, %c0_7], %7 {strides = array<i32>} : memref<512x128xf32, #tpu.memory_space<vmem>>, vector<128x128xf32>,
    %c128 = arith.constant 128 : index
    %c0_8 = arith.constant 0 : index
    %9 = vector.load %arg1[%c128, %c0_8] : memref<512x9xf32, #tpu.memory_space<vmem>>, vector<128x9xf32>
    %c0_9 = arith.constant 0 : index
    %c0_10 = arith.constant 0 : index
    %10 = vector.load %arg2[%c0_9, %c0_10] : memref<9x128xf32, #tpu.memory_space<vmem>>, vector<9x128xf32>
    %cst_11 = arith.constant dense<0.000000e+00> : vector<128x128xf32>
    %11 = tpu.matmul %9, %10, %cst_11 {dimension_numbers = #tpu.dot_dimension_numbers<[1], [0], [0], [1], [0, 0, 1, 1], [], []>} : vector<128x9xf32>, vector<9x128xf32>, vector<128x128xf32> -> vector<128x128xf32>
    %12 = vector.broadcast %0 : vector<1x128xf32> to vector<128x128xf32>
    %13 = arith.addf %11, %12 : vector<128x128xf32>
    %cst_12 = arith.constant 0.000000e+00 : f32
    %14 = vector.broadcast %cst_12 : f32 to vector<128x128xf32>
    %15 = arith.maximumf %13, %14 : vector<128x128xf32>
    %c128_13 = arith.constant 128 : index
    %c0_14 = arith.constant 0 : index
    %16 = vector.load %arg11[%c128_13, %c0_14] : memref<512x128xf32, #tpu.memory_space<vmem>>, vector<128x128xf32>
    tpu.vector_store %arg11[%c128_13, %c0_14], %15 {strides = array<i32>} : memref<512x128xf32, #tpu.memory_space<vmem>>, vector<128x128xf32>,
    %c256 = arith.constant 256 : index
    %c0_15 = arith.constant 0 : index
    %17 = vector.load %arg1[%c256, %c0_15] : memref<512x9xf32, #tpu.memory_space<vmem>>, vector<128x9xf32>
    %c0_16 = arith.constant 0 : index
    %c0_17 = arith.constant 0 : index
    %18 = vector.load %arg2[%c0_16, %c0_17] : memref<9x128xf32, #tpu.memory_space<vmem>>, vector<9x128xf32>
    %cst_18 = arith.constant dense<0.000000e+00> : vector<128x128xf32>
    %19 = tpu.matmul %17, %18, %cst_18 {dimension_numbers = #tpu.dot_dimension_numbers<[1], [0], [0], [1], [0, 0, 1, 1], [], []>} : vector<128x9xf32>, vector<9x128xf32>, vector<128x128xf32> -> vector<128x128xf32>
    %20 = vector.broadcast %0 : vector<1x128xf32> to vector<128x128xf32>
    %21 = arith.addf %19, %20 : vector<128x128xf32>
    %cst_19 = arith.constant 0.000000e+00 : f32
    %22 = vector.broadcast %cst_19 : f32 to vector<128x128xf32>
    %23 = arith.maximumf %21, %22 : vector<128x128xf32>
    %c256_20 = arith.constant 256 : index
    %c0_21 = arith.constant 0 : index
    %24 = vector.load %arg11[%c256_20, %c0_21] : memref<512x128xf32, #tpu.memory_space<vmem>>, vector<128x128xf32>
    tpu.vector_store %arg11[%c256_20, %c0_21], %23 {strides = array<i32>} : memref<512x128xf32, #tpu.memory_space<vmem>>, vector<128x128xf32>,
    %c384 = arith.constant 384 : index
    %c0_22 = arith.constant 0 : index
    %25 = vector.load %arg1[%c384, %c0_22] : memref<512x9xf32, #tpu.memory_space<vmem>>, vector<128x9xf32>
    %c0_23 = arith.constant 0 : index
    %c0_24 = arith.constant 0 : index
    %26 = vector.load %arg2[%c0_23, %c0_24] : memref<9x128xf32, #tpu.memory_space<vmem>>, vector<9x128xf32>
    %cst_25 = arith.constant dense<0.000000e+00> : vector<128x128xf32>
    %27 = tpu.matmul %25, %26, %cst_25 {dimension_numbers = #tpu.dot_dimension_numbers<[1], [0], [0], [1], [0, 0, 1, 1], [], []>} : vector<128x9xf32>, vector<9x128xf32>, vector<128x128xf32> -> vector<128x128xf32>
    %28 = vector.broadcast %0 : vector<1x128xf32> to vector<128x128xf32>
    %29 = arith.addf %27, %28 : vector<128x128xf32>
    %cst_26 = arith.constant 0.000000e+00 : f32
    %30 = vector.broadcast %cst_26 : f32 to vector<128x128xf32>
    %31 = arith.maximumf %29, %30 : vector<128x128xf32>
    %c384_27 = arith.constant 384 : index
    %c0_28 = arith.constant 0 : index
    %32 = vector.load %arg11[%c384_27, %c0_28] : memref<512x128xf32, #tpu.memory_space<vmem>>, vector<128x128xf32>
    tpu.vector_store %arg11[%c384_27, %c0_28], %31 {strides = array<i32>} : memref<512x128xf32, #tpu.memory_space<vmem>>, vector<128x128xf32>,
    %cst_29 = arith.constant 0.000000e+00 : f32
    %33 = vector.broadcast %cst_29 : f32 to vector<128x128xf32>
    %c0_30 = arith.constant 0 : index
    %c0_31 = arith.constant 0 : index
    %34 = vector.load %arg12[%c0_30, %c0_31] : memref<128x128xf32, #tpu.memory_space<vmem>>, vector<128x128xf32>
    tpu.vector_store %arg12[%c0_30, %c0_31], %33 {strides = array<i32>} : memref<128x128xf32, #tpu.memory_space<vmem>>, vector<128x128xf32>,
    %c0_32 = arith.constant 0 : index
    %c0_33 = arith.constant 0 : index
    %35 = tpu.strided_load %arg11[%c0_32, %c0_33] {strides = array<i32: 2, 1>} : memref<512x128xf32, #tpu.memory_space<vmem>>, vector<8x128xf32>
    %c1 = arith.constant 1 : index
    %c0_34 = arith.constant 0 : index
    %36 = tpu.strided_load %arg11[%c1, %c0_34] {strides = array<i32: 2, 1>} : memref<512x128xf32, #tpu.memory_space<vmem>>, vector<8x128xf32>
    %c16 = arith.constant 16 : index
    %c0_35 = arith.constant 0 : index
    %37 = tpu.strided_load %arg11[%c16, %c0_35] {strides = array<i32: 2, 1>} : memref<512x128xf32, #tpu.memory_space<vmem>>, vector<8x128xf32>
    %c17 = arith.constant 17 : index
    %c0_36 = arith.constant 0 : index
    %38 = tpu.strided_load %arg11[%c17, %c0_36] {strides = array<i32: 2, 1>} : memref<512x128xf32, #tpu.memory_space<vmem>>, vector<8x128xf32>
    %39 = arith.maximumf %35, %36 : vector<8x128xf32>
    %40 = arith.maximumf %37, %38 : vector<8x128xf32>
    %41 = arith.maximumf %39, %40 : vector<8x128xf32>
    %c0_37 = arith.constant 0 : index
    %c0_38 = arith.constant 0 : index
    %42 = vector.load %arg12[%c0_37, %c0_38] : memref<128x128xf32, #tpu.memory_space<vmem>>, vector<8x128xf32>
    tpu.vector_store %arg12[%c0_37, %c0_38], %41 {strides = array<i32>} : memref<128x128xf32, #tpu.memory_space<vmem>>, vector<8x128xf32>,
    %c32 = arith.constant 32 : index
    %c0_39 = arith.constant 0 : index
    %43 = tpu.strided_load %arg11[%c32, %c0_39] {strides = array<i32: 2, 1>} : memref<512x128xf32, #tpu.memory_space<vmem>>, vector<8x128xf32>
    %c33 = arith.constant 33 : index
    %c0_40 = arith.constant 0 : index
    %44 = tpu.strided_load %arg11[%c33, %c0_40] {strides = array<i32: 2, 1>} : memref<512x128xf32, #tpu.memory_space<vmem>>, vector<8x128xf32>
    %c48 = arith.constant 48 : index
    %c0_41 = arith.constant 0 : index
    %45 = tpu.strided_load %arg11[%c48, %c0_41] {strides = array<i32: 2, 1>} : memref<512x128xf32, #tpu.memory_space<vmem>>, vector<8x128xf32>
    %c49 = arith.constant 49 : index
    %c0_42 = arith.constant 0 : index
    %46 = tpu.strided_load %arg11[%c49, %c0_42] {strides = array<i32: 2, 1>} : memref<512x128xf32, #tpu.memory_space<vmem>>, vector<8x128xf32>
    %47 = arith.maximumf %43, %44 : vector<8x128xf32>
    %48 = arith.maximumf %45, %46 : vector<8x128xf32>
    %49 = arith.maximumf %47, %48 : vector<8x128xf32>
    %c8 = arith.constant 8 : index
    %c0_43 = arith.constant 0 : index
    %50 = vector.load %arg12[%c8, %c0_43] : memref<128x128xf32, #tpu.memory_space<vmem>>, vector<8x128xf32>
    tpu.vector_store %arg12[%c8, %c0_43], %49 {strides = array<i32>} : memref<128x128xf32, #tpu.memory_space<vmem>>, vector<8x128xf32>,
    %c64 = arith.constant 64 : index
    %c0_44 = arith.constant 0 : index
    %51 = tpu.strided_load %arg11[%c64, %c0_44] {strides = array<i32: 2, 1>} : memref<512x128xf32, #tpu.memory_space<vmem>>, vector<8x128xf32>
    %c65 = arith.constant 65 : index
    %c0_45 = arith.constant 0 : index
    %52 = tpu.strided_load %arg11[%c65, %c0_45] {strides = array<i32: 2, 1>} : memref<512x128xf32, #tpu.memory_space<vmem>>, vector<8x128xf32>
    %c80 = arith.constant 80 : index
    %c0_46 = arith.constant 0 : index
    %53 = tpu.strided_load %arg11[%c80, %c0_46] {strides = array<i32: 2, 1>} : memref<512x128xf32, #tpu.memory_space<vmem>>, vector<8x128xf32>
    %c81 = arith.constant 81 : index
    %c0_47 = arith.constant 0 : index
    %54 = tpu.strided_load %arg11[%c81, %c0_47] {strides = array<i32: 2, 1>} : memref<512x128xf32, #tpu.memory_space<vmem>>, vector<8x128xf32>
    %55 = arith.maximumf %51, %52 : vector<8x128xf32>
    %56 = arith.maximumf %53, %54 : vector<8x128xf32>
    %57 = arith.maximumf %55, %56 : vector<8x128xf32>
    %c16_48 = arith.constant 16 : index
    %c0_49 = arith.constant 0 : index
    %58 = vector.load %arg12[%c16_48, %c0_49] : memref<128x128xf32, #tpu.memory_space<vmem>>, vector<8x128xf32>
    tpu.vector_store %arg12[%c16_48, %c0_49], %57 {strides = array<i32>} : memref<128x128xf32, #tpu.memory_space<vmem>>, vector<8x128xf32>,
    %c96 = arith.constant 96 : index
    %c0_50 = arith.constant 0 : index
    %59 = tpu.strided_load %arg11[%c96, %c0_50] {strides = array<i32: 2, 1>} : memref<512x128xf32, #tpu.memory_space<vmem>>, vector<8x128xf32>
    %c97 = arith.constant 97 : index
    %c0_51 = arith.constant 0 : index
    %60 = tpu.strided_load %arg11[%c97, %c0_51] {strides = array<i32: 2, 1>} : memref<512x128xf32, #tpu.memory_space<vmem>>, vector<8x128xf32>
    %c112 = arith.constant 112 : index
    %c0_52 = arith.constant 0 : index
    %61 = tpu.strided_load %arg11[%c112, %c0_52] {strides = array<i32: 2, 1>} : memref<512x128xf32, #tpu.memory_space<vmem>>, vector<8x128xf32>
    %c113 = arith.constant 113 : index
    %c0_53 = arith.constant 0 : index
    %62 = tpu.strided_load %arg11[%c113, %c0_53] {strides = array<i32: 2, 1>} : memref<512x128xf32, #tpu.memory_space<vmem>>, vector<8x128xf32>
    %63 = arith.maximumf %59, %60 : vector<8x128xf32>
    %64 = arith.maximumf %61, %62 : vector<8x128xf32>
    %65 = arith.maximumf %63, %64 : vector<8x128xf32>
    %c24 = arith.constant 24 : index
    %c0_54 = arith.constant 0 : index
    %66 = vector.load %arg12[%c24, %c0_54] : memref<128x128xf32, #tpu.memory_space<vmem>>, vector<8x128xf32>
    tpu.vector_store %arg12[%c24, %c0_54], %65 {strides = array<i32>} : memref<128x128xf32, #tpu.memory_space<vmem>>, vector<8x128xf32>,
    %c128_55 = arith.constant 128 : index
    %c0_56 = arith.constant 0 : index
    %67 = tpu.strided_load %arg11[%c128_55, %c0_56] {strides = array<i32: 2, 1>} : memref<512x128xf32, #tpu.memory_space<vmem>>, vector<8x128xf32>
    %c129 = arith.constant 129 : index
    %c0_57 = arith.constant 0 : index
    %68 = tpu.strided_load %arg11[%c129, %c0_57] {strides = array<i32: 2, 1>} : memref<512x128xf32, #tpu.memory_space<vmem>>, vector<8x128xf32>
    %c144 = arith.constant 144 : index
    %c0_58 = arith.constant 0 : index
    %69 = tpu.strided_load %arg11[%c144, %c0_58] {strides = array<i32: 2, 1>} : memref<512x128xf32, #tpu.memory_space<vmem>>, vector<8x128xf32>
    %c145 = arith.constant 145 : index
    %c0_59 = arith.constant 0 : index
    %70 = tpu.strided_load %arg11[%c145, %c0_59] {strides = array<i32: 2, 1>} : memref<512x128xf32, #tpu.memory_space<vmem>>, vector<8x128xf32>
    %71 = arith.maximumf %67, %68 : vector<8x128xf32>
    %72 = arith.maximumf %69, %70 : vector<8x128xf32>
    %73 = arith.maximumf %71, %72 : vector<8x128xf32>
    %c32_60 = arith.constant 32 : index
    %c0_61 = arith.constant 0 : index
    %74 = vector.load %arg12[%c32_60, %c0_61] : memref<128x128xf32, #tpu.memory_space<vmem>>, vector<8x128xf32>
    tpu.vector_store %arg12[%c32_60, %c0_61], %73 {strides = array<i32>} : memref<128x128xf32, #tpu.memory_space<vmem>>, vector<8x128xf32>,
    %c160 = arith.constant 160 : index
    %c0_62 = arith.constant 0 : index
    %75 = tpu.strided_load %arg11[%c160, %c0_62] {strides = array<i32: 2, 1>} : memref<512x128xf32, #tpu.memory_space<vmem>>, vector<8x128xf32>
    %c161 = arith.constant 161 : index
    %c0_63 = arith.constant 0 : index
    %76 = tpu.strided_load %arg11[%c161, %c0_63] {strides = array<i32: 2, 1>} : memref<512x128xf32, #tpu.memory_space<vmem>>, vector<8x128xf32>
    %c176 = arith.constant 176 : index
    %c0_64 = arith.constant 0 : index
    %77 = tpu.strided_load %arg11[%c176, %c0_64] {strides = array<i32: 2, 1>} : memref<512x128xf32, #tpu.memory_space<vmem>>, vector<8x128xf32>
    %c177 = arith.constant 177 : index
    %c0_65 = arith.constant 0 : index
    %78 = tpu.strided_load %arg11[%c177, %c0_65] {strides = array<i32: 2, 1>} : memref<512x128xf32, #tpu.memory_space<vmem>>, vector<8x128xf32>
    %79 = arith.maximumf %75, %76 : vector<8x128xf32>
    %80 = arith.maximumf %77, %78 : vector<8x128xf32>
    %81 = arith.maximumf %79, %80 : vector<8x128xf32>
    %c40 = arith.constant 40 : index
    %c0_66 = arith.constant 0 : index
    %82 = vector.load %arg12[%c40, %c0_66] : memref<128x128xf32, #tpu.memory_space<vmem>>, vector<8x128xf32>
    tpu.vector_store %arg12[%c40, %c0_66], %81 {strides = array<i32>} : memref<128x128xf32, #tpu.memory_space<vmem>>, vector<8x128xf32>,
    %c192 = arith.constant 192 : index
    %c0_67 = arith.constant 0 : index
    %83 = tpu.strided_load %arg11[%c192, %c0_67] {strides = array<i32: 2, 1>} : memref<512x128xf32, #tpu.memory_space<vmem>>, vector<8x128xf32>
    %c193 = arith.constant 193 : index
    %c0_68 = arith.constant 0 : index
    %84 = tpu.strided_load %arg11[%c193, %c0_68] {strides = array<i32: 2, 1>} : memref<512x128xf32, #tpu.memory_space<vmem>>, vector<8x128xf32>
    %c208 = arith.constant 208 : index
    %c0_69 = arith.constant 0 : index
    %85 = tpu.strided_load %arg11[%c208, %c0_69] {strides = array<i32: 2, 1>} : memref<512x128xf32, #tpu.memory_space<vmem>>, vector<8x128xf32>
    %c209 = arith.constant 209 : index
    %c0_70 = arith.constant 0 : index
    %86 = tpu.strided_load %arg11[%c209, %c0_70] {strides = array<i32: 2, 1>} : memref<512x128xf32, #tpu.memory_space<vmem>>, vector<8x128xf32>
    %87 = arith.maximumf %83, %84 : vector<8x128xf32>
    %88 = arith.maximumf %85, %86 : vector<8x128xf32>
    %89 = arith.maximumf %87, %88 : vector<8x128xf32>
    %c48_71 = arith.constant 48 : index
    %c0_72 = arith.constant 0 : index
    %90 = vector.load %arg12[%c48_71, %c0_72] : memref<128x128xf32, #tpu.memory_space<vmem>>, vector<8x128xf32>
    tpu.vector_store %arg12[%c48_71, %c0_72], %89 {strides = array<i32>} : memref<128x128xf32, #tpu.memory_space<vmem>>, vector<8x128xf32>,
    %c256_73 = arith.constant 256 : index
    %c0_74 = arith.constant 0 : index
    %91 = tpu.strided_load %arg11[%c256_73, %c0_74] {strides = array<i32: 2, 1>} : memref<512x128xf32, #tpu.memory_space<vmem>>, vector<8x128xf32>
    %c257 = arith.constant 257 : index
    %c0_75 = arith.constant 0 : index
    %92 = tpu.strided_load %arg11[%c257, %c0_75] {strides = array<i32: 2, 1>} : memref<512x128xf32, #tpu.memory_space<vmem>>, vector<8x128xf32>
    %c272 = arith.constant 272 : index
    %c0_76 = arith.constant 0 : index
    %93 = tpu.strided_load %arg11[%c272, %c0_76] {strides = array<i32: 2, 1>} : memref<512x128xf32, #tpu.memory_space<vmem>>, vector<8x128xf32>
    %c273 = arith.constant 273 : index
    %c0_77 = arith.constant 0 : index
    %94 = tpu.strided_load %arg11[%c273, %c0_77] {strides = array<i32: 2, 1>} : memref<512x128xf32, #tpu.memory_space<vmem>>, vector<8x128xf32>
    %95 = arith.maximumf %91, %92 : vector<8x128xf32>
    %96 = arith.maximumf %93, %94 : vector<8x128xf32>
    %97 = arith.maximumf %95, %96 : vector<8x128xf32>
    %c64_78 = arith.constant 64 : index
    %c0_79 = arith.constant 0 : index
    %98 = vector.load %arg12[%c64_78, %c0_79] : memref<128x128xf32, #tpu.memory_space<vmem>>, vector<8x128xf32>
    tpu.vector_store %arg12[%c64_78, %c0_79], %97 {strides = array<i32>} : memref<128x128xf32, #tpu.memory_space<vmem>>, vector<8x128xf32>,
    %c288 = arith.constant 288 : index
    %c0_80 = arith.constant 0 : index
    %99 = tpu.strided_load %arg11[%c288, %c0_80] {strides = array<i32: 2, 1>} : memref<512x128xf32, #tpu.memory_space<vmem>>, vector<8x128xf32>
    %c289 = arith.constant 289 : index
    %c0_81 = arith.constant 0 : index
    %100 = tpu.strided_load %arg11[%c289, %c0_81] {strides = array<i32: 2, 1>} : memref<512x128xf32, #tpu.memory_space<vmem>>, vector<8x128xf32>
    %c304 = arith.constant 304 : index
    %c0_82 = arith.constant 0 : index
    %101 = tpu.strided_load %arg11[%c304, %c0_82] {strides = array<i32: 2, 1>} : memref<512x128xf32, #tpu.memory_space<vmem>>, vector<8x128xf32>
    %c305 = arith.constant 305 : index
    %c0_83 = arith.constant 0 : index
    %102 = tpu.strided_load %arg11[%c305, %c0_83] {strides = array<i32: 2, 1>} : memref<512x128xf32, #tpu.memory_space<vmem>>, vector<8x128xf32>
    %103 = arith.maximumf %99, %100 : vector<8x128xf32>
    %104 = arith.maximumf %101, %102 : vector<8x128xf32>
    %105 = arith.maximumf %103, %104 : vector<8x128xf32>
    %c72 = arith.constant 72 : index
    %c0_84 = arith.constant 0 : index
    %106 = vector.load %arg12[%c72, %c0_84] : memref<128x128xf32, #tpu.memory_space<vmem>>, vector<8x128xf32>
    tpu.vector_store %arg12[%c72, %c0_84], %105 {strides = array<i32>} : memref<128x128xf32, #tpu.memory_space<vmem>>, vector<8x128xf32>,
    %c320 = arith.constant 320 : index
    %c0_85 = arith.constant 0 : index
    %107 = tpu.strided_load %arg11[%c320, %c0_85] {strides = array<i32: 2, 1>} : memref<512x128xf32, #tpu.memory_space<vmem>>, vector<8x128xf32>
    %c321 = arith.constant 321 : index
    %c0_86 = arith.constant 0 : index
    %108 = tpu.strided_load %arg11[%c321, %c0_86] {strides = array<i32: 2, 1>} : memref<512x128xf32, #tpu.memory_space<vmem>>, vector<8x128xf32>
    %c336 = arith.constant 336 : index
    %c0_87 = arith.constant 0 : index
    %109 = tpu.strided_load %arg11[%c336, %c0_87] {strides = array<i32: 2, 1>} : memref<512x128xf32, #tpu.memory_space<vmem>>, vector<8x128xf32>
    %c337 = arith.constant 337 : index
    %c0_88 = arith.constant 0 : index
    %110 = tpu.strided_load %arg11[%c337, %c0_88] {strides = array<i32: 2, 1>} : memref<512x128xf32, #tpu.memory_space<vmem>>, vector<8x128xf32>
    %111 = arith.maximumf %107, %108 : vector<8x128xf32>
    %112 = arith.maximumf %109, %110 : vector<8x128xf32>
    %113 = arith.maximumf %111, %112 : vector<8x128xf32>
    %c80_89 = arith.constant 80 : index
    %c0_90 = arith.constant 0 : index
    %114 = vector.load %arg12[%c80_89, %c0_90] : memref<128x128xf32, #tpu.memory_space<vmem>>, vector<8x128xf32>
    tpu.vector_store %arg12[%c80_89, %c0_90], %113 {strides = array<i32>} : memref<128x128xf32, #tpu.memory_space<vmem>>, vector<8x128xf32>,
    %c352 = arith.constant 352 : index
    %c0_91 = arith.constant 0 : index
    %115 = tpu.strided_load %arg11[%c352, %c0_91] {strides = array<i32: 2, 1>} : memref<512x128xf32, #tpu.memory_space<vmem>>, vector<8x128xf32>
    %c353 = arith.constant 353 : index
    %c0_92 = arith.constant 0 : index
    %116 = tpu.strided_load %arg11[%c353, %c0_92] {strides = array<i32: 2, 1>} : memref<512x128xf32, #tpu.memory_space<vmem>>, vector<8x128xf32>
    %c368 = arith.constant 368 : index
    %c0_93 = arith.constant 0 : index
    %117 = tpu.strided_load %arg11[%c368, %c0_93] {strides = array<i32: 2, 1>} : memref<512x128xf32, #tpu.memory_space<vmem>>, vector<8x128xf32>
    %c369 = arith.constant 369 : index
    %c0_94 = arith.constant 0 : index
    %118 = tpu.strided_load %arg11[%c369, %c0_94] {strides = array<i32: 2, 1>} : memref<512x128xf32, #tpu.memory_space<vmem>>, vector<8x128xf32>
    %119 = arith.maximumf %115, %116 : vector<8x128xf32>
    %120 = arith.maximumf %117, %118 : vector<8x128xf32>
    %121 = arith.maximumf %119, %120 : vector<8x128xf32>
    %c88 = arith.constant 88 : index
    %c0_95 = arith.constant 0 : index
    %122 = vector.load %arg12[%c88, %c0_95] : memref<128x128xf32, #tpu.memory_space<vmem>>, vector<8x128xf32>
    tpu.vector_store %arg12[%c88, %c0_95], %121 {strides = array<i32>} : memref<128x128xf32, #tpu.memory_space<vmem>>, vector<8x128xf32>,
    %c384_96 = arith.constant 384 : index
    %c0_97 = arith.constant 0 : index
    %123 = tpu.strided_load %arg11[%c384_96, %c0_97] {strides = array<i32: 2, 1>} : memref<512x128xf32, #tpu.memory_space<vmem>>, vector<8x128xf32>
    %c385 = arith.constant 385 : index
    %c0_98 = arith.constant 0 : index
    %124 = tpu.strided_load %arg11[%c385, %c0_98] {strides = array<i32: 2, 1>} : memref<512x128xf32, #tpu.memory_space<vmem>>, vector<8x128xf32>
    %c400 = arith.constant 400 : index
    %c0_99 = arith.constant 0 : index
    %125 = tpu.strided_load %arg11[%c400, %c0_99] {strides = array<i32: 2, 1>} : memref<512x128xf32, #tpu.memory_space<vmem>>, vector<8x128xf32>
    %c401 = arith.constant 401 : index
    %c0_100 = arith.constant 0 : index
    %126 = tpu.strided_load %arg11[%c401, %c0_100] {strides = array<i32: 2, 1>} : memref<512x128xf32, #tpu.memory_space<vmem>>, vector<8x128xf32>
    %127 = arith.maximumf %123, %124 : vector<8x128xf32>
    %128 = arith.maximumf %125, %126 : vector<8x128xf32>
    %129 = arith.maximumf %127, %128 : vector<8x128xf32>
    %c96_101 = arith.constant 96 : index
    %c0_102 = arith.constant 0 : index
    %130 = vector.load %arg12[%c96_101, %c0_102] : memref<128x128xf32, #tpu.memory_space<vmem>>, vector<8x128xf32>
    tpu.vector_store %arg12[%c96_101, %c0_102], %129 {strides = array<i32>} : memref<128x128xf32, #tpu.memory_space<vmem>>, vector<8x128xf32>,
    %c416 = arith.constant 416 : index
    %c0_103 = arith.constant 0 : index
    %131 = tpu.strided_load %arg11[%c416, %c0_103] {strides = array<i32: 2, 1>} : memref<512x128xf32, #tpu.memory_space<vmem>>, vector<8x128xf32>
    %c417 = arith.constant 417 : index
    %c0_104 = arith.constant 0 : index
    %132 = tpu.strided_load %arg11[%c417, %c0_104] {strides = array<i32: 2, 1>} : memref<512x128xf32, #tpu.memory_space<vmem>>, vector<8x128xf32>
    %c432 = arith.constant 432 : index
    %c0_105 = arith.constant 0 : index
    %133 = tpu.strided_load %arg11[%c432, %c0_105] {strides = array<i32: 2, 1>} : memref<512x128xf32, #tpu.memory_space<vmem>>, vector<8x128xf32>
    %c433 = arith.constant 433 : index
    %c0_106 = arith.constant 0 : index
    %134 = tpu.strided_load %arg11[%c433, %c0_106] {strides = array<i32: 2, 1>} : memref<512x128xf32, #tpu.memory_space<vmem>>, vector<8x128xf32>
    %135 = arith.maximumf %131, %132 : vector<8x128xf32>
    %136 = arith.maximumf %133, %134 : vector<8x128xf32>
    %137 = arith.maximumf %135, %136 : vector<8x128xf32>
    %c104 = arith.constant 104 : index
    %c0_107 = arith.constant 0 : index
    %138 = vector.load %arg12[%c104, %c0_107] : memref<128x128xf32, #tpu.memory_space<vmem>>, vector<8x128xf32>
    tpu.vector_store %arg12[%c104, %c0_107], %137 {strides = array<i32>} : memref<128x128xf32, #tpu.memory_space<vmem>>, vector<8x128xf32>,
    %c448 = arith.constant 448 : index
    %c0_108 = arith.constant 0 : index
    %139 = tpu.strided_load %arg11[%c448, %c0_108] {strides = array<i32: 2, 1>} : memref<512x128xf32, #tpu.memory_space<vmem>>, vector<8x128xf32>
    %c449 = arith.constant 449 : index
    %c0_109 = arith.constant 0 : index
    %140 = tpu.strided_load %arg11[%c449, %c0_109] {strides = array<i32: 2, 1>} : memref<512x128xf32, #tpu.memory_space<vmem>>, vector<8x128xf32>
    %c464 = arith.constant 464 : index
    %c0_110 = arith.constant 0 : index
    %141 = tpu.strided_load %arg11[%c464, %c0_110] {strides = array<i32: 2, 1>} : memref<512x128xf32, #tpu.memory_space<vmem>>, vector<8x128xf32>
    %c465 = arith.constant 465 : index
    %c0_111 = arith.constant 0 : index
    %142 = tpu.strided_load %arg11[%c465, %c0_111] {strides = array<i32: 2, 1>} : memref<512x128xf32, #tpu.memory_space<vmem>>, vector<8x128xf32>
    %143 = arith.maximumf %139, %140 : vector<8x128xf32>
    %144 = arith.maximumf %141, %142 : vector<8x128xf32>
    %145 = arith.maximumf %143, %144 : vector<8x128xf32>
    %c112_112 = arith.constant 112 : index
    %c0_113 = arith.constant 0 : index
    %146 = vector.load %arg12[%c112_112, %c0_113] : memref<128x128xf32, #tpu.memory_space<vmem>>, vector<8x128xf32>
    tpu.vector_store %arg12[%c112_112, %c0_113], %145 {strides = array<i32>} : memref<128x128xf32, #tpu.memory_space<vmem>>, vector<8x128xf32>,
    %c0_114 = arith.constant 0 : index
    %c0_115 = arith.constant 0 : index
    %147 = vector.load %arg5[%c0_114, %c0_115] : memref<1x128xf32, #tpu.memory_space<vmem>>, vector<1x128xf32>
    %c0_116 = arith.constant 0 : index
    %c0_117 = arith.constant 0 : index
    %148 = vector.load %arg12[%c0_116, %c0_117] : memref<128x128xf32, #tpu.memory_space<vmem>>, vector<104x128xf32>
    %c0_118 = arith.constant 0 : index
    %c0_119 = arith.constant 0 : index
    %c0_120 = arith.constant 0 : index
    %149 = vector.load %arg4[%c0_118, %c0_119, %c0_120] : memref<9x128x128xf32, #tpu.memory_space<vmem>>, vector<1x128x128xf32>
    %150 = vector.shape_cast %149 : vector<1x128x128xf32> to vector<128x128xf32>
    %cst_121 = arith.constant dense<0.000000e+00> : vector<104x128xf32>
    %151 = tpu.matmul %148, %150, %cst_121 {dimension_numbers = #tpu.dot_dimension_numbers<[1], [0], [0], [1], [0, 0, 1, 1], [], []>} : vector<104x128xf32>, vector<128x128xf32>, vector<104x128xf32> -> vector<104x128xf32>
    %c1_122 = arith.constant 1 : index
    %c0_123 = arith.constant 0 : index
    %152 = vector.load %arg12[%c1_122, %c0_123] : memref<128x128xf32, #tpu.memory_space<vmem>>, vector<104x128xf32>
    %c1_124 = arith.constant 1 : index
    %c0_125 = arith.constant 0 : index
    %c0_126 = arith.constant 0 : index
    %153 = vector.load %arg4[%c1_124, %c0_125, %c0_126] : memref<9x128x128xf32, #tpu.memory_space<vmem>>, vector<1x128x128xf32>
    %154 = vector.shape_cast %153 : vector<1x128x128xf32> to vector<128x128xf32>
    %cst_127 = arith.constant dense<0.000000e+00> : vector<104x128xf32>
    %155 = tpu.matmul %152, %154, %cst_127 {dimension_numbers = #tpu.dot_dimension_numbers<[1], [0], [0], [1], [0, 0, 1, 1], [], []>} : vector<104x128xf32>, vector<128x128xf32>, vector<104x128xf32> -> vector<104x128xf32>
    %156 = arith.addf %151, %155 : vector<104x128xf32>
    %c2 = arith.constant 2 : index
    %c0_128 = arith.constant 0 : index
    %157 = vector.load %arg12[%c2, %c0_128] : memref<128x128xf32, #tpu.memory_space<vmem>>, vector<104x128xf32>
    %c2_129 = arith.constant 2 : index
    %c0_130 = arith.constant 0 : index
    %c0_131 = arith.constant 0 : index
    %158 = vector.load %arg4[%c2_129, %c0_130, %c0_131] : memref<9x128x128xf32, #tpu.memory_space<vmem>>, vector<1x128x128xf32>
    %159 = vector.shape_cast %158 : vector<1x128x128xf32> to vector<128x128xf32>
    %cst_132 = arith.constant dense<0.000000e+00> : vector<104x128xf32>
    %160 = tpu.matmul %157, %159, %cst_132 {dimension_numbers = #tpu.dot_dimension_numbers<[1], [0], [0], [1], [0, 0, 1, 1], [], []>} : vector<104x128xf32>, vector<128x128xf32>, vector<104x128xf32> -> vector<104x128xf32>
    %161 = arith.addf %156, %160 : vector<104x128xf32>
    %c8_133 = arith.constant 8 : index
    %c0_134 = arith.constant 0 : index
    %162 = vector.load %arg12[%c8_133, %c0_134] : memref<128x128xf32, #tpu.memory_space<vmem>>, vector<104x128xf32>
    %c3 = arith.constant 3 : index
    %c0_135 = arith.constant 0 : index
    %c0_136 = arith.constant 0 : index
    %163 = vector.load %arg4[%c3, %c0_135, %c0_136] : memref<9x128x128xf32, #tpu.memory_space<vmem>>, vector<1x128x128xf32>
    %164 = vector.shape_cast %163 : vector<1x128x128xf32> to vector<128x128xf32>
    %cst_137 = arith.constant dense<0.000000e+00> : vector<104x128xf32>
    %165 = tpu.matmul %162, %164, %cst_137 {dimension_numbers = #tpu.dot_dimension_numbers<[1], [0], [0], [1], [0, 0, 1, 1], [], []>} : vector<104x128xf32>, vector<128x128xf32>, vector<104x128xf32> -> vector<104x128xf32>
    %166 = arith.addf %161, %165 : vector<104x128xf32>
    %c9 = arith.constant 9 : index
    %c0_138 = arith.constant 0 : index
    %167 = vector.load %arg12[%c9, %c0_138] : memref<128x128xf32, #tpu.memory_space<vmem>>, vector<104x128xf32>
    %c4 = arith.constant 4 : index
    %c0_139 = arith.constant 0 : index
    %c0_140 = arith.constant 0 : index
    %168 = vector.load %arg4[%c4, %c0_139, %c0_140] : memref<9x128x128xf32, #tpu.memory_space<vmem>>, vector<1x128x128xf32>
    %169 = vector.shape_cast %168 : vector<1x128x128xf32> to vector<128x128xf32>
    %cst_141 = arith.constant dense<0.000000e+00> : vector<104x128xf32>
    %170 = tpu.matmul %167, %169, %cst_141 {dimension_numbers = #tpu.dot_dimension_numbers<[1], [0], [0], [1], [0, 0, 1, 1], [], []>} : vector<104x128xf32>, vector<128x128xf32>, vector<104x128xf32> -> vector<104x128xf32>
    %171 = arith.addf %166, %170 : vector<104x128xf32>
    %c10 = arith.constant 10 : index
    %c0_142 = arith.constant 0 : index
    %172 = vector.load %arg12[%c10, %c0_142] : memref<128x128xf32, #tpu.memory_space<vmem>>, vector<104x128xf32>
    %c5 = arith.constant 5 : index
    %c0_143 = arith.constant 0 : index
    %c0_144 = arith.constant 0 : index
    %173 = vector.load %arg4[%c5, %c0_143, %c0_144] : memref<9x128x128xf32, #tpu.memory_space<vmem>>, vector<1x128x128xf32>
    %174 = vector.shape_cast %173 : vector<1x128x128xf32> to vector<128x128xf32>
    %cst_145 = arith.constant dense<0.000000e+00> : vector<104x128xf32>
    %175 = tpu.matmul %172, %174, %cst_145 {dimension_numbers = #tpu.dot_dimension_numbers<[1], [0], [0], [1], [0, 0, 1, 1], [], []>} : vector<104x128xf32>, vector<128x128xf32>, vector<104x128xf32> -> vector<104x128xf32>
    %176 = arith.addf %171, %175 : vector<104x128xf32>
    %c16_146 = arith.constant 16 : index
    %c0_147 = arith.constant 0 : index
    %177 = vector.load %arg12[%c16_146, %c0_147] : memref<128x128xf32, #tpu.memory_space<vmem>>, vector<104x128xf32>
    %c6 = arith.constant 6 : index
    %c0_148 = arith.constant 0 : index
    %c0_149 = arith.constant 0 : index
    %178 = vector.load %arg4[%c6, %c0_148, %c0_149] : memref<9x128x128xf32, #tpu.memory_space<vmem>>, vector<1x128x128xf32>
    %179 = vector.shape_cast %178 : vector<1x128x128xf32> to vector<128x128xf32>
    %cst_150 = arith.constant dense<0.000000e+00> : vector<104x128xf32>
    %180 = tpu.matmul %177, %179, %cst_150 {dimension_numbers = #tpu.dot_dimension_numbers<[1], [0], [0], [1], [0, 0, 1, 1], [], []>} : vector<104x128xf32>, vector<128x128xf32>, vector<104x128xf32> -> vector<104x128xf32>
    %181 = arith.addf %176, %180 : vector<104x128xf32>
    %c17_151 = arith.constant 17 : index
    %c0_152 = arith.constant 0 : index
    %182 = vector.load %arg12[%c17_151, %c0_152] : memref<128x128xf32, #tpu.memory_space<vmem>>, vector<104x128xf32>
    %c7 = arith.constant 7 : index
    %c0_153 = arith.constant 0 : index
    %c0_154 = arith.constant 0 : index
    %183 = vector.load %arg4[%c7, %c0_153, %c0_154] : memref<9x128x128xf32, #tpu.memory_space<vmem>>, vector<1x128x128xf32>
    %184 = vector.shape_cast %183 : vector<1x128x128xf32> to vector<128x128xf32>
    %cst_155 = arith.constant dense<0.000000e+00> : vector<104x128xf32>
    %185 = tpu.matmul %182, %184, %cst_155 {dimension_numbers = #tpu.dot_dimension_numbers<[1], [0], [0], [1], [0, 0, 1, 1], [], []>} : vector<104x128xf32>, vector<128x128xf32>, vector<104x128xf32> -> vector<104x128xf32>
    %186 = arith.addf %181, %185 : vector<104x128xf32>
    %c18 = arith.constant 18 : index
    %c0_156 = arith.constant 0 : index
    %187 = vector.load %arg12[%c18, %c0_156] : memref<128x128xf32, #tpu.memory_space<vmem>>, vector<104x128xf32>
    %c8_157 = arith.constant 8 : index
    %c0_158 = arith.constant 0 : index
    %c0_159 = arith.constant 0 : index
    %188 = vector.load %arg4[%c8_157, %c0_158, %c0_159] : memref<9x128x128xf32, #tpu.memory_space<vmem>>, vector<1x128x128xf32>
    %189 = vector.shape_cast %188 : vector<1x128x128xf32> to vector<128x128xf32>
    %cst_160 = arith.constant dense<0.000000e+00> : vector<104x128xf32>
    %190 = tpu.matmul %187, %189, %cst_160 {dimension_numbers = #tpu.dot_dimension_numbers<[1], [0], [0], [1], [0, 0, 1, 1], [], []>} : vector<104x128xf32>, vector<128x128xf32>, vector<104x128xf32> -> vector<104x128xf32>
    %191 = arith.addf %186, %190 : vector<104x128xf32>
    %192 = vector.broadcast %147 : vector<1x128xf32> to vector<104x128xf32>
    %193 = arith.addf %191, %192 : vector<104x128xf32>
    %cst_161 = arith.constant 0.000000e+00 : f32
    %194 = vector.broadcast %cst_161 : f32 to vector<104x128xf32>
    %195 = arith.maximumf %193, %194 : vector<104x128xf32>
    %c0_162 = arith.constant 0 : index
    %c0_163 = arith.constant 0 : index
    %196 = vector.load %arg13[%c0_162, %c0_163] : memref<128x128xf32, #tpu.memory_space<vmem>>, vector<104x128xf32>
    tpu.vector_store %arg13[%c0_162, %c0_163], %195 {strides = array<i32>} : memref<128x128xf32, #tpu.memory_space<vmem>>, vector<104x128xf32>,
    %c0_164 = arith.constant 0 : index
    %c0_165 = arith.constant 0 : index
    %197 = tpu.strided_load %arg13[%c0_164, %c0_165] {strides = array<i32: 64, 1>} : memref<128x128xf32, #tpu.memory_space<vmem>>, vector<2x128xf32>
    %c1_166 = arith.constant 1 : index
    %c0_167 = arith.constant 0 : index
    %198 = tpu.strided_load %arg13[%c1_166, %c0_167] {strides = array<i32: 64, 1>} : memref<128x128xf32, #tpu.memory_space<vmem>>, vector<2x128xf32>
    %c8_168 = arith.constant 8 : index
    %c0_169 = arith.constant 0 : index
    %199 = tpu.strided_load %arg13[%c8_168, %c0_169] {strides = array<i32: 64, 1>} : memref<128x128xf32, #tpu.memory_space<vmem>>, vector<2x128xf32>
    %c9_170 = arith.constant 9 : index
    %c0_171 = arith.constant 0 : index
    %200 = tpu.strided_load %arg13[%c9_170, %c0_171] {strides = array<i32: 64, 1>} : memref<128x128xf32, #tpu.memory_space<vmem>>, vector<2x128xf32>
    %201 = arith.maximumf %197, %198 : vector<2x128xf32>
    %202 = arith.maximumf %199, %200 : vector<2x128xf32>
    %203 = arith.maximumf %201, %202 : vector<2x128xf32>
    %c0_172 = arith.constant 0 : index
    %c0_173 = arith.constant 0 : index
    %c0_174 = arith.constant 0 : index
    %204 = vector.load %arg6[%c0_172, %c0_173, %c0_174] : memref<4x128x128xf32, #tpu.memory_space<vmem>>, vector<1x128x128xf32>
    %205 = vector.shape_cast %204 : vector<1x128x128xf32> to vector<128x128xf32>
    %cst_175 = arith.constant dense<0.000000e+00> : vector<2x128xf32>
    %206 = tpu.matmul %203, %205, %cst_175 {dimension_numbers = #tpu.dot_dimension_numbers<[1], [0], [0], [1], [0, 0, 1, 1], [], []>} : vector<2x128xf32>, vector<128x128xf32>, vector<2x128xf32> -> vector<2x128xf32>
    %c2_176 = arith.constant 2 : index
    %c0_177 = arith.constant 0 : index
    %207 = tpu.strided_load %arg13[%c2_176, %c0_177] {strides = array<i32: 64, 1>} : memref<128x128xf32, #tpu.memory_space<vmem>>, vector<2x128xf32>
    %c3_178 = arith.constant 3 : index
    %c0_179 = arith.constant 0 : index
    %208 = tpu.strided_load %arg13[%c3_178, %c0_179] {strides = array<i32: 64, 1>} : memref<128x128xf32, #tpu.memory_space<vmem>>, vector<2x128xf32>
    %c10_180 = arith.constant 10 : index
    %c0_181 = arith.constant 0 : index
    %209 = tpu.strided_load %arg13[%c10_180, %c0_181] {strides = array<i32: 64, 1>} : memref<128x128xf32, #tpu.memory_space<vmem>>, vector<2x128xf32>
    %c11 = arith.constant 11 : index
    %c0_182 = arith.constant 0 : index
    %210 = tpu.strided_load %arg13[%c11, %c0_182] {strides = array<i32: 64, 1>} : memref<128x128xf32, #tpu.memory_space<vmem>>, vector<2x128xf32>
    %211 = arith.maximumf %207, %208 : vector<2x128xf32>
    %212 = arith.maximumf %209, %210 : vector<2x128xf32>
    %213 = arith.maximumf %211, %212 : vector<2x128xf32>
    %c1_183 = arith.constant 1 : index
    %c0_184 = arith.constant 0 : index
    %c0_185 = arith.constant 0 : index
    %214 = vector.load %arg6[%c1_183, %c0_184, %c0_185] : memref<4x128x128xf32, #tpu.memory_space<vmem>>, vector<1x128x128xf32>
    %215 = vector.shape_cast %214 : vector<1x128x128xf32> to vector<128x128xf32>
    %cst_186 = arith.constant dense<0.000000e+00> : vector<2x128xf32>
    %216 = tpu.matmul %213, %215, %cst_186 {dimension_numbers = #tpu.dot_dimension_numbers<[1], [0], [0], [1], [0, 0, 1, 1], [], []>} : vector<2x128xf32>, vector<128x128xf32>, vector<2x128xf32> -> vector<2x128xf32>
    %217 = arith.addf %206, %216 : vector<2x128xf32>
    %c16_187 = arith.constant 16 : index
    %c0_188 = arith.constant 0 : index
    %218 = tpu.strided_load %arg13[%c16_187, %c0_188] {strides = array<i32: 64, 1>} : memref<128x128xf32, #tpu.memory_space<vmem>>, vector<2x128xf32>
    %c17_189 = arith.constant 17 : index
    %c0_190 = arith.constant 0 : index
    %219 = tpu.strided_load %arg13[%c17_189, %c0_190] {strides = array<i32: 64, 1>} : memref<128x128xf32, #tpu.memory_space<vmem>>, vector<2x128xf32>
    %c24_191 = arith.constant 24 : index
    %c0_192 = arith.constant 0 : index
    %220 = tpu.strided_load %arg13[%c24_191, %c0_192] {strides = array<i32: 64, 1>} : memref<128x128xf32, #tpu.memory_space<vmem>>, vector<2x128xf32>
    %c25 = arith.constant 25 : index
    %c0_193 = arith.constant 0 : index
    %221 = tpu.strided_load %arg13[%c25, %c0_193] {strides = array<i32: 64, 1>} : memref<128x128xf32, #tpu.memory_space<vmem>>, vector<2x128xf32>
    %222 = arith.maximumf %218, %219 : vector<2x128xf32>
    %223 = arith.maximumf %220, %221 : vector<2x128xf32>
    %224 = arith.maximumf %222, %223 : vector<2x128xf32>
    %c2_194 = arith.constant 2 : index
    %c0_195 = arith.constant 0 : index
    %c0_196 = arith.constant 0 : index
    %225 = vector.load %arg6[%c2_194, %c0_195, %c0_196] : memref<4x128x128xf32, #tpu.memory_space<vmem>>, vector<1x128x128xf32>
    %226 = vector.shape_cast %225 : vector<1x128x128xf32> to vector<128x128xf32>
    %cst_197 = arith.constant dense<0.000000e+00> : vector<2x128xf32>
    %227 = tpu.matmul %224, %226, %cst_197 {dimension_numbers = #tpu.dot_dimension_numbers<[1], [0], [0], [1], [0, 0, 1, 1], [], []>} : vector<2x128xf32>, vector<128x128xf32>, vector<2x128xf32> -> vector<2x128xf32>
    %228 = arith.addf %217, %227 : vector<2x128xf32>
    %c18_198 = arith.constant 18 : index
    %c0_199 = arith.constant 0 : index
    %229 = tpu.strided_load %arg13[%c18_198, %c0_199] {strides = array<i32: 64, 1>} : memref<128x128xf32, #tpu.memory_space<vmem>>, vector<2x128xf32>
    %c19 = arith.constant 19 : index
    %c0_200 = arith.constant 0 : index
    %230 = tpu.strided_load %arg13[%c19, %c0_200] {strides = array<i32: 64, 1>} : memref<128x128xf32, #tpu.memory_space<vmem>>, vector<2x128xf32>
    %c26 = arith.constant 26 : index
    %c0_201 = arith.constant 0 : index
    %231 = tpu.strided_load %arg13[%c26, %c0_201] {strides = array<i32: 64, 1>} : memref<128x128xf32, #tpu.memory_space<vmem>>, vector<2x128xf32>
    %c27 = arith.constant 27 : index
    %c0_202 = arith.constant 0 : index
    %232 = tpu.strided_load %arg13[%c27, %c0_202] {strides = array<i32: 64, 1>} : memref<128x128xf32, #tpu.memory_space<vmem>>, vector<2x128xf32>
    %233 = arith.maximumf %229, %230 : vector<2x128xf32>
    %234 = arith.maximumf %231, %232 : vector<2x128xf32>
    %235 = arith.maximumf %233, %234 : vector<2x128xf32>
    %c3_203 = arith.constant 3 : index
    %c0_204 = arith.constant 0 : index
    %c0_205 = arith.constant 0 : index
    %236 = vector.load %arg6[%c3_203, %c0_204, %c0_205] : memref<4x128x128xf32, #tpu.memory_space<vmem>>, vector<1x128x128xf32>
    %237 = vector.shape_cast %236 : vector<1x128x128xf32> to vector<128x128xf32>
    %cst_206 = arith.constant dense<0.000000e+00> : vector<2x128xf32>
    %238 = tpu.matmul %235, %237, %cst_206 {dimension_numbers = #tpu.dot_dimension_numbers<[1], [0], [0], [1], [0, 0, 1, 1], [], []>} : vector<2x128xf32>, vector<128x128xf32>, vector<2x128xf32> -> vector<2x128xf32>
    %239 = arith.addf %228, %238 : vector<2x128xf32>
    %c0_207 = arith.constant 0 : index
    %c0_208 = arith.constant 0 : index
    %240 = vector.load %arg7[%c0_207, %c0_208] : memref<1x128xf32, #tpu.memory_space<vmem>>, vector<1x128xf32>
    %241 = vector.broadcast %240 : vector<1x128xf32> to vector<2x128xf32>
    %242 = arith.addf %239, %241 : vector<2x128xf32>
    %cst_209 = arith.constant 0.000000e+00 : f32
    %243 = vector.broadcast %cst_209 : f32 to vector<2x128xf32>
    %244 = arith.maximumf %242, %243 : vector<2x128xf32>
    %c0_210 = arith.constant 0 : index
    %c0_211 = arith.constant 0 : index
    %245 = vector.load %arg8[%c0_210, %c0_211] : memref<128x128xf32, #tpu.memory_space<vmem>>, vector<128x128xf32>
    %cst_212 = arith.constant dense<0.000000e+00> : vector<2x128xf32>
    %246 = tpu.matmul %244, %245, %cst_212 {dimension_numbers = #tpu.dot_dimension_numbers<[1], [0], [0], [1], [0, 0, 1, 1], [], []>} : vector<2x128xf32>, vector<128x128xf32>, vector<2x128xf32> -> vector<2x128xf32>
    %c0_213 = arith.constant 0 : index
    %c0_214 = arith.constant 0 : index
    %247 = vector.load %arg9[%c0_213, %c0_214] : memref<1x128xf32, #tpu.memory_space<vmem>>, vector<1x128xf32>
    %248 = vector.broadcast %247 : vector<1x128xf32> to vector<2x128xf32>
    %249 = arith.addf %246, %248 : vector<2x128xf32>
    %250 = tpu.iota {dimensions = array<i32: 1>} : vector<2x128xi32>
    %c10_i32 = arith.constant 10 : i32
    %251 = vector.broadcast %c10_i32 : i32 to vector<2x128xi32>
    %252 = arith.cmpi slt, %250, %251 : vector<2x128xi32>
    %cst_215 = arith.constant -1.000000e+30 : f32
    %253 = vector.broadcast %cst_215 : f32 to vector<2x128xf32>
    %254 = arith.select %252, %249, %253 : vector<2x128xi1>, vector<2x128xf32>
    %cst_216 = arith.constant dense<0xFF800000> : vector<2xf32>
    %255 = vector.multi_reduction <maximumf>, %254, %cst_216 [1] : vector<2x128xf32> to vector<2xf32>
    %256 = vector.shape_cast %255 : vector<2xf32> to vector<2x1xf32>
    %257 = vector.broadcast %256 : vector<2x1xf32> to vector<2x128xf32>
    %258 = arith.subf %254, %257 : vector<2x128xf32>
    %259 = math.exp %258 : vector<2x128xf32>
    %cst_217 = arith.constant dense<0.000000e+00> : vector<2xf32>
    %260 = vector.multi_reduction <add>, %259, %cst_217 [1] : vector<2x128xf32> to vector<2xf32>
    %261 = vector.shape_cast %260 : vector<2xf32> to vector<2x1xf32>
    %262 = math.log %261 : vector<2x1xf32>
    %263 = vector.broadcast %256 : vector<2x1xf32> to vector<2x128xf32>
    %264 = arith.subf %254, %263 : vector<2x128xf32>
    %265 = vector.broadcast %262 : vector<2x1xf32> to vector<2x128xf32>
    %266 = arith.subf %264, %265 : vector<2x128xf32>
    %c0_218 = arith.constant 0 : index
    %c0_219 = arith.constant 0 : index
    %267 = vector.load %arg10[%c0_218, %c0_219] : memref<2x128xf32, #tpu.memory_space<vmem>>, vector<2x128xf32>
    tpu.vector_store %arg10[%c0_218, %c0_219], %266 {strides = array<i32>} : memref<2x128xf32, #tpu.memory_space<vmem>>, vector<2x128xf32>,
    return
  }
  func.func @transform_0(%arg0: i32) -> (i32, i32) {
    %c0_i32 = arith.constant 0 : i32
    %c0_i32_0 = arith.constant 0 : i32
    return %arg0, %c0_i32 : i32, i32
  }
  func.func @transform_1(%arg0: i32) -> (i32, i32) {
    %c0_i32 = arith.constant 0 : i32
    %c0_i32_0 = arith.constant 0 : i32
    %c0_i32_1 = arith.constant 0 : i32
    return %c0_i32, %c0_i32_0 : i32, i32
  }
  func.func @transform_2(%arg0: i32) -> (i32, i32) {
    %c0_i32 = arith.constant 0 : i32
    %c0_i32_0 = arith.constant 0 : i32
    %c0_i32_1 = arith.constant 0 : i32
    return %c0_i32, %c0_i32_0 : i32, i32
  }
  func.func @transform_3(%arg0: i32) -> (i32, i32, i32) {
    %c0_i32 = arith.constant 0 : i32
    %c0_i32_0 = arith.constant 0 : i32
    %c0_i32_1 = arith.constant 0 : i32
    %c0_i32_2 = arith.constant 0 : i32
    return %c0_i32, %c0_i32_0, %c0_i32_1 : i32, i32, i32
  }
  func.func @transform_4(%arg0: i32) -> (i32, i32) {
    %c0_i32 = arith.constant 0 : i32
    %c0_i32_0 = arith.constant 0 : i32
    %c0_i32_1 = arith.constant 0 : i32
    return %c0_i32, %c0_i32_0 : i32, i32
  }
  func.func @transform_5(%arg0: i32) -> (i32, i32, i32) {
    %c0_i32 = arith.constant 0 : i32
    %c0_i32_0 = arith.constant 0 : i32
    %c0_i32_1 = arith.constant 0 : i32
    %c0_i32_2 = arith.constant 0 : i32
    return %c0_i32, %c0_i32_0, %c0_i32_1 : i32, i32, i32
  }
  func.func @transform_6(%arg0: i32) -> (i32, i32) {
    %c0_i32 = arith.constant 0 : i32
    %c0_i32_0 = arith.constant 0 : i32
    %c0_i32_1 = arith.constant 0 : i32
    return %c0_i32, %c0_i32_0 : i32, i32
  }
  func.func @transform_7(%arg0: i32) -> (i32, i32) {
    %c0_i32 = arith.constant 0 : i32
    %c0_i32_0 = arith.constant 0 : i32
    %c0_i32_1 = arith.constant 0 : i32
    return %c0_i32, %c0_i32_0 : i32, i32
  }
  func.func @transform_8(%arg0: i32) -> (i32, i32) {
    %c0_i32 = arith.constant 0 : i32
    %c0_i32_0 = arith.constant 0 : i32
    %c0_i32_1 = arith.constant 0 : i32
    return %c0_i32, %c0_i32_0 : i32, i32
  }
  func.func @transform_9(%arg0: i32) -> (i32, i32) {
    %c0_i32 = arith.constant 0 : i32
    %c0_i32_0 = arith.constant 0 : i32
    return %arg0, %c0_i32 : i32, i32
  }
}

</mosaic_0001>

<llo_original>
// kernel: cnn_forward.1
$region0: #{cnn_forward.1}
  #allocation0 [shape = 'u32[]', space=smem, size = 0x4, offset = 0x4, fixed_abs, tag = 'smem constant byte address 0x4 - core index']
  #allocation1 [shape = 'u32[144,128]{1,0:T(1,128)}', space=vmem, size = 0x12000, scoped, tag = 'internal scratch']
  #allocation2 [shape = 'f32[512,128]{1,0:T(8,128)}', space=vmem, size = 0x40000, scoped, tag = 'scratch operand']
  #allocation3 [shape = 'f32[128,128]{1,0:T(8,128)}', space=vmem, size = 0x10000, scoped, tag = 'scratch operand']
  #allocation4 [shape = 'f32[128,128]{1,0:T(8,128)}', space=vmem, size = 0x10000, scoped, tag = 'scratch operand']
  %s0 = inlined_call_operand.vmem [shape: f32[512,9], index: 0, kind: input, shape index: {}]
  %s1 = inlined_call_operand.vmem [shape: f32[9,128], index: 1, kind: input, shape index: {}]
  %s2 = inlined_call_operand.vmem [shape: f32[1,128], index: 2, kind: input, shape index: {}]
  %s3 = inlined_call_operand.vmem [shape: f32[9,128,128], index: 3, kind: input, shape index: {}]
  %s4 = inlined_call_operand.vmem [shape: f32[1,128], index: 4, kind: input, shape index: {}]
  %s5 = inlined_call_operand.vmem [shape: f32[4,128,128], index: 5, kind: input, shape index: {}]
  %s6 = inlined_call_operand.vmem [shape: f32[1,128], index: 6, kind: input, shape index: {}]
  %s7 = inlined_call_operand.vmem [shape: f32[128,128], index: 7, kind: input, shape index: {}]
  %s8 = inlined_call_operand.vmem [shape: f32[1,128], index: 8, kind: input, shape index: {}]
  %s9 = inlined_call_operand.hbm [shape: f32[2,128], index: 9, kind: output, shape index: {}]
  %s10 = sld [smem:[#allocation0]]
  $region46: #{cnn_forward.1} parent=0
    _
  %s12 = ssub.s32 1, %s10
  %s13 = scalar_select 0, %s12, %s10
  $region1: #{cnn_forward.1} parent=0
    #allocation5 [shape = 'u8[1024]{0}', space=vmem, size = 0x400, scoped, tag = 'output window, operand 0, single buffered']
    #allocation6 [shape = 's32[1]{0}', space=sflag, size = 0x4, scoped, tag = 'scoped memory for cnn_forward.1']
    %14 = vsyncpa [#allocation6], 0
    // Predicated region
    $region2: #{cnn_forward.1} parent=1 // pred_check
      _
    $region3: #{cnn_forward.1} parent=1 // pred_check_branch
      %16 = sbr.rel (0) target = $region5
    $region4: #{cnn_forward.1} parent=1 // pred_region
      _
    $region5: #{cnn_forward.1} parent=1 // pred_fallthru
      _
    // Predicated region
    $region6: #{cnn_forward.1} parent=1 // pred_check
      _
    $region7: #{cnn_forward.1} parent=1 // pred_check_branch
      %18 = sbr.rel (0) target = $region9
    $region8: #{cnn_forward.1} parent=1 // pred_region
      _
    $region9: #{cnn_forward.1} parent=1 // pred_fallthru
      _
    // Predicated region
    $region10: #{cnn_forward.1} parent=1 // pred_check
      _
    $region11: #{cnn_forward.1} parent=1 // pred_check_branch
      %20 = sbr.rel (0) target = $region13
    $region12: #{cnn_forward.1} parent=1 // pred_region
      _
    $region13: #{cnn_forward.1} parent=1 // pred_fallthru
      _
    // Predicated region
    $region14: #{cnn_forward.1} parent=1 // pred_check
      _
    $region15: #{cnn_forward.1} parent=1 // pred_check_branch
      %22 = sbr.rel (0) target = $region17
    $region16: #{cnn_forward.1} parent=1 // pred_region
      _
    $region17: #{cnn_forward.1} parent=1 // pred_fallthru
      _
    // Predicated region
    $region18: #{cnn_forward.1} parent=1 // pred_check
      _
    $region19: #{cnn_forward.1} parent=1 // pred_check_branch
      %24 = sbr.rel (0) target = $region21
    $region20: #{cnn_forward.1} parent=1 // pred_region
      _
    $region21: #{cnn_forward.1} parent=1 // pred_fallthru
      _
    // Predicated region
    $region22: #{cnn_forward.1} parent=1 // pred_check
      _
    $region23: #{cnn_forward.1} parent=1 // pred_check_branch
      %26 = sbr.rel (0) target = $region25
    $region24: #{cnn_forward.1} parent=1 // pred_region
      _
    $region25: #{cnn_forward.1} parent=1 // pred_fallthru
      _
    // Predicated region
    $region26: #{cnn_forward.1} parent=1 // pred_check
      _
    $region27: #{cnn_forward.1} parent=1 // pred_check_branch
      %28 = sbr.rel (0) target = $region29
    $region28: #{cnn_forward.1} parent=1 // pred_region
      _
    $region29: #{cnn_forward.1} parent=1 // pred_fallthru
      _
    // Predicated region
    $region30: #{cnn_forward.1} parent=1 // pred_check
      _
    $region31: #{cnn_forward.1} parent=1 // pred_check_branch
      %30 = sbr.rel (0) target = $region33
    $region32: #{cnn_forward.1} parent=1 // pred_region
      _
    $region33: #{cnn_forward.1} parent=1 // pred_fallthru
      _
    // Predicated region
    $region34: #{cnn_forward.1} parent=1 // pred_check
      _
    $region35: #{cnn_forward.1} parent=1 // pred_check_branch
      %32 = sbr.rel (0) target = $region37
    $region36: #{cnn_forward.1} parent=1 // pred_region
      _
    $region37: #{cnn_forward.1} parent=1 // pred_fallthru
      _
    %v33 = vld [vmem:[%s2] sm:$0x1]
    %v34 = vld [vmem:[%s0] sm:$0xff]
    %v35 = vld [vmem:[%s0 + $0x8] sm:$0xff]
    %v36 = vld [vmem:[%s0 + $0x10] sm:$0xff]
    %v37 = vld [vmem:[%s0 + $0x18] sm:$0xff]
    %v38 = vld [vmem:[%s0 + $0x20] sm:$0xff]
    %v39 = vld [vmem:[%s0 + $0x28] sm:$0xff]
    %v40 = vld [vmem:[%s0 + $0x30] sm:$0xff]
    %v41 = vld [vmem:[%s0 + $0x38] sm:$0xff]
    %v42 = vld [vmem:[%s0 + $0x40] sm:$0xff]
    %v43 = vld [vmem:[%s0 + $0x48] sm:$0xff]
    %v44 = vld [vmem:[%s0 + $0x50] sm:$0xff]
    %v45 = vld [vmem:[%s0 + $0x58] sm:$0xff]
    %v46 = vld [vmem:[%s0 + $0x60] sm:$0xff]
    %v47 = vld [vmem:[%s0 + $0x68] sm:$0xff]
    %v48 = vld [vmem:[%s0 + $0x70] sm:$0xff]
    %v49 = vld [vmem:[%s0 + $0x78] sm:$0xff]
    %v50 = vld [vmem:[%s1] sm:$0xff]
    %v51 = vld [vmem:[%s1 + $0x8] sm:$0x1]
    %v53 = vlaneseq
    %v54 = vshrl.u32 %v53, 7
    %v55 = vsub.s32 0, %v54
    %v56 = vrot.slane %v33, %v55
    %vm58 = vcmask 72704
    %v60 = vsel %vm58, %v34, 0
    %v63 = vsel %vm58, %v35, 0
    %v66 = vsel %vm58, %v36, 0
    %v69 = vsel %vm58, %v37, 0
    %v72 = vsel %vm58, %v38, 0
    %v75 = vsel %vm58, %v39, 0
    %v78 = vsel %vm58, %v40, 0
    %v81 = vsel %vm58, %v41, 0
    %v84 = vsel %vm58, %v42, 0
    %v87 = vsel %vm58, %v43, 0
    %v90 = vsel %vm58, %v44, 0
    %v93 = vsel %vm58, %v45, 0
    %v96 = vsel %vm58, %v46, 0
    %v99 = vsel %vm58, %v47, 0
    %v102 = vsel %vm58, %v48, 0
    %v105 = vsel %vm58, %v49, 0
    %vm107 = vcmask 1040384
    %v109 = vsel %vm107, %v51, 0
    %111 = vmatprep.subr.mxu0 0.0
    %112 = vmatpush1.msra.mxu0 %v50
    %113 = vmatprep.subr.mxu0 0.0
    %114 = vmatpush1.msra.mxu0 %v109
    %115 = vmatprep.subr.mxu0 0.0
    %116 = vmatpush1.msra.mxu0 0.0
    %117 = vmatprep.subr.mxu0 0.0
    %118 = vmatpush1.msra.mxu0 0.0
    %119 = vmatprep.subr.mxu0 0.0
    %120 = vmatpush1.msra.mxu0 0.0
    %121 = vmatprep.subr.mxu0 0.0
    %122 = vmatpush1.msra.mxu0 0.0
    %123 = vmatprep.subr.mxu0 0.0
    %124 = vmatpush1.msra.mxu0 0.0
    %125 = vmatprep.subr.mxu0 0.0
    %126 = vmatpush1.msra.mxu0 0.0
    %127 = vmatprep.subr.mxu0 0.0
    %128 = vmatpush1.msra.mxu0 0.0
    %129 = vmatprep.subr.mxu0 0.0
    %130 = vmatpush1.msra.mxu0 0.0
    %131 = vmatprep.subr.mxu0 0.0
    %132 = vmatpush1.msra.mxu0 0.0
    %133 = vmatprep.subr.mxu0 0.0
    %134 = vmatpush1.msra.mxu0 0.0
    %135 = vmatprep.subr.mxu0 0.0
    %136 = vmatpush1.msra.mxu0 0.0
    %137 = vmatprep.subr.mxu0 0.0
    %138 = vmatpush1.msra.mxu0 0.0
    %139 = vmatprep.subr.mxu0 0.0
    %140 = vmatpush1.msra.mxu0 0.0
    %141 = vmatprep.subr.mxu0 0.0
    %142 = vmatpush1.msra.mxu0 0.0
    %143 = vmatprep.subr.mxu0 0.0
    %144 = vmatpush1.msra.mxu0 0.0
    %145 = vmatprep.subr.mxu0 0.0
    %146 = vmatpush1.msra.mxu0 0.0
    %147 = vmatprep.subr.mxu0 0.0
    %148 = vmatpush1.msra.mxu0 0.0
    %149 = vmatprep.subr.mxu0 0.0
    %150 = vmatpush1.msra.mxu0 0.0
    %151 = vmatprep.subr.mxu0 0.0
    %152 = vmatpush1.msra.mxu0 0.0
    %153 = vmatprep.subr.mxu0 0.0
    %154 = vmatpush1.msra.mxu0 0.0
    %155 = vmatprep.subr.mxu0 0.0
    %156 = vmatpush1.msra.mxu0 0.0
    %157 = vmatprep.subr.mxu0 0.0
    %158 = vmatpush1.msra.mxu0 0.0
    %159 = vmatprep.subr.mxu0 0.0
    %160 = vmatpush1.msra.mxu0 0.0
    %161 = vmatprep.subr.mxu0 0.0
    %162 = vmatpush1.msra.mxu0 0.0
    %163 = vmatprep.subr.mxu0 0.0
    %164 = vmatpush1.msra.mxu0 0.0
    %165 = vmatprep.subr.mxu0 0.0
    %166 = vmatpush1.msra.mxu0 0.0
    %167 = vmatprep.subr.mxu0 0.0
    %168 = vmatpush1.msra.mxu0 0.0
    %169 = vmatprep.subr.mxu0 0.0
    %170 = vmatpush1.msra.mxu0 0.0
    %171 = vmatprep.subr.mxu0 0.0
    %172 = vmatpush1.msra.mxu0 0.0
    %173 = vmatprep.subr.mxu0 0.0
    %174 = vmatpush1.msra.mxu0 0.0
    %175 = vmatprep.mubr.f32.mxu0 0.0
    %176 = vmatmul.mubr.f32.gmra.mrb[0].mxu0 %v60
    %v177 = vpop.f32.mrb[0].mxu0
    %v178 = vadd.f32 %v56, %v177
    %v179 = vpop.f32.mrb[0].mxu0
    %180 = vmatprep.mubr.f32.mxu0 0.0
    %181 = vmatmul.mubr.f32.gmra.mrb[0].mxu0 %v63
    %v182 = vpop.f32.mrb[0].mxu0
    %v183 = vadd.f32 %v56, %v182
    %v184 = vpop.f32.mrb[0].mxu0
    %185 = vmatprep.mubr.f32.mxu0 0.0
    %186 = vmatmul.mubr.f32.gmra.mrb[0].mxu0 %v66
    %v187 = vpop.f32.mrb[0].mxu0
    %v188 = vadd.f32 %v56, %v187
    %v189 = vpop.f32.mrb[0].mxu0
    %190 = vmatprep.mubr.f32.mxu0 0.0
    %191 = vmatmul.mubr.f32.gmra.mrb[0].mxu0 %v69
    %v192 = vpop.f32.mrb[0].mxu0
    %v193 = vadd.f32 %v56, %v192
    %v194 = vpop.f32.mrb[0].mxu0
    %195 = vmatprep.mubr.f32.mxu0 0.0
    %196 = vmatmul.mubr.f32.gmra.mrb[0].mxu0 %v72
    %v197 = vpop.f32.mrb[0].mxu0
    %v198 = vadd.f32 %v56, %v197
    %v199 = vpop.f32.mrb[0].mxu0
    %200 = vmatprep.mubr.f32.mxu0 0.0
    %201 = vmatmul.mubr.f32.gmra.mrb[0].mxu0 %v75
    %v202 = vpop.f32.mrb[0].mxu0
    %v203 = vadd.f32 %v56, %v202
    %v204 = vpop.f32.mrb[0].mxu0
    %205 = vmatprep.mubr.f32.mxu0 0.0
    %206 = vmatmul.mubr.f32.gmra.mrb[0].mxu0 %v78
    %v207 = vpop.f32.mrb[0].mxu0
    %v208 = vadd.f32 %v56, %v207
    %v209 = vpop.f32.mrb[0].mxu0
    %210 = vmatprep.mubr.f32.mxu0 0.0
    %211 = vmatmul.mubr.f32.gmra.mrb[0].mxu0 %v81
    %v212 = vpop.f32.mrb[0].mxu0
    %v213 = vadd.f32 %v56, %v212
    %v214 = vpop.f32.mrb[0].mxu0
    %215 = vmatprep.mubr.f32.mxu0 0.0
    %216 = vmatmul.mubr.f32.gmra.mrb[0].mxu0 %v84
    %v217 = vpop.f32.mrb[0].mxu0
    %v218 = vadd.f32 %v56, %v217
    %v219 = vpop.f32.mrb[0].mxu0
    %220 = vmatprep.mubr.f32.mxu0 0.0
    %221 = vmatmul.mubr.f32.gmra.mrb[0].mxu0 %v87
    %v222 = vpop.f32.mrb[0].mxu0
    %v223 = vadd.f32 %v56, %v222
    %v224 = vpop.f32.mrb[0].mxu0
    %225 = vmatprep.mubr.f32.mxu0 0.0
    %226 = vmatmul.mubr.f32.gmra.mrb[0].mxu0 %v90
    %v227 = vpop.f32.mrb[0].mxu0
    %v228 = vadd.f32 %v56, %v227
    %v229 = vpop.f32.mrb[0].mxu0
    %230 = vmatprep.mubr.f32.mxu0 0.0
    %231 = vmatmul.mubr.f32.gmra.mrb[0].mxu0 %v93
    %v232 = vpop.f32.mrb[0].mxu0
    %v233 = vadd.f32 %v56, %v232
    %v234 = vpop.f32.mrb[0].mxu0
    %235 = vmatprep.mubr.f32.mxu0 0.0
    %236 = vmatmul.mubr.f32.gmra.mrb[0].mxu0 %v96
    %v237 = vpop.f32.mrb[0].mxu0
    %v238 = vadd.f32 %v56, %v237
    %v239 = vpop.f32.mrb[0].mxu0
    %240 = vmatprep.mubr.f32.mxu0 0.0
    %241 = vmatmul.mubr.f32.gmra.mrb[0].mxu0 %v99
    %v242 = vpop.f32.mrb[0].mxu0
    %v243 = vadd.f32 %v56, %v242
    %v244 = vpop.f32.mrb[0].mxu0
    %245 = vmatprep.mubr.f32.mxu0 0.0
    %246 = vmatmul.mubr.f32.gmra.mrb[0].mxu0 %v102
    %v247 = vpop.f32.mrb[0].mxu0
    %v248 = vadd.f32 %v56, %v247
    %v249 = vpop.f32.mrb[0].mxu0
    %250 = vmatprep.mubr.f32.mxu0 0.0
    %251 = vmatmul.mubr.f32.gmra.mrb[0].mxu0 %v105
    %v252 = vpop.f32.mrb[0].mxu0
    %v253 = vadd.f32 %v56, %v252
    %v254 = vpop.f32.mrb[0].mxu0
    %255 = vdwg.mxu0
    %v256 = vmax.f32 %v178, 0.0
    %v257 = vmax.f32 %v183, 0.0
    %v258 = vmax.f32 %v188, 0.0
    %v259 = vmax.f32 %v193, 0.0
    %v260 = vmax.f32 %v198, 0.0
    %v261 = vmax.f32 %v203, 0.0
    %v262 = vmax.f32 %v208, 0.0
    %v263 = vmax.f32 %v213, 0.0
    %v264 = vmax.f32 %v218, 0.0
    %v265 = vmax.f32 %v223, 0.0
    %v266 = vmax.f32 %v228, 0.0
    %v267 = vmax.f32 %v233, 0.0
    %v268 = vmax.f32 %v238, 0.0
    %v269 = vmax.f32 %v243, 0.0
    %v270 = vmax.f32 %v248, 0.0
    %v271 = vmax.f32 %v253, 0.0
    %272 = vst [vmem:[#allocation2] sm:$0xff] %v256
    %273 = vst [vmem:[#allocation2 + $0x8] sm:$0xff] %v257
    %274 = vst [vmem:[#allocation2 + $0x10] sm:$0xff] %v258
    %275 = vst [vmem:[#allocation2 + $0x18] sm:$0xff] %v259
    %276 = vst [vmem:[#allocation2 + $0x20] sm:$0xff] %v260
    %277 = vst [vmem:[#allocation2 + $0x28] sm:$0xff] %v261
    %278 = vst [vmem:[#allocation2 + $0x30] sm:$0xff] %v262
    %279 = vst [vmem:[#allocation2 + $0x38] sm:$0xff] %v263
    %280 = vst [vmem:[#allocation2 + $0x40] sm:$0xff] %v264
    %281 = vst [vmem:[#allocation2 + $0x48] sm:$0xff] %v265
    %282 = vst [vmem:[#allocation2 + $0x50] sm:$0xff] %v266
    %283 = vst [vmem:[#allocation2 + $0x58] sm:$0xff] %v267
    %284 = vst [vmem:[#allocation2 + $0x60] sm:$0xff] %v268
    %285 = vst [vmem:[#allocation2 + $0x68] sm:$0xff] %v269
    %286 = vst [vmem:[#allocation2 + $0x70] sm:$0xff] %v270
    %287 = vst [vmem:[#allocation2 + $0x78] sm:$0xff] %v271
    %v288 = vld [vmem:[%s0 + $0x80] sm:$0xff]
    %v289 = vld [vmem:[%s0 + $0x88] sm:$0xff]
    %v290 = vld [vmem:[%s0 + $0x90] sm:$0xff]
    %v291 = vld [vmem:[%s0 + $0x98] sm:$0xff]
    %v292 = vld [vmem:[%s0 + $0xa0] sm:$0xff]
    %v293 = vld [vmem:[%s0 + $0xa8] sm:$0xff]
    %v294 = vld [vmem:[%s0 + $0xb0] sm:$0xff]
    %v295 = vld [vmem:[%s0 + $0xb8] sm:$0xff]
    %v296 = vld [vmem:[%s0 + $0xc0] sm:$0xff]
    %v297 = vld [vmem:[%s0 + $0xc8] sm:$0xff]
    %v298 = vld [vmem:[%s0 + $0xd0] sm:$0xff]
    %v299 = vld [vmem:[%s0 + $0xd8] sm:$0xff]
    %v300 = vld [vmem:[%s0 + $0xe0] sm:$0xff]
    %v301 = vld [vmem:[%s0 + $0xe8] sm:$0xff]
    %v302 = vld [vmem:[%s0 + $0xf0] sm:$0xff]
    %v303 = vld [vmem:[%s0 + $0xf8] sm:$0xff]
    %v304 = vld [vmem:[%s1] sm:$0xff]
    %v305 = vld [vmem:[%s1 + $0x8] sm:$0x1]
    %v307 = vsel %vm58, %v288, 0
    %v310 = vsel %vm58, %v289, 0
    %v313 = vsel %vm58, %v290, 0
    %v316 = vsel %vm58, %v291, 0
    %v319 = vsel %vm58, %v292, 0
    %v322 = vsel %vm58, %v293, 0
    %v325 = vsel %vm58, %v294, 0
    %v328 = vsel %vm58, %v295, 0
    %v331 = vsel %vm58, %v296, 0
    %v334 = vsel %vm58, %v297, 0
    %v337 = vsel %vm58, %v298, 0
    %v340 = vsel %vm58, %v299, 0
    %v343 = vsel %vm58, %v300, 0
    %v346 = vsel %vm58, %v301, 0
    %v349 = vsel %vm58, %v302, 0
    %v352 = vsel %vm58, %v303, 0
    %v355 = vsel %vm107, %v305, 0
    %357 = vmatprep.subr.mxu0 0.0
    %358 = vmatpush1.msra.mxu0 %v304
    %359 = vmatprep.subr.mxu0 0.0
    %360 = vmatpush1.msra.mxu0 %v355
    %361 = vmatprep.subr.mxu0 0.0
    %362 = vmatpush1.msra.mxu0 0.0
    %363 = vmatprep.subr.mxu0 0.0
    %364 = vmatpush1.msra.mxu0 0.0
    %365 = vmatprep.subr.mxu0 0.0
    %366 = vmatpush1.msra.mxu0 0.0
    %367 = vmatprep.subr.mxu0 0.0
    %368 = vmatpush1.msra.mxu0 0.0
    %369 = vmatprep.subr.mxu0 0.0
    %370 = vmatpush1.msra.mxu0 0.0
    %371 = vmatprep.subr.mxu0 0.0
    %372 = vmatpush1.msra.mxu0 0.0
    %373 = vmatprep.subr.mxu0 0.0
    %374 = vmatpush1.msra.mxu0 0.0
    %375 = vmatprep.subr.mxu0 0.0
    %376 = vmatpush1.msra.mxu0 0.0
    %377 = vmatprep.subr.mxu0 0.0
    %378 = vmatpush1.msra.mxu0 0.0
    %379 = vmatprep.subr.mxu0 0.0
    %380 = vmatpush1.msra.mxu0 0.0
    %381 = vmatprep.subr.mxu0 0.0
    %382 = vmatpush1.msra.mxu0 0.0
    %383 = vmatprep.subr.mxu0 0.0
    %384 = vmatpush1.msra.mxu0 0.0
    %385 = vmatprep.subr.mxu0 0.0
    %386 = vmatpush1.msra.mxu0 0.0
    %387 = vmatprep.subr.mxu0 0.0
    %388 = vmatpush1.msra.mxu0 0.0
    %389 = vmatprep.subr.mxu0 0.0
    %390 = vmatpush1.msra.mxu0 0.0
    %391 = vmatprep.subr.mxu0 0.0
    %392 = vmatpush1.msra.mxu0 0.0
    %393 = vmatprep.subr.mxu0 0.0
    %394 = vmatpush1.msra.mxu0 0.0
    %395 = vmatprep.subr.mxu0 0.0
    %396 = vmatpush1.msra.mxu0 0.0
    %397 = vmatprep.subr.mxu0 0.0
    %398 = vmatpush1.msra.mxu0 0.0
    %399 = vmatprep.subr.mxu0 0.0
    %400 = vmatpush1.msra.mxu0 0.0
    %401 = vmatprep.subr.mxu0 0.0
    %402 = vmatpush1.msra.mxu0 0.0
    %403 = vmatprep.subr.mxu0 0.0
    %404 = vmatpush1.msra.mxu0 0.0
    %405 = vmatprep.subr.mxu0 0.0
    %406 = vmatpush1.msra.mxu0 0.0
    %407 = vmatprep.subr.mxu0 0.0
    %408 = vmatpush1.msra.mxu0 0.0
    %409 = vmatprep.subr.mxu0 0.0
    %410 = vmatpush1.msra.mxu0 0.0
    %411 = vmatprep.subr.mxu0 0.0
    %412 = vmatpush1.msra.mxu0 0.0
    %413 = vmatprep.subr.mxu0 0.0
    %414 = vmatpush1.msra.mxu0 0.0
    %415 = vmatprep.subr.mxu0 0.0
    %416 = vmatpush1.msra.mxu0 0.0
    %417 = vmatprep.subr.mxu0 0.0
    %418 = vmatpush1.msra.mxu0 0.0
    %419 = vmatprep.subr.mxu0 0.0
    %420 = vmatpush1.msra.mxu0 0.0
    %421 = vmatprep.mubr.f32.mxu0 0.0
    %422 = vmatmul.mubr.f32.gmra.mrb[0].mxu0 %v307
    %v423 = vpop.f32.mrb[0].mxu0
    %v424 = vadd.f32 %v56, %v423
    %v425 = vpop.f32.mrb[0].mxu0
    %426 = vmatprep.mubr.f32.mxu0 0.0
    %427 = vmatmul.mubr.f32.gmra.mrb[0].mxu0 %v310
    %v428 = vpop.f32.mrb[0].mxu0
    %v429 = vadd.f32 %v56, %v428
    %v430 = vpop.f32.mrb[0].mxu0
    %431 = vmatprep.mubr.f32.mxu0 0.0
    %432 = vmatmul.mubr.f32.gmra.mrb[0].mxu0 %v313
    %v433 = vpop.f32.mrb[0].mxu0
    %v434 = vadd.f32 %v56, %v433
    %v435 = vpop.f32.mrb[0].mxu0
    %436 = vmatprep.mubr.f32.mxu0 0.0
    %437 = vmatmul.mubr.f32.gmra.mrb[0].mxu0 %v316
    %v438 = vpop.f32.mrb[0].mxu0
    %v439 = vadd.f32 %v56, %v438
    %v440 = vpop.f32.mrb[0].mxu0
    %441 = vmatprep.mubr.f32.mxu0 0.0
    %442 = vmatmul.mubr.f32.gmra.mrb[0].mxu0 %v319
    %v443 = vpop.f32.mrb[0].mxu0
    %v444 = vadd.f32 %v56, %v443
    %v445 = vpop.f32.mrb[0].mxu0
    %446 = vmatprep.mubr.f32.mxu0 0.0
    %447 = vmatmul.mubr.f32.gmra.mrb[0].mxu0 %v322
    %v448 = vpop.f32.mrb[0].mxu0
    %v449 = vadd.f32 %v56, %v448
    %v450 = vpop.f32.mrb[0].mxu0
    %451 = vmatprep.mubr.f32.mxu0 0.0
    %452 = vmatmul.mubr.f32.gmra.mrb[0].mxu0 %v325
    %v453 = vpop.f32.mrb[0].mxu0
    %v454 = vadd.f32 %v56, %v453
    %v455 = vpop.f32.mrb[0].mxu0
    %456 = vmatprep.mubr.f32.mxu0 0.0
    %457 = vmatmul.mubr.f32.gmra.mrb[0].mxu0 %v328
    %v458 = vpop.f32.mrb[0].mxu0
    %v459 = vadd.f32 %v56, %v458
    %v460 = vpop.f32.mrb[0].mxu0
    %461 = vmatprep.mubr.f32.mxu0 0.0
    %462 = vmatmul.mubr.f32.gmra.mrb[0].mxu0 %v331
    %v463 = vpop.f32.mrb[0].mxu0
    %v464 = vadd.f32 %v56, %v463
    %v465 = vpop.f32.mrb[0].mxu0
    %466 = vmatprep.mubr.f32.mxu0 0.0
    %467 = vmatmul.mubr.f32.gmra.mrb[0].mxu0 %v334
    %v468 = vpop.f32.mrb[0].mxu0
    %v469 = vadd.f32 %v56, %v468
    %v470 = vpop.f32.mrb[0].mxu0
    %471 = vmatprep.mubr.f32.mxu0 0.0
    %472 = vmatmul.mubr.f32.gmra.mrb[0].mxu0 %v337
    %v473 = vpop.f32.mrb[0].mxu0
    %v474 = vadd.f32 %v56, %v473
    %v475 = vpop.f32.mrb[0].mxu0
    %476 = vmatprep.mubr.f32.mxu0 0.0
    %477 = vmatmul.mubr.f32.gmra.mrb[0].mxu0 %v340
    %v478 = vpop.f32.mrb[0].mxu0
    %v479 = vadd.f32 %v56, %v478
    %v480 = vpop.f32.mrb[0].mxu0
    %481 = vmatprep.mubr.f32.mxu0 0.0
    %482 = vmatmul.mubr.f32.gmra.mrb[0].mxu0 %v343
    %v483 = vpop.f32.mrb[0].mxu0
    %v484 = vadd.f32 %v56, %v483
    %v485 = vpop.f32.mrb[0].mxu0
    %486 = vmatprep.mubr.f32.mxu0 0.0
    %487 = vmatmul.mubr.f32.gmra.mrb[0].mxu0 %v346
    %v488 = vpop.f32.mrb[0].mxu0
    %v489 = vadd.f32 %v56, %v488
    %v490 = vpop.f32.mrb[0].mxu0
    %491 = vmatprep.mubr.f32.mxu0 0.0
    %492 = vmatmul.mubr.f32.gmra.mrb[0].mxu0 %v349
    %v493 = vpop.f32.mrb[0].mxu0
    %v494 = vadd.f32 %v56, %v493
    %v495 = vpop.f32.mrb[0].mxu0
    %496 = vmatprep.mubr.f32.mxu0 0.0
    %497 = vmatmul.mubr.f32.gmra.mrb[0].mxu0 %v352
    %v498 = vpop.f32.mrb[0].mxu0
    %v499 = vadd.f32 %v56, %v498
    %v500 = vpop.f32.mrb[0].mxu0
    %501 = vdwg.mxu0
    %v502 = vmax.f32 %v424, 0.0
    %v503 = vmax.f32 %v429, 0.0
    %v504 = vmax.f32 %v434, 0.0
    %v505 = vmax.f32 %v439, 0.0
    %v506 = vmax.f32 %v444, 0.0
    %v507 = vmax.f32 %v449, 0.0
    %v508 = vmax.f32 %v454, 0.0
    %v509 = vmax.f32 %v459, 0.0
    %v510 = vmax.f32 %v464, 0.0
    %v511 = vmax.f32 %v469, 0.0
    %v512 = vmax.f32 %v474, 0.0
    %v513 = vmax.f32 %v479, 0.0
    %v514 = vmax.f32 %v484, 0.0
    %v515 = vmax.f32 %v489, 0.0
    %v516 = vmax.f32 %v494, 0.0
    %v517 = vmax.f32 %v499, 0.0
    %518 = vst [vmem:[#allocation2 + $0x80] sm:$0xff] %v502
    %519 = vst [vmem:[#allocation2 + $0x88] sm:$0xff] %v503
    %520 = vst [vmem:[#allocation2 + $0x90] sm:$0xff] %v504
    %521 = vst [vmem:[#allocation2 + $0x98] sm:$0xff] %v505
    %522 = vst [vmem:[#allocation2 + $0xa0] sm:$0xff] %v506
    %523 = vst [vmem:[#allocation2 + $0xa8] sm:$0xff] %v507
    %524 = vst [vmem:[#allocation2 + $0xb0] sm:$0xff] %v508
    %525 = vst [vmem:[#allocation2 + $0xb8] sm:$0xff] %v509
    %526 = vst [vmem:[#allocation2 + $0xc0] sm:$0xff] %v510
    %527 = vst [vmem:[#allocation2 + $0xc8] sm:$0xff] %v511
    %528 = vst [vmem:[#allocation2 + $0xd0] sm:$0xff] %v512
    %529 = vst [vmem:[#allocation2 + $0xd8] sm:$0xff] %v513
    %530 = vst [vmem:[#allocation2 + $0xe0] sm:$0xff] %v514
    %531 = vst [vmem:[#allocation2 + $0xe8] sm:$0xff] %v515
    %532 = vst [vmem:[#allocation2 + $0xf0] sm:$0xff] %v516
    %533 = vst [vmem:[#allocation2 + $0xf8] sm:$0xff] %v517
    %v534 = vld [vmem:[%s0 + $0x100] sm:$0xff]
    %v535 = vld [vmem:[%s0 + $0x108] sm:$0xff]
    %v536 = vld [vmem:[%s0 + $0x110] sm:$0xff]
    %v537 = vld [vmem:[%s0 + $0x118] sm:$0xff]
    %v538 = vld [vmem:[%s0 + $0x120] sm:$0xff]
    %v539 = vld [vmem:[%s0 + $0x128] sm:$0xff]
    %v540 = vld [vmem:[%s0 + $0x130] sm:$0xff]
    %v541 = vld [vmem:[%s0 + $0x138] sm:$0xff]
    %v542 = vld [vmem:[%s0 + $0x140] sm:$0xff]
    %v543 = vld [vmem:[%s0 + $0x148] sm:$0xff]
    %v544 = vld [vmem:[%s0 + $0x150] sm:$0xff]
    %v545 = vld [vmem:[%s0 + $0x158] sm:$0xff]
    %v546 = vld [vmem:[%s0 + $0x160] sm:$0xff]
    %v547 = vld [vmem:[%s0 + $0x168] sm:$0xff]
    %v548 = vld [vmem:[%s0 + $0x170] sm:$0xff]
    %v549 = vld [vmem:[%s0 + $0x178] sm:$0xff]
    %v550 = vld [vmem:[%s1] sm:$0xff]
    %v551 = vld [vmem:[%s1 + $0x8] sm:$0x1]
    %v553 = vsel %vm58, %v534, 0
    %v556 = vsel %vm58, %v535, 0
    %v559 = vsel %vm58, %v536, 0
    %v562 = vsel %vm58, %v537, 0
    %v565 = vsel %vm58, %v538, 0
    %v568 = vsel %vm58, %v539, 0
    %v571 = vsel %vm58, %v540, 0
    %v574 = vsel %vm58, %v541, 0
    %v577 = vsel %vm58, %v542, 0
    %v580 = vsel %vm58, %v543, 0
    %v583 = vsel %vm58, %v544, 0
    %v586 = vsel %vm58, %v545, 0
    %v589 = vsel %vm58, %v546, 0
    %v592 = vsel %vm58, %v547, 0
    %v595 = vsel %vm58, %v548, 0
    %v598 = vsel %vm58, %v549, 0
    %v601 = vsel %vm107, %v551, 0
    %603 = vmatprep.subr.mxu0 0.0
    %604 = vmatpush1.msra.mxu0 %v550
    %605 = vmatprep.subr.mxu0 0.0
    %606 = vmatpush1.msra.mxu0 %v601
    %607 = vmatprep.subr.mxu0 0.0
    %608 = vmatpush1.msra.mxu0 0.0
    %609 = vmatprep.subr.mxu0 0.0
    %610 = vmatpush1.msra.mxu0 0.0
    %611 = vmatprep.subr.mxu0 0.0
    %612 = vmatpush1.msra.mxu0 0.0
    %613 = vmatprep.subr.mxu0 0.0
    %614 = vmatpush1.msra.mxu0 0.0
    %615 = vmatprep.subr.mxu0 0.0
    %616 = vmatpush1.msra.mxu0 0.0
    %617 = vmatprep.subr.mxu0 0.0
    %618 = vmatpush1.msra.mxu0 0.0
    %619 = vmatprep.subr.mxu0 0.0
    %620 = vmatpush1.msra.mxu0 0.0
    %621 = vmatprep.subr.mxu0 0.0
    %622 = vmatpush1.msra.mxu0 0.0
    %623 = vmatprep.subr.mxu0 0.0
    %624 = vmatpush1.msra.mxu0 0.0
    %625 = vmatprep.subr.mxu0 0.0
    %626 = vmatpush1.msra.mxu0 0.0
    %627 = vmatprep.subr.mxu0 0.0
    %628 = vmatpush1.msra.mxu0 0.0
    %629 = vmatprep.subr.mxu0 0.0
    %630 = vmatpush1.msra.mxu0 0.0
    %631 = vmatprep.subr.mxu0 0.0
    %632 = vmatpush1.msra.mxu0 0.0
    %633 = vmatprep.subr.mxu0 0.0
    %634 = vmatpush1.msra.mxu0 0.0
    %635 = vmatprep.subr.mxu0 0.0
    %636 = vmatpush1.msra.mxu0 0.0
    %637 = vmatprep.subr.mxu0 0.0
    %638 = vmatpush1.msra.mxu0 0.0
    %639 = vmatprep.subr.mxu0 0.0
    %640 = vmatpush1.msra.mxu0 0.0
    %641 = vmatprep.subr.mxu0 0.0
    %642 = vmatpush1.msra.mxu0 0.0
    %643 = vmatprep.subr.mxu0 0.0
    %644 = vmatpush1.msra.mxu0 0.0
    %645 = vmatprep.subr.mxu0 0.0
    %646 = vmatpush1.msra.mxu0 0.0
    %647 = vmatprep.subr.mxu0 0.0
    %648 = vmatpush1.msra.mxu0 0.0
    %649 = vmatprep.subr.mxu0 0.0
    %650 = vmatpush1.msra.mxu0 0.0
    %651 = vmatprep.subr.mxu0 0.0
    %652 = vmatpush1.msra.mxu0 0.0
    %653 = vmatprep.subr.mxu0 0.0
    %654 = vmatpush1.msra.mxu0 0.0
    %655 = vmatprep.subr.mxu0 0.0
    %656 = vmatpush1.msra.mxu0 0.0
    %657 = vmatprep.subr.mxu0 0.0
    %658 = vmatpush1.msra.mxu0 0.0
    %659 = vmatprep.subr.mxu0 0.0
    %660 = vmatpush1.msra.mxu0 0.0
    %661 = vmatprep.subr.mxu0 0.0
    %662 = vmatpush1.msra.mxu0 0.0
    %663 = vmatprep.subr.mxu0 0.0
    %664 = vmatpush1.msra.mxu0 0.0
    %665 = vmatprep.subr.mxu0 0.0
    %666 = vmatpush1.msra.mxu0 0.0
    %667 = vmatprep.mubr.f32.mxu0 0.0
    %668 = vmatmul.mubr.f32.gmra.mrb[0].mxu0 %v553
    %v669 = vpop.f32.mrb[0].mxu0
    %v670 = vadd.f32 %v56, %v669
    %v671 = vpop.f32.mrb[0].mxu0
    %672 = vmatprep.mubr.f32.mxu0 0.0
    %673 = vmatmul.mubr.f32.gmra.mrb[0].mxu0 %v556
    %v674 = vpop.f32.mrb[0].mxu0
    %v675 = vadd.f32 %v56, %v674
    %v676 = vpop.f32.mrb[0].mxu0
    %677 = vmatprep.mubr.f32.mxu0 0.0
    %678 = vmatmul.mubr.f32.gmra.mrb[0].mxu0 %v559
    %v679 = vpop.f32.mrb[0].mxu0
    %v680 = vadd.f32 %v56, %v679
    %v681 = vpop.f32.mrb[0].mxu0
    %682 = vmatprep.mubr.f32.mxu0 0.0
    %683 = vmatmul.mubr.f32.gmra.mrb[0].mxu0 %v562
    %v684 = vpop.f32.mrb[0].mxu0
    %v685 = vadd.f32 %v56, %v684
    %v686 = vpop.f32.mrb[0].mxu0
    %687 = vmatprep.mubr.f32.mxu0 0.0
    %688 = vmatmul.mubr.f32.gmra.mrb[0].mxu0 %v565
    %v689 = vpop.f32.mrb[0].mxu0
    %v690 = vadd.f32 %v56, %v689
    %v691 = vpop.f32.mrb[0].mxu0
    %692 = vmatprep.mubr.f32.mxu0 0.0
    %693 = vmatmul.mubr.f32.gmra.mrb[0].mxu0 %v568
    %v694 = vpop.f32.mrb[0].mxu0
    %v695 = vadd.f32 %v56, %v694
    %v696 = vpop.f32.mrb[0].mxu0
    %697 = vmatprep.mubr.f32.mxu0 0.0
    %698 = vmatmul.mubr.f32.gmra.mrb[0].mxu0 %v571
    %v699 = vpop.f32.mrb[0].mxu0
    %v700 = vadd.f32 %v56, %v699
    %v701 = vpop.f32.mrb[0].mxu0
    %702 = vmatprep.mubr.f32.mxu0 0.0
    %703 = vmatmul.mubr.f32.gmra.mrb[0].mxu0 %v574
    %v704 = vpop.f32.mrb[0].mxu0
    %v705 = vadd.f32 %v56, %v704
    %v706 = vpop.f32.mrb[0].mxu0
    %707 = vmatprep.mubr.f32.mxu0 0.0
    %708 = vmatmul.mubr.f32.gmra.mrb[0].mxu0 %v577
    %v709 = vpop.f32.mrb[0].mxu0
    %v710 = vadd.f32 %v56, %v709
    %v711 = vpop.f32.mrb[0].mxu0
    %712 = vmatprep.mubr.f32.mxu0 0.0
    %713 = vmatmul.mubr.f32.gmra.mrb[0].mxu0 %v580
    %v714 = vpop.f32.mrb[0].mxu0
    %v715 = vadd.f32 %v56, %v714
    %v716 = vpop.f32.mrb[0].mxu0
    %717 = vmatprep.mubr.f32.mxu0 0.0
    %718 = vmatmul.mubr.f32.gmra.mrb[0].mxu0 %v583
    %v719 = vpop.f32.mrb[0].mxu0
    %v720 = vadd.f32 %v56, %v719
    %v721 = vpop.f32.mrb[0].mxu0
    %722 = vmatprep.mubr.f32.mxu0 0.0
    %723 = vmatmul.mubr.f32.gmra.mrb[0].mxu0 %v586
    %v724 = vpop.f32.mrb[0].mxu0
    %v725 = vadd.f32 %v56, %v724
    %v726 = vpop.f32.mrb[0].mxu0
    %727 = vmatprep.mubr.f32.mxu0 0.0
    %728 = vmatmul.mubr.f32.gmra.mrb[0].mxu0 %v589
    %v729 = vpop.f32.mrb[0].mxu0
    %v730 = vadd.f32 %v56, %v729
    %v731 = vpop.f32.mrb[0].mxu0
    %732 = vmatprep.mubr.f32.mxu0 0.0
    %733 = vmatmul.mubr.f32.gmra.mrb[0].mxu0 %v592
    %v734 = vpop.f32.mrb[0].mxu0
    %v735 = vadd.f32 %v56, %v734
    %v736 = vpop.f32.mrb[0].mxu0
    %737 = vmatprep.mubr.f32.mxu0 0.0
    %738 = vmatmul.mubr.f32.gmra.mrb[0].mxu0 %v595
    %v739 = vpop.f32.mrb[0].mxu0
    %v740 = vadd.f32 %v56, %v739
    %v741 = vpop.f32.mrb[0].mxu0
    %742 = vmatprep.mubr.f32.mxu0 0.0
    %743 = vmatmul.mubr.f32.gmra.mrb[0].mxu0 %v598
    %v744 = vpop.f32.mrb[0].mxu0
    %v745 = vadd.f32 %v56, %v744
    %v746 = vpop.f32.mrb[0].mxu0
    %747 = vdwg.mxu0
    %v748 = vmax.f32 %v670, 0.0
    %v749 = vmax.f32 %v675, 0.0
    %v750 = vmax.f32 %v680, 0.0
    %v751 = vmax.f32 %v685, 0.0
    %v752 = vmax.f32 %v690, 0.0
    %v753 = vmax.f32 %v695, 0.0
    %v754 = vmax.f32 %v700, 0.0
    %v755 = vmax.f32 %v705, 0.0
    %v756 = vmax.f32 %v710, 0.0
    %v757 = vmax.f32 %v715, 0.0
    %v758 = vmax.f32 %v720, 0.0
    %v759 = vmax.f32 %v725, 0.0
    %v760 = vmax.f32 %v730, 0.0
    %v761 = vmax.f32 %v735, 0.0
    %v762 = vmax.f32 %v740, 0.0
    %v763 = vmax.f32 %v745, 0.0
    %764 = vst [vmem:[#allocation2 + $0x100] sm:$0xff] %v748
    %765 = vst [vmem:[#allocation2 + $0x108] sm:$0xff] %v749
    %766 = vst [vmem:[#allocation2 + $0x110] sm:$0xff] %v750
    %767 = vst [vmem:[#allocation2 + $0x118] sm:$0xff] %v751
    %768 = vst [vmem:[#allocation2 + $0x120] sm:$0xff] %v752
    %769 = vst [vmem:[#allocation2 + $0x128] sm:$0xff] %v753
    %770 = vst [vmem:[#allocation2 + $0x130] sm:$0xff] %v754
    %771 = vst [vmem:[#allocation2 + $0x138] sm:$0xff] %v755
    %772 = vst [vmem:[#allocation2 + $0x140] sm:$0xff] %v756
    %773 = vst [vmem:[#allocation2 + $0x148] sm:$0xff] %v757
    %774 = vst [vmem:[#allocation2 + $0x150] sm:$0xff] %v758
    %775 = vst [vmem:[#allocation2 + $0x158] sm:$0xff] %v759
    %776 = vst [vmem:[#allocation2 + $0x160] sm:$0xff] %v760
    %777 = vst [vmem:[#allocation2 + $0x168] sm:$0xff] %v761
    %778 = vst [vmem:[#allocation2 + $0x170] sm:$0xff] %v762
    %779 = vst [vmem:[#allocation2 + $0x178] sm:$0xff] %v763
    %v780 = vld [vmem:[%s0 + $0x180] sm:$0xff]
    %v781 = vld [vmem:[%s0 + $0x188] sm:$0xff]
    %v782 = vld [vmem:[%s0 + $0x190] sm:$0xff]
    %v783 = vld [vmem:[%s0 + $0x198] sm:$0xff]
    %v784 = vld [vmem:[%s0 + $0x1a0] sm:$0xff]
    %v785 = vld [vmem:[%s0 + $0x1a8] sm:$0xff]
    %v786 = vld [vmem:[%s0 + $0x1b0] sm:$0xff]
    %v787 = vld [vmem:[%s0 + $0x1b8] sm:$0xff]
    %v788 = vld [vmem:[%s0 + $0x1c0] sm:$0xff]
    %v789 = vld [vmem:[%s0 + $0x1c8] sm:$0xff]
    %v790 = vld [vmem:[%s0 + $0x1d0] sm:$0xff]
    %v791 = vld [vmem:[%s0 + $0x1d8] sm:$0xff]
    %v792 = vld [vmem:[%s0 + $0x1e0] sm:$0xff]
    %v793 = vld [vmem:[%s0 + $0x1e8] sm:$0xff]
    %v794 = vld [vmem:[%s0 + $0x1f0] sm:$0xff]
    %v795 = vld [vmem:[%s0 + $0x1f8] sm:$0xff]
    %v796 = vld [vmem:[%s1] sm:$0xff]
    %v797 = vld [vmem:[%s1 + $0x8] sm:$0x1]
    %v799 = vsel %vm58, %v780, 0
    %v802 = vsel %vm58, %v781, 0
    %v805 = vsel %vm58, %v782, 0
    %v808 = vsel %vm58, %v783, 0
    %v811 = vsel %vm58, %v784, 0
    %v814 = vsel %vm58, %v785, 0
    %v817 = vsel %vm58, %v786, 0
    %v820 = vsel %vm58, %v787, 0
    %v823 = vsel %vm58, %v788, 0
    %v826 = vsel %vm58, %v789, 0
    %v829 = vsel %vm58, %v790, 0
    %v832 = vsel %vm58, %v791, 0
    %v835 = vsel %vm58, %v792, 0
    %v838 = vsel %vm58, %v793, 0
    %v841 = vsel %vm58, %v794, 0
    %v844 = vsel %vm58, %v795, 0
    %v847 = vsel %vm107, %v797, 0
    %849 = vmatprep.subr.mxu0 0.0
    %850 = vmatpush1.msra.mxu0 %v796
    %851 = vmatprep.subr.mxu0 0.0
    %852 = vmatpush1.msra.mxu0 %v847
    %853 = vmatprep.subr.mxu0 0.0
    %854 = vmatpush1.msra.mxu0 0.0
    %855 = vmatprep.subr.mxu0 0.0
    %856 = vmatpush1.msra.mxu0 0.0
    %857 = vmatprep.subr.mxu0 0.0
    %858 = vmatpush1.msra.mxu0 0.0
    %859 = vmatprep.subr.mxu0 0.0
    %860 = vmatpush1.msra.mxu0 0.0
    %861 = vmatprep.subr.mxu0 0.0
    %862 = vmatpush1.msra.mxu0 0.0
    %863 = vmatprep.subr.mxu0 0.0
    %864 = vmatpush1.msra.mxu0 0.0
    %865 = vmatprep.subr.mxu0 0.0
    %866 = vmatpush1.msra.mxu0 0.0
    %867 = vmatprep.subr.mxu0 0.0
    %868 = vmatpush1.msra.mxu0 0.0
    %869 = vmatprep.subr.mxu0 0.0
    %870 = vmatpush1.msra.mxu0 0.0
    %871 = vmatprep.subr.mxu0 0.0
    %872 = vmatpush1.msra.mxu0 0.0
    %873 = vmatprep.subr.mxu0 0.0
    %874 = vmatpush1.msra.mxu0 0.0
    %875 = vmatprep.subr.mxu0 0.0
    %876 = vmatpush1.msra.mxu0 0.0
    %877 = vmatprep.subr.mxu0 0.0
    %878 = vmatpush1.msra.mxu0 0.0
    %879 = vmatprep.subr.mxu0 0.0
    %880 = vmatpush1.msra.mxu0 0.0
    %881 = vmatprep.subr.mxu0 0.0
    %882 = vmatpush1.msra.mxu0 0.0
    %883 = vmatprep.subr.mxu0 0.0
    %884 = vmatpush1.msra.mxu0 0.0
    %885 = vmatprep.subr.mxu0 0.0
    %886 = vmatpush1.msra.mxu0 0.0
    %887 = vmatprep.subr.mxu0 0.0
    %888 = vmatpush1.msra.mxu0 0.0
    %889 = vmatprep.subr.mxu0 0.0
    %890 = vmatpush1.msra.mxu0 0.0
    %891 = vmatprep.subr.mxu0 0.0
    %892 = vmatpush1.msra.mxu0 0.0
    %893 = vmatprep.subr.mxu0 0.0
    %894 = vmatpush1.msra.mxu0 0.0
    %895 = vmatprep.subr.mxu0 0.0
    %896 = vmatpush1.msra.mxu0 0.0
    %897 = vmatprep.subr.mxu0 0.0
    %898 = vmatpush1.msra.mxu0 0.0
    %899 = vmatprep.subr.mxu0 0.0
    %900 = vmatpush1.msra.mxu0 0.0
    %901 = vmatprep.subr.mxu0 0.0
    %902 = vmatpush1.msra.mxu0 0.0
    %903 = vmatprep.subr.mxu0 0.0
    %904 = vmatpush1.msra.mxu0 0.0
    %905 = vmatprep.subr.mxu0 0.0
    %906 = vmatpush1.msra.mxu0 0.0
    %907 = vmatprep.subr.mxu0 0.0
    %908 = vmatpush1.msra.mxu0 0.0
    %909 = vmatprep.subr.mxu0 0.0
    %910 = vmatpush1.msra.mxu0 0.0
    %911 = vmatprep.subr.mxu0 0.0
    %912 = vmatpush1.msra.mxu0 0.0
    %913 = vmatprep.mubr.f32.mxu0 0.0
    %914 = vmatmul.mubr.f32.gmra.mrb[0].mxu0 %v799
    %v915 = vpop.f32.mrb[0].mxu0
    %v916 = vadd.f32 %v56, %v915
    %v917 = vpop.f32.mrb[0].mxu0
    %918 = vmatprep.mubr.f32.mxu0 0.0
    %919 = vmatmul.mubr.f32.gmra.mrb[0].mxu0 %v802
    %v920 = vpop.f32.mrb[0].mxu0
    %v921 = vadd.f32 %v56, %v920
    %v922 = vpop.f32.mrb[0].mxu0
    %923 = vmatprep.mubr.f32.mxu0 0.0
    %924 = vmatmul.mubr.f32.gmra.mrb[0].mxu0 %v805
    %v925 = vpop.f32.mrb[0].mxu0
    %v926 = vadd.f32 %v56, %v925
    %v927 = vpop.f32.mrb[0].mxu0
    %928 = vmatprep.mubr.f32.mxu0 0.0
    %929 = vmatmul.mubr.f32.gmra.mrb[0].mxu0 %v808
    %v930 = vpop.f32.mrb[0].mxu0
    %v931 = vadd.f32 %v56, %v930
    %v932 = vpop.f32.mrb[0].mxu0
    %933 = vmatprep.mubr.f32.mxu0 0.0
    %934 = vmatmul.mubr.f32.gmra.mrb[0].mxu0 %v811
    %v935 = vpop.f32.mrb[0].mxu0
    %v936 = vadd.f32 %v56, %v935
    %v937 = vpop.f32.mrb[0].mxu0
    %938 = vmatprep.mubr.f32.mxu0 0.0
    %939 = vmatmul.mubr.f32.gmra.mrb[0].mxu0 %v814
    %v940 = vpop.f32.mrb[0].mxu0
    %v941 = vadd.f32 %v56, %v940
    %v942 = vpop.f32.mrb[0].mxu0
    %943 = vmatprep.mubr.f32.mxu0 0.0
    %944 = vmatmul.mubr.f32.gmra.mrb[0].mxu0 %v817
    %v945 = vpop.f32.mrb[0].mxu0
    %v946 = vadd.f32 %v56, %v945
    %v947 = vpop.f32.mrb[0].mxu0
    %948 = vmatprep.mubr.f32.mxu0 0.0
    %949 = vmatmul.mubr.f32.gmra.mrb[0].mxu0 %v820
    %v950 = vpop.f32.mrb[0].mxu0
    %v951 = vadd.f32 %v56, %v950
    %v952 = vpop.f32.mrb[0].mxu0
    %953 = vmatprep.mubr.f32.mxu0 0.0
    %954 = vmatmul.mubr.f32.gmra.mrb[0].mxu0 %v823
    %v955 = vpop.f32.mrb[0].mxu0
    %v956 = vadd.f32 %v56, %v955
    %v957 = vpop.f32.mrb[0].mxu0
    %958 = vmatprep.mubr.f32.mxu0 0.0
    %959 = vmatmul.mubr.f32.gmra.mrb[0].mxu0 %v826
    %v960 = vpop.f32.mrb[0].mxu0
    %v961 = vadd.f32 %v56, %v960
    %v962 = vpop.f32.mrb[0].mxu0
    %963 = vmatprep.mubr.f32.mxu0 0.0
    %964 = vmatmul.mubr.f32.gmra.mrb[0].mxu0 %v829
    %v965 = vpop.f32.mrb[0].mxu0
    %v966 = vadd.f32 %v56, %v965
    %v967 = vpop.f32.mrb[0].mxu0
    %968 = vmatprep.mubr.f32.mxu0 0.0
    %969 = vmatmul.mubr.f32.gmra.mrb[0].mxu0 %v832
    %v970 = vpop.f32.mrb[0].mxu0
    %v971 = vadd.f32 %v56, %v970
    %v972 = vpop.f32.mrb[0].mxu0
    %973 = vmatprep.mubr.f32.mxu0 0.0
    %974 = vmatmul.mubr.f32.gmra.mrb[0].mxu0 %v835
    %v975 = vpop.f32.mrb[0].mxu0
    %v976 = vadd.f32 %v56, %v975
    %v977 = vpop.f32.mrb[0].mxu0
    %978 = vmatprep.mubr.f32.mxu0 0.0
    %979 = vmatmul.mubr.f32.gmra.mrb[0].mxu0 %v838
    %v980 = vpop.f32.mrb[0].mxu0
    %v981 = vadd.f32 %v56, %v980
    %v982 = vpop.f32.mrb[0].mxu0
    %983 = vmatprep.mubr.f32.mxu0 0.0
    %984 = vmatmul.mubr.f32.gmra.mrb[0].mxu0 %v841
    %v985 = vpop.f32.mrb[0].mxu0
    %v986 = vadd.f32 %v56, %v985
    %v987 = vpop.f32.mrb[0].mxu0
    %988 = vmatprep.mubr.f32.mxu0 0.0
    %989 = vmatmul.mubr.f32.gmra.mrb[0].mxu0 %v844
    %v990 = vpop.f32.mrb[0].mxu0
    %v991 = vadd.f32 %v56, %v990
    %v992 = vpop.f32.mrb[0].mxu0
    %993 = vdwg.mxu0
    %v994 = vmax.f32 %v916, 0.0
    %v995 = vmax.f32 %v921, 0.0
    %v996 = vmax.f32 %v926, 0.0
    %v997 = vmax.f32 %v931, 0.0
    %v998 = vmax.f32 %v936, 0.0
    %v999 = vmax.f32 %v941, 0.0
    %v1000 = vmax.f32 %v946, 0.0
    %v1001 = vmax.f32 %v951, 0.0
    %v1002 = vmax.f32 %v956, 0.0
    %v1003 = vmax.f32 %v961, 0.0
    %v1004 = vmax.f32 %v966, 0.0
    %v1005 = vmax.f32 %v971, 0.0
    %v1006 = vmax.f32 %v976, 0.0
    %v1007 = vmax.f32 %v981, 0.0
    %v1008 = vmax.f32 %v986, 0.0
    %v1009 = vmax.f32 %v991, 0.0
    %1010 = vst [vmem:[#allocation2 + $0x180] sm:$0xff] %v994
    %1011 = vst [vmem:[#allocation2 + $0x188] sm:$0xff] %v995
    %1012 = vst [vmem:[#allocation2 + $0x190] sm:$0xff] %v996
    %1013 = vst [vmem:[#allocation2 + $0x198] sm:$0xff] %v997
    %1014 = vst [vmem:[#allocation2 + $0x1a0] sm:$0xff] %v998
    %1015 = vst [vmem:[#allocation2 + $0x1a8] sm:$0xff] %v999
    %1016 = vst [vmem:[#allocation2 + $0x1b0] sm:$0xff] %v1000
    %1017 = vst [vmem:[#allocation2 + $0x1b8] sm:$0xff] %v1001
    %1018 = vst [vmem:[#allocation2 + $0x1c0] sm:$0xff] %v1002
    %1019 = vst [vmem:[#allocation2 + $0x1c8] sm:$0xff] %v1003
    %1020 = vst [vmem:[#allocation2 + $0x1d0] sm:$0xff] %v1004
    %1021 = vst [vmem:[#allocation2 + $0x1d8] sm:$0xff] %v1005
    %1022 = vst [vmem:[#allocation2 + $0x1e0] sm:$0xff] %v1006
    %1023 = vst [vmem:[#allocation2 + $0x1e8] sm:$0xff] %v1007
    %1024 = vst [vmem:[#allocation2 + $0x1f0] sm:$0xff] %v1008
    %1025 = vst [vmem:[#allocation2 + $0x1f8] sm:$0xff] %v1009
    %1026 = vst [vmem:[#allocation3] sm:$0xff] 0.0
    %1027 = vst [vmem:[#allocation3 + $0x8] sm:$0xff] 0.0
    %1028 = vst [vmem:[#allocation3 + $0x10] sm:$0xff] 0.0
    %1029 = vst [vmem:[#allocation3 + $0x18] sm:$0xff] 0.0
    %1030 = vst [vmem:[#allocation3 + $0x20] sm:$0xff] 0.0
    %1031 = vst [vmem:[#allocation3 + $0x28] sm:$0xff] 0.0
    %1032 = vst [vmem:[#allocation3 + $0x30] sm:$0xff] 0.0
    %1033 = vst [vmem:[#allocation3 + $0x38] sm:$0xff] 0.0
    %1034 = vst [vmem:[#allocation3 + $0x40] sm:$0xff] 0.0
    %1035 = vst [vmem:[#allocation3 + $0x48] sm:$0xff] 0.0
    %1036 = vst [vmem:[#allocation3 + $0x50] sm:$0xff] 0.0
    %1037 = vst [vmem:[#allocation3 + $0x58] sm:$0xff] 0.0
    %1038 = vst [vmem:[#allocation3 + $0x60] sm:$0xff] 0.0
    %1039 = vst [vmem:[#allocation3 + $0x68] sm:$0xff] 0.0
    %1040 = vst [vmem:[#allocation3 + $0x70] sm:$0xff] 0.0
    %1041 = vst [vmem:[#allocation3 + $0x78] sm:$0xff] 0.0
    %v1042 = vld [vmem:[#allocation2] ss:$2 sm:$0xff]
    %s1043 = scalar_lea.vmem [#allocation2], 1
    %v1044 = vld [vmem:[%s1043] ss:$2 sm:$0xff]
    %s1045 = scalar_lea.vmem [#allocation2], 16
    %v1046 = vld [vmem:[%s1045] ss:$2 sm:$0xff]
    %s1047 = scalar_lea.vmem [#allocation2], 17
    %v1048 = vld [vmem:[%s1047] ss:$2 sm:$0xff]
    %v1049 = vmax.f32 %v1042, %v1044
    %v1050 = vmax.f32 %v1046, %v1048
    %v1051 = vmax.f32 %v1049, %v1050
    %1052 = vst [vmem:[#allocation3] sm:$0xff] %v1051
    %s1053 = scalar_lea.vmem [#allocation2], 32
    %v1054 = vld [vmem:[%s1053] ss:$2 sm:$0xff]
    %s1055 = scalar_lea.vmem [#allocation2], 33
    %v1056 = vld [vmem:[%s1055] ss:$2 sm:$0xff]
    %s1057 = scalar_lea.vmem [#allocation2], 48
    %v1058 = vld [vmem:[%s1057] ss:$2 sm:$0xff]
    %s1059 = scalar_lea.vmem [#allocation2], 49
    %v1060 = vld [vmem:[%s1059] ss:$2 sm:$0xff]
    %v1061 = vmax.f32 %v1054, %v1056
    %v1062 = vmax.f32 %v1058, %v1060
    %v1063 = vmax.f32 %v1061, %v1062
    %1064 = vst [vmem:[#allocation3 + $0x8] sm:$0xff] %v1063
    %s1065 = scalar_lea.vmem [#allocation2], 64
    %v1066 = vld [vmem:[%s1065] ss:$2 sm:$0xff]
    %s1067 = scalar_lea.vmem [#allocation2], 65
    %v1068 = vld [vmem:[%s1067] ss:$2 sm:$0xff]
    %s1069 = scalar_lea.vmem [#allocation2], 80
    %v1070 = vld [vmem:[%s1069] ss:$2 sm:$0xff]
    %s1071 = scalar_lea.vmem [#allocation2], 81
    %v1072 = vld [vmem:[%s1071] ss:$2 sm:$0xff]
    %v1073 = vmax.f32 %v1066, %v1068
    %v1074 = vmax.f32 %v1070, %v1072
    %v1075 = vmax.f32 %v1073, %v1074
    %1076 = vst [vmem:[#allocation3 + $0x10] sm:$0xff] %v1075
    %s1077 = scalar_lea.vmem [#allocation2], 96
    %v1078 = vld [vmem:[%s1077] ss:$2 sm:$0xff]
    %s1079 = scalar_lea.vmem [#allocation2], 97
    %v1080 = vld [vmem:[%s1079] ss:$2 sm:$0xff]
    %s1081 = scalar_lea.vmem [#allocation2], 112
    %v1082 = vld [vmem:[%s1081] ss:$2 sm:$0xff]
    %s1083 = scalar_lea.vmem [#allocation2], 113
    %v1084 = vld [vmem:[%s1083] ss:$2 sm:$0xff]
    %v1085 = vmax.f32 %v1078, %v1080
    %v1086 = vmax.f32 %v1082, %v1084
    %v1087 = vmax.f32 %v1085, %v1086
    %1088 = vst [vmem:[#allocation3 + $0x18] sm:$0xff] %v1087
    %s1089 = scalar_lea.vmem [#allocation2], 128
    %v1090 = vld [vmem:[%s1089] ss:$2 sm:$0xff]
    %s1091 = scalar_lea.vmem [#allocation2], 129
    %v1092 = vld [vmem:[%s1091] ss:$2 sm:$0xff]
    %s1093 = scalar_lea.vmem [#allocation2], 144
    %v1094 = vld [vmem:[%s1093] ss:$2 sm:$0xff]
    %s1095 = scalar_lea.vmem [#allocation2], 145
    %v1096 = vld [vmem:[%s1095] ss:$2 sm:$0xff]
    %v1097 = vmax.f32 %v1090, %v1092
    %v1098 = vmax.f32 %v1094, %v1096
    %v1099 = vmax.f32 %v1097, %v1098
    %1100 = vst [vmem:[#allocation3 + $0x20] sm:$0xff] %v1099
    %s1101 = scalar_lea.vmem [#allocation2], 160
    %v1102 = vld [vmem:[%s1101] ss:$2 sm:$0xff]
    %s1103 = scalar_lea.vmem [#allocation2], 161
    %v1104 = vld [vmem:[%s1103] ss:$2 sm:$0xff]
    %s1105 = scalar_lea.vmem [#allocation2], 176
    %v1106 = vld [vmem:[%s1105] ss:$2 sm:$0xff]
    %s1107 = scalar_lea.vmem [#allocation2], 177
    %v1108 = vld [vmem:[%s1107] ss:$2 sm:$0xff]
    %v1109 = vmax.f32 %v1102, %v1104
    %v1110 = vmax.f32 %v1106, %v1108
    %v1111 = vmax.f32 %v1109, %v1110
    %1112 = vst [vmem:[#allocation3 + $0x28] sm:$0xff] %v1111
    %s1113 = scalar_lea.vmem [#allocation2], 192
    %v1114 = vld [vmem:[%s1113] ss:$2 sm:$0xff]
    %s1115 = scalar_lea.vmem [#allocation2], 193
    %v1116 = vld [vmem:[%s1115] ss:$2 sm:$0xff]
    %s1117 = scalar_lea.vmem [#allocation2], 208
    %v1118 = vld [vmem:[%s1117] ss:$2 sm:$0xff]
    %s1119 = scalar_lea.vmem [#allocation2], 209
    %v1120 = vld [vmem:[%s1119] ss:$2 sm:$0xff]
    %v1121 = vmax.f32 %v1114, %v1116
    %v1122 = vmax.f32 %v1118, %v1120
    %v1123 = vmax.f32 %v1121, %v1122
    %1124 = vst [vmem:[#allocation3 + $0x30] sm:$0xff] %v1123
    %s1125 = scalar_lea.vmem [#allocation2], 256
    %v1126 = vld [vmem:[%s1125] ss:$2 sm:$0xff]
    %s1127 = scalar_lea.vmem [#allocation2], 257
    %v1128 = vld [vmem:[%s1127] ss:$2 sm:$0xff]
    %s1129 = scalar_lea.vmem [#allocation2], 272
    %v1130 = vld [vmem:[%s1129] ss:$2 sm:$0xff]
    %s1131 = scalar_lea.vmem [#allocation2], 273
    %v1132 = vld [vmem:[%s1131] ss:$2 sm:$0xff]
    %v1133 = vmax.f32 %v1126, %v1128
    %v1134 = vmax.f32 %v1130, %v1132
    %v1135 = vmax.f32 %v1133, %v1134
    %1136 = vst [vmem:[#allocation3 + $0x40] sm:$0xff] %v1135
    %s1137 = scalar_lea.vmem [#allocation2], 288
    %v1138 = vld [vmem:[%s1137] ss:$2 sm:$0xff]
    %s1139 = scalar_lea.vmem [#allocation2], 289
    %v1140 = vld [vmem:[%s1139] ss:$2 sm:$0xff]
    %s1141 = scalar_lea.vmem [#allocation2], 304
    %v1142 = vld [vmem:[%s1141] ss:$2 sm:$0xff]
    %s1143 = scalar_lea.vmem [#allocation2], 305
    %v1144 = vld [vmem:[%s1143] ss:$2 sm:$0xff]
    %v1145 = vmax.f32 %v1138, %v1140
    %v1146 = vmax.f32 %v1142, %v1144
    %v1147 = vmax.f32 %v1145, %v1146
    %1148 = vst [vmem:[#allocation3 + $0x48] sm:$0xff] %v1147
    %s1149 = scalar_lea.vmem [#allocation2], 320
    %v1150 = vld [vmem:[%s1149] ss:$2 sm:$0xff]
    %s1151 = scalar_lea.vmem [#allocation2], 321
    %v1152 = vld [vmem:[%s1151] ss:$2 sm:$0xff]
    %s1153 = scalar_lea.vmem [#allocation2], 336
    %v1154 = vld [vmem:[%s1153] ss:$2 sm:$0xff]
    %s1155 = scalar_lea.vmem [#allocation2], 337
    %v1156 = vld [vmem:[%s1155] ss:$2 sm:$0xff]
    %v1157 = vmax.f32 %v1150, %v1152
    %v1158 = vmax.f32 %v1154, %v1156
    %v1159 = vmax.f32 %v1157, %v1158
    %1160 = vst [vmem:[#allocation3 + $0x50] sm:$0xff] %v1159
    %s1161 = scalar_lea.vmem [#allocation2], 352
    %v1162 = vld [vmem:[%s1161] ss:$2 sm:$0xff]
    %s1163 = scalar_lea.vmem [#allocation2], 353
    %v1164 = vld [vmem:[%s1163] ss:$2 sm:$0xff]
    %s1165 = scalar_lea.vmem [#allocation2], 368
    %v1166 = vld [vmem:[%s1165] ss:$2 sm:$0xff]
    %s1167 = scalar_lea.vmem [#allocation2], 369
    %v1168 = vld [vmem:[%s1167] ss:$2 sm:$0xff]
    %v1169 = vmax.f32 %v1162, %v1164
    %v1170 = vmax.f32 %v1166, %v1168
    %v1171 = vmax.f32 %v1169, %v1170
    %1172 = vst [vmem:[#allocation3 + $0x58] sm:$0xff] %v1171
    %s1173 = scalar_lea.vmem [#allocation2], 384
    %v1174 = vld [vmem:[%s1173] ss:$2 sm:$0xff]
    %s1175 = scalar_lea.vmem [#allocation2], 385
    %v1176 = vld [vmem:[%s1175] ss:$2 sm:$0xff]
    %s1177 = scalar_lea.vmem [#allocation2], 400
    %v1178 = vld [vmem:[%s1177] ss:$2 sm:$0xff]
    %s1179 = scalar_lea.vmem [#allocation2], 401
    %v1180 = vld [vmem:[%s1179] ss:$2 sm:$0xff]
    %v1181 = vmax.f32 %v1174, %v1176
    %v1182 = vmax.f32 %v1178, %v1180
    %v1183 = vmax.f32 %v1181, %v1182
    %1184 = vst [vmem:[#allocation3 + $0x60] sm:$0xff] %v1183
    %s1185 = scalar_lea.vmem [#allocation2], 416
    %v1186 = vld [vmem:[%s1185] ss:$2 sm:$0xff]
    %s1187 = scalar_lea.vmem [#allocation2], 417
    %v1188 = vld [vmem:[%s1187] ss:$2 sm:$0xff]
    %s1189 = scalar_lea.vmem [#allocation2], 432
    %v1190 = vld [vmem:[%s1189] ss:$2 sm:$0xff]
    %s1191 = scalar_lea.vmem [#allocation2], 433
    %v1192 = vld [vmem:[%s1191] ss:$2 sm:$0xff]
    %v1193 = vmax.f32 %v1186, %v1188
    %v1194 = vmax.f32 %v1190, %v1192
    %v1195 = vmax.f32 %v1193, %v1194
    %1196 = vst [vmem:[#allocation3 + $0x68] sm:$0xff] %v1195
    %s1197 = scalar_lea.vmem [#allocation2], 448
    %v1198 = vld [vmem:[%s1197] ss:$2 sm:$0xff]
    %s1199 = scalar_lea.vmem [#allocation2], 449
    %v1200 = vld [vmem:[%s1199] ss:$2 sm:$0xff]
    %s1201 = scalar_lea.vmem [#allocation2], 464
    %v1202 = vld [vmem:[%s1201] ss:$2 sm:$0xff]
    %s1203 = scalar_lea.vmem [#allocation2], 465
    %v1204 = vld [vmem:[%s1203] ss:$2 sm:$0xff]
    %v1205 = vmax.f32 %v1198, %v1200
    %v1206 = vmax.f32 %v1202, %v1204
    %v1207 = vmax.f32 %v1205, %v1206
    %1208 = vst [vmem:[#allocation3 + $0x70] sm:$0xff] %v1207
    %v1209 = vld [vmem:[%s4] sm:$0x1]
    %v1210 = vld [vmem:[#allocation3] sm:$0xff]
    %v1211 = vld [vmem:[#allocation3 + $0x8] sm:$0xff]
    %v1212 = vld [vmem:[#allocation3 + $0x10] sm:$0xff]
    %v1213 = vld [vmem:[#allocation3 + $0x18] sm:$0xff]
    %v1214 = vld [vmem:[#allocation3 + $0x20] sm:$0xff]
    %v1215 = vld [vmem:[#allocation3 + $0x28] sm:$0xff]
    %v1216 = vld [vmem:[#allocation3 + $0x30] sm:$0xff]
    %v1217 = vld [vmem:[#allocation3 + $0x38] sm:$0xff]
    %v1218 = vld [vmem:[#allocation3 + $0x40] sm:$0xff]
    %v1219 = vld [vmem:[#allocation3 + $0x48] sm:$0xff]
    %v1220 = vld [vmem:[#allocation3 + $0x50] sm:$0xff]
    %v1221 = vld [vmem:[#allocation3 + $0x58] sm:$0xff]
    %v1222 = vld [vmem:[#allocation3 + $0x60] sm:$0xff]
    %v1223 = vld [vmem:[%s3] sm:$0xff]
    %v1224 = vld [vmem:[%s3 + $0x8] sm:$0xff]
    %v1225 = vld [vmem:[%s3 + $0x10] sm:$0xff]
    %v1226 = vld [vmem:[%s3 + $0x18] sm:$0xff]
    %v1227 = vld [vmem:[%s3 + $0x20] sm:$0xff]
    %v1228 = vld [vmem:[%s3 + $0x28] sm:$0xff]
    %v1229 = vld [vmem:[%s3 + $0x30] sm:$0xff]
    %v1230 = vld [vmem:[%s3 + $0x38] sm:$0xff]
    %v1231 = vld [vmem:[%s3 + $0x40] sm:$0xff]
    %v1232 = vld [vmem:[%s3 + $0x48] sm:$0xff]
    %v1233 = vld [vmem:[%s3 + $0x50] sm:$0xff]
    %v1234 = vld [vmem:[%s3 + $0x58] sm:$0xff]
    %v1235 = vld [vmem:[%s3 + $0x60] sm:$0xff]
    %v1236 = vld [vmem:[%s3 + $0x68] sm:$0xff]
    %v1237 = vld [vmem:[%s3 + $0x70] sm:$0xff]
    %v1238 = vld [vmem:[%s3 + $0x78] sm:$0xff]
    %v1239 = vld [vmem:[#allocation3 + $0x1] sm:$0xff]
    %v1240 = vld [vmem:[#allocation3 + $0x9] sm:$0xff]
    %v1241 = vld [vmem:[#allocation3 + $0x11] sm:$0xff]
    %v1242 = vld [vmem:[#allocation3 + $0x19] sm:$0xff]
    %v1243 = vld [vmem:[#allocation3 + $0x21] sm:$0xff]
    %v1244 = vld [vmem:[#allocation3 + $0x29] sm:$0xff]
    %v1245 = vld [vmem:[#allocation3 + $0x31] sm:$0xff]
    %v1246 = vld [vmem:[#allocation3 + $0x39] sm:$0xff]
    %v1247 = vld [vmem:[#allocation3 + $0x41] sm:$0xff]
    %v1248 = vld [vmem:[#allocation3 + $0x49] sm:$0xff]
    %v1249 = vld [vmem:[#allocation3 + $0x51] sm:$0xff]
    %v1250 = vld [vmem:[#allocation3 + $0x59] sm:$0xff]
    %v1251 = vld [vmem:[#allocation3 + $0x61] sm:$0xff]
    %s1252 = scalar_lea.vmem %s3, 128
    %v1253 = vld [vmem:[%s1252] sm:$0xff]
    %v1254 = vld [vmem:[%s1252 + $0x8] sm:$0xff]
    %v1255 = vld [vmem:[%s1252 + $0x10] sm:$0xff]
    %v1256 = vld [vmem:[%s1252 + $0x18] sm:$0xff]
    %v1257 = vld [vmem:[%s1252 + $0x20] sm:$0xff]
    %v1258 = vld [vmem:[%s1252 + $0x28] sm:$0xff]
    %v1259 = vld [vmem:[%s1252 + $0x30] sm:$0xff]
    %v1260 = vld [vmem:[%s1252 + $0x38] sm:$0xff]
    %v1261 = vld [vmem:[%s1252 + $0x40] sm:$0xff]
    %v1262 = vld [vmem:[%s1252 + $0x48] sm:$0xff]
    %v1263 = vld [vmem:[%s1252 + $0x50] sm:$0xff]
    %v1264 = vld [vmem:[%s1252 + $0x58] sm:$0xff]
    %v1265 = vld [vmem:[%s1252 + $0x60] sm:$0xff]
    %v1266 = vld [vmem:[%s1252 + $0x68] sm:$0xff]
    %v1267 = vld [vmem:[%s1252 + $0x70] sm:$0xff]
    %v1268 = vld [vmem:[%s1252 + $0x78] sm:$0xff]
    %1269 = vmatprep.subr.mxu0 0.0
    %1270 = vmatpush1.msra.mxu0 %v1253
    %1271 = vmatprep.subr.mxu0 0.0
    %1272 = vmatpush1.msra.mxu0 %v1254
    %1273 = vmatprep.subr.mxu0 0.0
    %1274 = vmatpush1.msra.mxu0 %v1255
    %1275 = vmatprep.subr.mxu0 0.0
    %1276 = vmatpush1.msra.mxu0 %v1256
    %1277 = vmatprep.subr.mxu0 0.0
    %1278 = vmatpush1.msra.mxu0 %v1257
    %1279 = vmatprep.subr.mxu0 0.0
    %1280 = vmatpush1.msra.mxu0 %v1258
    %1281 = vmatprep.subr.mxu0 0.0
    %1282 = vmatpush1.msra.mxu0 %v1259
    %1283 = vmatprep.subr.mxu0 0.0
    %1284 = vmatpush1.msra.mxu0 %v1260
    %1285 = vmatprep.subr.mxu0 0.0
    %1286 = vmatpush1.msra.mxu0 %v1261
    %1287 = vmatprep.subr.mxu0 0.0
    %1288 = vmatpush1.msra.mxu0 %v1262
    %1289 = vmatprep.subr.mxu0 0.0
    %1290 = vmatpush1.msra.mxu0 %v1263
    %1291 = vmatprep.subr.mxu0 0.0
    %1292 = vmatpush1.msra.mxu0 %v1264
    %1293 = vmatprep.subr.mxu0 0.0
    %1294 = vmatpush1.msra.mxu0 %v1265
    %1295 = vmatprep.subr.mxu0 0.0
    %1296 = vmatpush1.msra.mxu0 %v1266
    %1297 = vmatprep.subr.mxu0 0.0
    %1298 = vmatpush1.msra.mxu0 %v1267
    %1299 = vmatprep.subr.mxu0 0.0
    %1300 = vmatpush1.msra.mxu0 %v1268
    %1301 = vmatprep.subr.mxu0 0.0
    %1302 = vmatpush1.msra.mxu0 0.0
    %1303 = vmatprep.subr.mxu0 0.0
    %1304 = vmatpush1.msra.mxu0 0.0
    %1305 = vmatprep.subr.mxu0 0.0
    %1306 = vmatpush1.msra.mxu0 0.0
    %1307 = vmatprep.subr.mxu0 0.0
    %1308 = vmatpush1.msra.mxu0 0.0
    %1309 = vmatprep.subr.mxu0 0.0
    %1310 = vmatpush1.msra.mxu0 0.0
    %1311 = vmatprep.subr.mxu0 0.0
    %1312 = vmatpush1.msra.mxu0 0.0
    %1313 = vmatprep.subr.mxu0 0.0
    %1314 = vmatpush1.msra.mxu0 0.0
    %1315 = vmatprep.subr.mxu0 0.0
    %1316 = vmatpush1.msra.mxu0 0.0
    %1317 = vmatprep.subr.mxu0 0.0
    %1318 = vmatpush1.msra.mxu0 0.0
    %1319 = vmatprep.subr.mxu0 0.0
    %1320 = vmatpush1.msra.mxu0 0.0
    %1321 = vmatprep.subr.mxu0 0.0
    %1322 = vmatpush1.msra.mxu0 0.0
    %1323 = vmatprep.subr.mxu0 0.0
    %1324 = vmatpush1.msra.mxu0 0.0
    %1325 = vmatprep.subr.mxu0 0.0
    %1326 = vmatpush1.msra.mxu0 0.0
    %1327 = vmatprep.subr.mxu0 0.0
    %1328 = vmatpush1.msra.mxu0 0.0
    %1329 = vmatprep.subr.mxu0 0.0
    %1330 = vmatpush1.msra.mxu0 0.0
    %1331 = vmatprep.subr.mxu0 0.0
    %1332 = vmatpush1.msra.mxu0 0.0
    %1333 = vmatprep.mubr.f32.mxu0 0.0
    %1334 = vmatmul.mubr.f32.gmra.mrb[0].mxu0 %v1239
    %v1335 = vpop.f32.mrb[0].mxu0
    %v1336 = vadd.f32 0.0, %v1335
    %v1337 = vpop.f32.mrb[0].mxu0
    %1338 = vmatprep.mubr.f32.mxu0 0.0
    %1339 = vmatmul.mubr.f32.gmra.mrb[0].mxu0 %v1240
    %v1340 = vpop.f32.mrb[0].mxu0
    %v1341 = vadd.f32 0.0, %v1340
    %v1342 = vpop.f32.mrb[0].mxu0
    %1343 = vmatprep.mubr.f32.mxu0 0.0
    %1344 = vmatmul.mubr.f32.gmra.mrb[0].mxu0 %v1241
    %v1345 = vpop.f32.mrb[0].mxu0
    %v1346 = vadd.f32 0.0, %v1345
    %v1347 = vpop.f32.mrb[0].mxu0
    %1348 = vmatprep.mubr.f32.mxu0 0.0
    %1349 = vmatmul.mubr.f32.gmra.mrb[0].mxu0 %v1242
    %v1350 = vpop.f32.mrb[0].mxu0
    %v1351 = vadd.f32 0.0, %v1350
    %v1352 = vpop.f32.mrb[0].mxu0
    %1353 = vmatprep.mubr.f32.mxu0 0.0
    %1354 = vmatmul.mubr.f32.gmra.mrb[0].mxu0 %v1243
    %v1355 = vpop.f32.mrb[0].mxu0
    %v1356 = vadd.f32 0.0, %v1355
    %v1357 = vpop.f32.mrb[0].mxu0
    %1358 = vmatprep.mubr.f32.mxu0 0.0
    %1359 = vmatmul.mubr.f32.gmra.mrb[0].mxu0 %v1244
    %v1360 = vpop.f32.mrb[0].mxu0
    %v1361 = vadd.f32 0.0, %v1360
    %v1362 = vpop.f32.mrb[0].mxu0
    %1363 = vmatprep.mubr.f32.mxu0 0.0
    %1364 = vmatmul.mubr.f32.gmra.mrb[0].mxu0 %v1245
    %v1365 = vpop.f32.mrb[0].mxu0
    %v1366 = vadd.f32 0.0, %v1365
    %v1367 = vpop.f32.mrb[0].mxu0
    %1368 = vmatprep.mubr.f32.mxu0 0.0
    %1369 = vmatmul.mubr.f32.gmra.mrb[0].mxu0 %v1246
    %v1370 = vpop.f32.mrb[0].mxu0
    %v1371 = vadd.f32 0.0, %v1370
    %v1372 = vpop.f32.mrb[0].mxu0
    %1373 = vmatprep.mubr.f32.mxu0 0.0
    %1374 = vmatmul.mubr.f32.gmra.mrb[0].mxu0 %v1247
    %v1375 = vpop.f32.mrb[0].mxu0
    %v1376 = vadd.f32 0.0, %v1375
    %v1377 = vpop.f32.mrb[0].mxu0
    %1378 = vmatprep.mubr.f32.mxu0 0.0
    %1379 = vmatmul.mubr.f32.gmra.mrb[0].mxu0 %v1248
    %v1380 = vpop.f32.mrb[0].mxu0
    %v1381 = vadd.f32 0.0, %v1380
    %v1382 = vpop.f32.mrb[0].mxu0
    %1383 = vmatprep.mubr.f32.mxu0 0.0
    %1384 = vmatmul.mubr.f32.gmra.mrb[0].mxu0 %v1249
    %v1385 = vpop.f32.mrb[0].mxu0
    %v1386 = vadd.f32 0.0, %v1385
    %v1387 = vpop.f32.mrb[0].mxu0
    %1388 = vmatprep.mubr.f32.mxu0 0.0
    %1389 = vmatmul.mubr.f32.gmra.mrb[0].mxu0 %v1250
    %v1390 = vpop.f32.mrb[0].mxu0
    %v1391 = vadd.f32 0.0, %v1390
    %v1392 = vpop.f32.mrb[0].mxu0
    %1393 = vmatprep.mubr.f32.mxu0 0.0
    %1394 = vmatmul.mubr.f32.gmra.mrb[0].mxu0 %v1251
    %v1395 = vpop.f32.mrb[0].mxu0
    %v1396 = vadd.f32 0.0, %v1395
    %v1397 = vpop.f32.mrb[0].mxu0
    %1398 = vdwg.mxu0
    %1399 = vmatprep.subr.mxu0 0.0
    %1400 = vmatpush1.msra.mxu0 %v1223
    %1401 = vmatprep.subr.mxu0 0.0
    %1402 = vmatpush1.msra.mxu0 %v1224
    %1403 = vmatprep.subr.mxu0 0.0
    %1404 = vmatpush1.msra.mxu0 %v1225
    %1405 = vmatprep.subr.mxu0 0.0
    %1406 = vmatpush1.msra.mxu0 %v1226
    %1407 = vmatprep.subr.mxu0 0.0
    %1408 = vmatpush1.msra.mxu0 %v1227
    %1409 = vmatprep.subr.mxu0 0.0
    %1410 = vmatpush1.msra.mxu0 %v1228
    %1411 = vmatprep.subr.mxu0 0.0
    %1412 = vmatpush1.msra.mxu0 %v1229
    %1413 = vmatprep.subr.mxu0 0.0
    %1414 = vmatpush1.msra.mxu0 %v1230
    %1415 = vmatprep.subr.mxu0 0.0
    %1416 = vmatpush1.msra.mxu0 %v1231
    %1417 = vmatprep.subr.mxu0 0.0
    %1418 = vmatpush1.msra.mxu0 %v1232
    %1419 = vmatprep.subr.mxu0 0.0
    %1420 = vmatpush1.msra.mxu0 %v1233
    %1421 = vmatprep.subr.mxu0 0.0
    %1422 = vmatpush1.msra.mxu0 %v1234
    %1423 = vmatprep.subr.mxu0 0.0
    %1424 = vmatpush1.msra.mxu0 %v1235
    %1425 = vmatprep.subr.mxu0 0.0
    %1426 = vmatpush1.msra.mxu0 %v1236
    %1427 = vmatprep.subr.mxu0 0.0
    %1428 = vmatpush1.msra.mxu0 %v1237
    %1429 = vmatprep.subr.mxu0 0.0
    %1430 = vmatpush1.msra.mxu0 %v1238
    %1431 = vmatprep.subr.mxu0 0.0
    %1432 = vmatpush1.msra.mxu0 0.0
    %1433 = vmatprep.subr.mxu0 0.0
    %1434 = vmatpush1.msra.mxu0 0.0
    %1435 = vmatprep.subr.mxu0 0.0
    %1436 = vmatpush1.msra.mxu0 0.0
    %1437 = vmatprep.subr.mxu0 0.0
    %1438 = vmatpush1.msra.mxu0 0.0
    %1439 = vmatprep.subr.mxu0 0.0
    %1440 = vmatpush1.msra.mxu0 0.0
    %1441 = vmatprep.subr.mxu0 0.0
    %1442 = vmatpush1.msra.mxu0 0.0
    %1443 = vmatprep.subr.mxu0 0.0
    %1444 = vmatpush1.msra.mxu0 0.0
    %1445 = vmatprep.subr.mxu0 0.0
    %1446 = vmatpush1.msra.mxu0 0.0
    %1447 = vmatprep.subr.mxu0 0.0
    %1448 = vmatpush1.msra.mxu0 0.0
    %1449 = vmatprep.subr.mxu0 0.0
    %1450 = vmatpush1.msra.mxu0 0.0
    %1451 = vmatprep.subr.mxu0 0.0
    %1452 = vmatpush1.msra.mxu0 0.0
    %1453 = vmatprep.subr.mxu0 0.0
    %1454 = vmatpush1.msra.mxu0 0.0
    %1455 = vmatprep.subr.mxu0 0.0
    %1456 = vmatpush1.msra.mxu0 0.0
    %1457 = vmatprep.subr.mxu0 0.0
    %1458 = vmatpush1.msra.mxu0 0.0
    %1459 = vmatprep.subr.mxu0 0.0
    %1460 = vmatpush1.msra.mxu0 0.0
    %1461 = vmatprep.subr.mxu0 0.0
    %1462 = vmatpush1.msra.mxu0 0.0
    %1463 = vmatprep.mubr.f32.mxu0 0.0
    %1464 = vmatmul.mubr.f32.gmra.mrb[0].mxu0 %v1210
    %v1465 = vpop.f32.mrb[0].mxu0
    %v1466 = vadd.f32 %v1336, %v1465
    %v1467 = vpop.f32.mrb[0].mxu0
    %1468 = vmatprep.mubr.f32.mxu0 0.0
    %1469 = vmatmul.mubr.f32.gmra.mrb[0].mxu0 %v1211
    %v1470 = vpop.f32.mrb[0].mxu0
    %v1471 = vadd.f32 %v1341, %v1470
    %v1472 = vpop.f32.mrb[0].mxu0
    %1473 = vmatprep.mubr.f32.mxu0 0.0
    %1474 = vmatmul.mubr.f32.gmra.mrb[0].mxu0 %v1212
    %v1475 = vpop.f32.mrb[0].mxu0
    %v1476 = vadd.f32 %v1346, %v1475
    %v1477 = vpop.f32.mrb[0].mxu0
    %1478 = vmatprep.mubr.f32.mxu0 0.0
    %1479 = vmatmul.mubr.f32.gmra.mrb[0].mxu0 %v1213
    %v1480 = vpop.f32.mrb[0].mxu0
    %v1481 = vadd.f32 %v1351, %v1480
    %v1482 = vpop.f32.mrb[0].mxu0
    %1483 = vmatprep.mubr.f32.mxu0 0.0
    %1484 = vmatmul.mubr.f32.gmra.mrb[0].mxu0 %v1214
    %v1485 = vpop.f32.mrb[0].mxu0
    %v1486 = vadd.f32 %v1356, %v1485
    %v1487 = vpop.f32.mrb[0].mxu0
    %1488 = vmatprep.mubr.f32.mxu0 0.0
    %1489 = vmatmul.mubr.f32.gmra.mrb[0].mxu0 %v1215
    %v1490 = vpop.f32.mrb[0].mxu0
    %v1491 = vadd.f32 %v1361, %v1490
    %v1492 = vpop.f32.mrb[0].mxu0
    %1493 = vmatprep.mubr.f32.mxu0 0.0
    %1494 = vmatmul.mubr.f32.gmra.mrb[0].mxu0 %v1216
    %v1495 = vpop.f32.mrb[0].mxu0
    %v1496 = vadd.f32 %v1366, %v1495
    %v1497 = vpop.f32.mrb[0].mxu0
    %1498 = vmatprep.mubr.f32.mxu0 0.0
    %1499 = vmatmul.mubr.f32.gmra.mrb[0].mxu0 %v1217
    %v1500 = vpop.f32.mrb[0].mxu0
    %v1501 = vadd.f32 %v1371, %v1500
    %v1502 = vpop.f32.mrb[0].mxu0
    %1503 = vmatprep.mubr.f32.mxu0 0.0
    %1504 = vmatmul.mubr.f32.gmra.mrb[0].mxu0 %v1218
    %v1505 = vpop.f32.mrb[0].mxu0
    %v1506 = vadd.f32 %v1376, %v1505
    %v1507 = vpop.f32.mrb[0].mxu0
    %1508 = vmatprep.mubr.f32.mxu0 0.0
    %1509 = vmatmul.mubr.f32.gmra.mrb[0].mxu0 %v1219
    %v1510 = vpop.f32.mrb[0].mxu0
    %v1511 = vadd.f32 %v1381, %v1510
    %v1512 = vpop.f32.mrb[0].mxu0
    %1513 = vmatprep.mubr.f32.mxu0 0.0
    %1514 = vmatmul.mubr.f32.gmra.mrb[0].mxu0 %v1220
    %v1515 = vpop.f32.mrb[0].mxu0
    %v1516 = vadd.f32 %v1386, %v1515
    %v1517 = vpop.f32.mrb[0].mxu0
    %1518 = vmatprep.mubr.f32.mxu0 0.0
    %1519 = vmatmul.mubr.f32.gmra.mrb[0].mxu0 %v1221
    %v1520 = vpop.f32.mrb[0].mxu0
    %v1521 = vadd.f32 %v1391, %v1520
    %v1522 = vpop.f32.mrb[0].mxu0
    %1523 = vmatprep.mubr.f32.mxu0 0.0
    %1524 = vmatmul.mubr.f32.gmra.mrb[0].mxu0 %v1222
    %v1525 = vpop.f32.mrb[0].mxu0
    %v1526 = vadd.f32 %v1396, %v1525
    %v1527 = vpop.f32.mrb[0].mxu0
    %1528 = vdwg.mxu0
    %v1529 = vld [vmem:[#allocation3 + $0x2] sm:$0xff]
    %v1530 = vld [vmem:[#allocation3 + $0xa] sm:$0xff]
    %v1531 = vld [vmem:[#allocation3 + $0x12] sm:$0xff]
    %v1532 = vld [vmem:[#allocation3 + $0x1a] sm:$0xff]
    %v1533 = vld [vmem:[#allocation3 + $0x22] sm:$0xff]
    %v1534 = vld [vmem:[#allocation3 + $0x2a] sm:$0xff]
    %v1535 = vld [vmem:[#allocation3 + $0x32] sm:$0xff]
    %v1536 = vld [vmem:[#allocation3 + $0x3a] sm:$0xff]
    %v1537 = vld [vmem:[#allocation3 + $0x42] sm:$0xff]
    %v1538 = vld [vmem:[#allocation3 + $0x4a] sm:$0xff]
    %v1539 = vld [vmem:[#allocation3 + $0x52] sm:$0xff]
    %v1540 = vld [vmem:[#allocation3 + $0x5a] sm:$0xff]
    %v1541 = vld [vmem:[#allocation3 + $0x62] sm:$0xff]
    %s1542 = scalar_lea.vmem %s3, 256
    %v1543 = vld [vmem:[%s1542] sm:$0xff]
    %v1544 = vld [vmem:[%s1542 + $0x8] sm:$0xff]
    %v1545 = vld [vmem:[%s1542 + $0x10] sm:$0xff]
    %v1546 = vld [vmem:[%s1542 + $0x18] sm:$0xff]
    %v1547 = vld [vmem:[%s1542 + $0x20] sm:$0xff]
    %v1548 = vld [vmem:[%s1542 + $0x28] sm:$0xff]
    %v1549 = vld [vmem:[%s1542 + $0x30] sm:$0xff]
    %v1550 = vld [vmem:[%s1542 + $0x38] sm:$0xff]
    %v1551 = vld [vmem:[%s1542 + $0x40] sm:$0xff]
    %v1552 = vld [vmem:[%s1542 + $0x48] sm:$0xff]
    %v1553 = vld [vmem:[%s1542 + $0x50] sm:$0xff]
    %v1554 = vld [vmem:[%s1542 + $0x58] sm:$0xff]
    %v1555 = vld [vmem:[%s1542 + $0x60] sm:$0xff]
    %v1556 = vld [vmem:[%s1542 + $0x68] sm:$0xff]
    %v1557 = vld [vmem:[%s1542 + $0x70] sm:$0xff]
    %v1558 = vld [vmem:[%s1542 + $0x78] sm:$0xff]
    %1559 = vmatprep.subr.mxu0 0.0
    %1560 = vmatpush1.msra.mxu0 %v1543
    %1561 = vmatprep.subr.mxu0 0.0
    %1562 = vmatpush1.msra.mxu0 %v1544
    %1563 = vmatprep.subr.mxu0 0.0
    %1564 = vmatpush1.msra.mxu0 %v1545
    %1565 = vmatprep.subr.mxu0 0.0
    %1566 = vmatpush1.msra.mxu0 %v1546
    %1567 = vmatprep.subr.mxu0 0.0
    %1568 = vmatpush1.msra.mxu0 %v1547
    %1569 = vmatprep.subr.mxu0 0.0
    %1570 = vmatpush1.msra.mxu0 %v1548
    %1571 = vmatprep.subr.mxu0 0.0
    %1572 = vmatpush1.msra.mxu0 %v1549
    %1573 = vmatprep.subr.mxu0 0.0
    %1574 = vmatpush1.msra.mxu0 %v1550
    %1575 = vmatprep.subr.mxu0 0.0
    %1576 = vmatpush1.msra.mxu0 %v1551
    %1577 = vmatprep.subr.mxu0 0.0
    %1578 = vmatpush1.msra.mxu0 %v1552
    %1579 = vmatprep.subr.mxu0 0.0
    %1580 = vmatpush1.msra.mxu0 %v1553
    %1581 = vmatprep.subr.mxu0 0.0
    %1582 = vmatpush1.msra.mxu0 %v1554
    %1583 = vmatprep.subr.mxu0 0.0
    %1584 = vmatpush1.msra.mxu0 %v1555
    %1585 = vmatprep.subr.mxu0 0.0
    %1586 = vmatpush1.msra.mxu0 %v1556
    %1587 = vmatprep.subr.mxu0 0.0
    %1588 = vmatpush1.msra.mxu0 %v1557
    %1589 = vmatprep.subr.mxu0 0.0
    %1590 = vmatpush1.msra.mxu0 %v1558
    %1591 = vmatprep.subr.mxu0 0.0
    %1592 = vmatpush1.msra.mxu0 0.0
    %1593 = vmatprep.subr.mxu0 0.0
    %1594 = vmatpush1.msra.mxu0 0.0
    %1595 = vmatprep.subr.mxu0 0.0
    %1596 = vmatpush1.msra.mxu0 0.0
    %1597 = vmatprep.subr.mxu0 0.0
    %1598 = vmatpush1.msra.mxu0 0.0
    %1599 = vmatprep.subr.mxu0 0.0
    %1600 = vmatpush1.msra.mxu0 0.0
    %1601 = vmatprep.subr.mxu0 0.0
    %1602 = vmatpush1.msra.mxu0 0.0
    %1603 = vmatprep.subr.mxu0 0.0
    %1604 = vmatpush1.msra.mxu0 0.0
    %1605 = vmatprep.subr.mxu0 0.0
    %1606 = vmatpush1.msra.mxu0 0.0
    %1607 = vmatprep.subr.mxu0 0.0
    %1608 = vmatpush1.msra.mxu0 0.0
    %1609 = vmatprep.subr.mxu0 0.0
    %1610 = vmatpush1.msra.mxu0 0.0
    %1611 = vmatprep.subr.mxu0 0.0
    %1612 = vmatpush1.msra.mxu0 0.0
    %1613 = vmatprep.subr.mxu0 0.0
    %1614 = vmatpush1.msra.mxu0 0.0
    %1615 = vmatprep.subr.mxu0 0.0
    %1616 = vmatpush1.msra.mxu0 0.0
    %1617 = vmatprep.subr.mxu0 0.0
    %1618 = vmatpush1.msra.mxu0 0.0
    %1619 = vmatprep.subr.mxu0 0.0
    %1620 = vmatpush1.msra.mxu0 0.0
    %1621 = vmatprep.subr.mxu0 0.0
    %1622 = vmatpush1.msra.mxu0 0.0
    %1623 = vmatprep.mubr.f32.mxu0 0.0
    %1624 = vmatmul.mubr.f32.gmra.mrb[0].mxu0 %v1529
    %v1625 = vpop.f32.mrb[0].mxu0
    %v1626 = vadd.f32 0.0, %v1625
    %v1627 = vpop.f32.mrb[0].mxu0
    %1628 = vmatprep.mubr.f32.mxu0 0.0
    %1629 = vmatmul.mubr.f32.gmra.mrb[0].mxu0 %v1530
    %v1630 = vpop.f32.mrb[0].mxu0
    %v1631 = vadd.f32 0.0, %v1630
    %v1632 = vpop.f32.mrb[0].mxu0
    %1633 = vmatprep.mubr.f32.mxu0 0.0
    %1634 = vmatmul.mubr.f32.gmra.mrb[0].mxu0 %v1531
    %v1635 = vpop.f32.mrb[0].mxu0
    %v1636 = vadd.f32 0.0, %v1635
    %v1637 = vpop.f32.mrb[0].mxu0
    %1638 = vmatprep.mubr.f32.mxu0 0.0
    %1639 = vmatmul.mubr.f32.gmra.mrb[0].mxu0 %v1532
    %v1640 = vpop.f32.mrb[0].mxu0
    %v1641 = vadd.f32 0.0, %v1640
    %v1642 = vpop.f32.mrb[0].mxu0
    %1643 = vmatprep.mubr.f32.mxu0 0.0
    %1644 = vmatmul.mubr.f32.gmra.mrb[0].mxu0 %v1533
    %v1645 = vpop.f32.mrb[0].mxu0
    %v1646 = vadd.f32 0.0, %v1645
    %v1647 = vpop.f32.mrb[0].mxu0
    %1648 = vmatprep.mubr.f32.mxu0 0.0
    %1649 = vmatmul.mubr.f32.gmra.mrb[0].mxu0 %v1534
    %v1650 = vpop.f32.mrb[0].mxu0
    %v1651 = vadd.f32 0.0, %v1650
    %v1652 = vpop.f32.mrb[0].mxu0
    %1653 = vmatprep.mubr.f32.mxu0 0.0
    %1654 = vmatmul.mubr.f32.gmra.mrb[0].mxu0 %v1535
    %v1655 = vpop.f32.mrb[0].mxu0
    %v1656 = vadd.f32 0.0, %v1655
    %v1657 = vpop.f32.mrb[0].mxu0
    %1658 = vmatprep.mubr.f32.mxu0 0.0
    %1659 = vmatmul.mubr.f32.gmra.mrb[0].mxu0 %v1536
    %v1660 = vpop.f32.mrb[0].mxu0
    %v1661 = vadd.f32 0.0, %v1660
    %v1662 = vpop.f32.mrb[0].mxu0
    %1663 = vmatprep.mubr.f32.mxu0 0.0
    %1664 = vmatmul.mubr.f32.gmra.mrb[0].mxu0 %v1537
    %v1665 = vpop.f32.mrb[0].mxu0
    %v1666 = vadd.f32 0.0, %v1665
    %v1667 = vpop.f32.mrb[0].mxu0
    %1668 = vmatprep.mubr.f32.mxu0 0.0
    %1669 = vmatmul.mubr.f32.gmra.mrb[0].mxu0 %v1538
    %v1670 = vpop.f32.mrb[0].mxu0
    %v1671 = vadd.f32 0.0, %v1670
    %v1672 = vpop.f32.mrb[0].mxu0
    %1673 = vmatprep.mubr.f32.mxu0 0.0
    %1674 = vmatmul.mubr.f32.gmra.mrb[0].mxu0 %v1539
    %v1675 = vpop.f32.mrb[0].mxu0
    %v1676 = vadd.f32 0.0, %v1675
    %v1677 = vpop.f32.mrb[0].mxu0
    %1678 = vmatprep.mubr.f32.mxu0 0.0
    %1679 = vmatmul.mubr.f32.gmra.mrb[0].mxu0 %v1540
    %v1680 = vpop.f32.mrb[0].mxu0
    %v1681 = vadd.f32 0.0, %v1680
    %v1682 = vpop.f32.mrb[0].mxu0
    %1683 = vmatprep.mubr.f32.mxu0 0.0
    %1684 = vmatmul.mubr.f32.gmra.mrb[0].mxu0 %v1541
    %v1685 = vpop.f32.mrb[0].mxu0
    %v1686 = vadd.f32 0.0, %v1685
    %v1687 = vpop.f32.mrb[0].mxu0
    %1688 = vdwg.mxu0
    %v1689 = vadd.f32 %v1466, %v1626
    %v1690 = vadd.f32 %v1471, %v1631
    %v1691 = vadd.f32 %v1476, %v1636
    %v1692 = vadd.f32 %v1481, %v1641
    %v1693 = vadd.f32 %v1486, %v1646
    %v1694 = vadd.f32 %v1491, %v1651
    %v1695 = vadd.f32 %v1496, %v1656
    %v1696 = vadd.f32 %v1501, %v1661
    %v1697 = vadd.f32 %v1506, %v1666
    %v1698 = vadd.f32 %v1511, %v1671
    %v1699 = vadd.f32 %v1516, %v1676
    %v1700 = vadd.f32 %v1521, %v1681
    %v1701 = vadd.f32 %v1526, %v1686
    %v1702 = vld [vmem:[#allocation3 + $0x8] sm:$0xff]
    %v1703 = vld [vmem:[#allocation3 + $0x10] sm:$0xff]
    %v1704 = vld [vmem:[#allocation3 + $0x18] sm:$0xff]
    %v1705 = vld [vmem:[#allocation3 + $0x20] sm:$0xff]
    %v1706 = vld [vmem:[#allocation3 + $0x28] sm:$0xff]
    %v1707 = vld [vmem:[#allocation3 + $0x30] sm:$0xff]
    %v1708 = vld [vmem:[#allocation3 + $0x38] sm:$0xff]
    %v1709 = vld [vmem:[#allocation3 + $0x40] sm:$0xff]
    %v1710 = vld [vmem:[#allocation3 + $0x48] sm:$0xff]
    %v1711 = vld [vmem:[#allocation3 + $0x50] sm:$0xff]
    %v1712 = vld [vmem:[#allocation3 + $0x58] sm:$0xff]
    %v1713 = vld [vmem:[#allocation3 + $0x60] sm:$0xff]
    %v1714 = vld [vmem:[#allocation3 + $0x68] sm:$0xff]
    %s1715 = scalar_lea.vmem %s3, 384
    %v1716 = vld [vmem:[%s1715] sm:$0xff]
    %v1717 = vld [vmem:[%s1715 + $0x8] sm:$0xff]
    %v1718 = vld [vmem:[%s1715 + $0x10] sm:$0xff]
    %v1719 = vld [vmem:[%s1715 + $0x18] sm:$0xff]
    %v1720 = vld [vmem:[%s1715 + $0x20] sm:$0xff]
    %v1721 = vld [vmem:[%s1715 + $0x28] sm:$0xff]
    %v1722 = vld [vmem:[%s1715 + $0x30] sm:$0xff]
    %v1723 = vld [vmem:[%s1715 + $0x38] sm:$0xff]
    %v1724 = vld [vmem:[%s1715 + $0x40] sm:$0xff]
    %v1725 = vld [vmem:[%s1715 + $0x48] sm:$0xff]
    %v1726 = vld [vmem:[%s1715 + $0x50] sm:$0xff]
    %v1727 = vld [vmem:[%s1715 + $0x58] sm:$0xff]
    %v1728 = vld [vmem:[%s1715 + $0x60] sm:$0xff]
    %v1729 = vld [vmem:[%s1715 + $0x68] sm:$0xff]
    %v1730 = vld [vmem:[%s1715 + $0x70] sm:$0xff]
    %v1731 = vld [vmem:[%s1715 + $0x78] sm:$0xff]
    %1732 = vmatprep.subr.mxu0 0.0
    %1733 = vmatpush1.msra.mxu0 %v1716
    %1734 = vmatprep.subr.mxu0 0.0
    %1735 = vmatpush1.msra.mxu0 %v1717
    %1736 = vmatprep.subr.mxu0 0.0
    %1737 = vmatpush1.msra.mxu0 %v1718
    %1738 = vmatprep.subr.mxu0 0.0
    %1739 = vmatpush1.msra.mxu0 %v1719
    %1740 = vmatprep.subr.mxu0 0.0
    %1741 = vmatpush1.msra.mxu0 %v1720
    %1742 = vmatprep.subr.mxu0 0.0
    %1743 = vmatpush1.msra.mxu0 %v1721
    %1744 = vmatprep.subr.mxu0 0.0
    %1745 = vmatpush1.msra.mxu0 %v1722
    %1746 = vmatprep.subr.mxu0 0.0
    %1747 = vmatpush1.msra.mxu0 %v1723
    %1748 = vmatprep.subr.mxu0 0.0
    %1749 = vmatpush1.msra.mxu0 %v1724
    %1750 = vmatprep.subr.mxu0 0.0
    %1751 = vmatpush1.msra.mxu0 %v1725
    %1752 = vmatprep.subr.mxu0 0.0
    %1753 = vmatpush1.msra.mxu0 %v1726
    %1754 = vmatprep.subr.mxu0 0.0
    %1755 = vmatpush1.msra.mxu0 %v1727
    %1756 = vmatprep.subr.mxu0 0.0
    %1757 = vmatpush1.msra.mxu0 %v1728
    %1758 = vmatprep.subr.mxu0 0.0
    %1759 = vmatpush1.msra.mxu0 %v1729
    %1760 = vmatprep.subr.mxu0 0.0
    %1761 = vmatpush1.msra.mxu0 %v1730
    %1762 = vmatprep.subr.mxu0 0.0
    %1763 = vmatpush1.msra.mxu0 %v1731
    %1764 = vmatprep.subr.mxu0 0.0
    %1765 = vmatpush1.msra.mxu0 0.0
    %1766 = vmatprep.subr.mxu0 0.0
    %1767 = vmatpush1.msra.mxu0 0.0
    %1768 = vmatprep.subr.mxu0 0.0
    %1769 = vmatpush1.msra.mxu0 0.0
    %1770 = vmatprep.subr.mxu0 0.0
    %1771 = vmatpush1.msra.mxu0 0.0
    %1772 = vmatprep.subr.mxu0 0.0
    %1773 = vmatpush1.msra.mxu0 0.0
    %1774 = vmatprep.subr.mxu0 0.0
    %1775 = vmatpush1.msra.mxu0 0.0
    %1776 = vmatprep.subr.mxu0 0.0
    %1777 = vmatpush1.msra.mxu0 0.0
    %1778 = vmatprep.subr.mxu0 0.0
    %1779 = vmatpush1.msra.mxu0 0.0
    %1780 = vmatprep.subr.mxu0 0.0
    %1781 = vmatpush1.msra.mxu0 0.0
    %1782 = vmatprep.subr.mxu0 0.0
    %1783 = vmatpush1.msra.mxu0 0.0
    %1784 = vmatprep.subr.mxu0 0.0
    %1785 = vmatpush1.msra.mxu0 0.0
    %1786 = vmatprep.subr.mxu0 0.0
    %1787 = vmatpush1.msra.mxu0 0.0
    %1788 = vmatprep.subr.mxu0 0.0
    %1789 = vmatpush1.msra.mxu0 0.0
    %1790 = vmatprep.subr.mxu0 0.0
    %1791 = vmatpush1.msra.mxu0 0.0
    %1792 = vmatprep.subr.mxu0 0.0
    %1793 = vmatpush1.msra.mxu0 0.0
    %1794 = vmatprep.subr.mxu0 0.0
    %1795 = vmatpush1.msra.mxu0 0.0
    %1796 = vmatprep.mubr.f32.mxu0 0.0
    %1797 = vmatmul.mubr.f32.gmra.mrb[0].mxu0 %v1702
    %v1798 = vpop.f32.mrb[0].mxu0
    %v1799 = vadd.f32 0.0, %v1798
    %v1800 = vpop.f32.mrb[0].mxu0
    %1801 = vmatprep.mubr.f32.mxu0 0.0
    %1802 = vmatmul.mubr.f32.gmra.mrb[0].mxu0 %v1703
    %v1803 = vpop.f32.mrb[0].mxu0
    %v1804 = vadd.f32 0.0, %v1803
    %v1805 = vpop.f32.mrb[0].mxu0
    %1806 = vmatprep.mubr.f32.mxu0 0.0
    %1807 = vmatmul.mubr.f32.gmra.mrb[0].mxu0 %v1704
    %v1808 = vpop.f32.mrb[0].mxu0
    %v1809 = vadd.f32 0.0, %v1808
    %v1810 = vpop.f32.mrb[0].mxu0
    %1811 = vmatprep.mubr.f32.mxu0 0.0
    %1812 = vmatmul.mubr.f32.gmra.mrb[0].mxu0 %v1705
    %v1813 = vpop.f32.mrb[0].mxu0
    %v1814 = vadd.f32 0.0, %v1813
    %v1815 = vpop.f32.mrb[0].mxu0
    %1816 = vmatprep.mubr.f32.mxu0 0.0
    %1817 = vmatmul.mubr.f32.gmra.mrb[0].mxu0 %v1706
    %v1818 = vpop.f32.mrb[0].mxu0
    %v1819 = vadd.f32 0.0, %v1818
    %v1820 = vpop.f32.mrb[0].mxu0
    %1821 = vmatprep.mubr.f32.mxu0 0.0
    %1822 = vmatmul.mubr.f32.gmra.mrb[0].mxu0 %v1707
    %v1823 = vpop.f32.mrb[0].mxu0
    %v1824 = vadd.f32 0.0, %v1823
    %v1825 = vpop.f32.mrb[0].mxu0
    %1826 = vmatprep.mubr.f32.mxu0 0.0
    %1827 = vmatmul.mubr.f32.gmra.mrb[0].mxu0 %v1708
    %v1828 = vpop.f32.mrb[0].mxu0
    %v1829 = vadd.f32 0.0, %v1828
    %v1830 = vpop.f32.mrb[0].mxu0
    %1831 = vmatprep.mubr.f32.mxu0 0.0
    %1832 = vmatmul.mubr.f32.gmra.mrb[0].mxu0 %v1709
    %v1833 = vpop.f32.mrb[0].mxu0
    %v1834 = vadd.f32 0.0, %v1833
    %v1835 = vpop.f32.mrb[0].mxu0
    %1836 = vmatprep.mubr.f32.mxu0 0.0
    %1837 = vmatmul.mubr.f32.gmra.mrb[0].mxu0 %v1710
    %v1838 = vpop.f32.mrb[0].mxu0
    %v1839 = vadd.f32 0.0, %v1838
    %v1840 = vpop.f32.mrb[0].mxu0
    %1841 = vmatprep.mubr.f32.mxu0 0.0
    %1842 = vmatmul.mubr.f32.gmra.mrb[0].mxu0 %v1711
    %v1843 = vpop.f32.mrb[0].mxu0
    %v1844 = vadd.f32 0.0, %v1843
    %v1845 = vpop.f32.mrb[0].mxu0
    %1846 = vmatprep.mubr.f32.mxu0 0.0
    %1847 = vmatmul.mubr.f32.gmra.mrb[0].mxu0 %v1712
    %v1848 = vpop.f32.mrb[0].mxu0
    %v1849 = vadd.f32 0.0, %v1848
    %v1850 = vpop.f32.mrb[0].mxu0
    %1851 = vmatprep.mubr.f32.mxu0 0.0
    %1852 = vmatmul.mubr.f32.gmra.mrb[0].mxu0 %v1713
    %v1853 = vpop.f32.mrb[0].mxu0
    %v1854 = vadd.f32 0.0, %v1853
    %v1855 = vpop.f32.mrb[0].mxu0
    %1856 = vmatprep.mubr.f32.mxu0 0.0
    %1857 = vmatmul.mubr.f32.gmra.mrb[0].mxu0 %v1714
    %v1858 = vpop.f32.mrb[0].mxu0
    %v1859 = vadd.f32 0.0, %v1858
    %v1860 = vpop.f32.mrb[0].mxu0
    %1861 = vdwg.mxu0
    %v1862 = vadd.f32 %v1689, %v1799
    %v1863 = vadd.f32 %v1690, %v1804
    %v1864 = vadd.f32 %v1691, %v1809
    %v1865 = vadd.f32 %v1692, %v1814
    %v1866 = vadd.f32 %v1693, %v1819
    %v1867 = vadd.f32 %v1694, %v1824
    %v1868 = vadd.f32 %v1695, %v1829
    %v1869 = vadd.f32 %v1696, %v1834
    %v1870 = vadd.f32 %v1697, %v1839
    %v1871 = vadd.f32 %v1698, %v1844
    %v1872 = vadd.f32 %v1699, %v1849
    %v1873 = vadd.f32 %v1700, %v1854
    %v1874 = vadd.f32 %v1701, %v1859
    %v1875 = vld [vmem:[#allocation3 + $0x9] sm:$0xff]
    %v1876 = vld [vmem:[#allocation3 + $0x11] sm:$0xff]
    %v1877 = vld [vmem:[#allocation3 + $0x19] sm:$0xff]
    %v1878 = vld [vmem:[#allocation3 + $0x21] sm:$0xff]
    %v1879 = vld [vmem:[#allocation3 + $0x29] sm:$0xff]
    %v1880 = vld [vmem:[#allocation3 + $0x31] sm:$0xff]
    %v1881 = vld [vmem:[#allocation3 + $0x39] sm:$0xff]
    %v1882 = vld [vmem:[#allocation3 + $0x41] sm:$0xff]
    %v1883 = vld [vmem:[#allocation3 + $0x49] sm:$0xff]
    %v1884 = vld [vmem:[#allocation3 + $0x51] sm:$0xff]
    %v1885 = vld [vmem:[#allocation3 + $0x59] sm:$0xff]
    %v1886 = vld [vmem:[#allocation3 + $0x61] sm:$0xff]
    %v1887 = vld [vmem:[#allocation3 + $0x69] sm:$0xff]
    %s1888 = scalar_lea.vmem %s3, 512
    %v1889 = vld [vmem:[%s1888] sm:$0xff]
    %v1890 = vld [vmem:[%s1888 + $0x8] sm:$0xff]
    %v1891 = vld [vmem:[%s1888 + $0x10] sm:$0xff]
    %v1892 = vld [vmem:[%s1888 + $0x18] sm:$0xff]
    %v1893 = vld [vmem:[%s1888 + $0x20] sm:$0xff]
    %v1894 = vld [vmem:[%s1888 + $0x28] sm:$0xff]
    %v1895 = vld [vmem:[%s1888 + $0x30] sm:$0xff]
    %v1896 = vld [vmem:[%s1888 + $0x38] sm:$0xff]
    %v1897 = vld [vmem:[%s1888 + $0x40] sm:$0xff]
    %v1898 = vld [vmem:[%s1888 + $0x48] sm:$0xff]
    %v1899 = vld [vmem:[%s1888 + $0x50] sm:$0xff]
    %v1900 = vld [vmem:[%s1888 + $0x58] sm:$0xff]
    %v1901 = vld [vmem:[%s1888 + $0x60] sm:$0xff]
    %v1902 = vld [vmem:[%s1888 + $0x68] sm:$0xff]
    %v1903 = vld [vmem:[%s1888 + $0x70] sm:$0xff]
    %v1904 = vld [vmem:[%s1888 + $0x78] sm:$0xff]
    %1905 = vmatprep.subr.mxu0 0.0
    %1906 = vmatpush1.msra.mxu0 %v1889
    %1907 = vmatprep.subr.mxu0 0.0
    %1908 = vmatpush1.msra.mxu0 %v1890
    %1909 = vmatprep.subr.mxu0 0.0
    %1910 = vmatpush1.msra.mxu0 %v1891
    %1911 = vmatprep.subr.mxu0 0.0
    %1912 = vmatpush1.msra.mxu0 %v1892
    %1913 = vmatprep.subr.mxu0 0.0
    %1914 = vmatpush1.msra.mxu0 %v1893
    %1915 = vmatprep.subr.mxu0 0.0
    %1916 = vmatpush1.msra.mxu0 %v1894
    %1917 = vmatprep.subr.mxu0 0.0
    %1918 = vmatpush1.msra.mxu0 %v1895
    %1919 = vmatprep.subr.mxu0 0.0
    %1920 = vmatpush1.msra.mxu0 %v1896
    %1921 = vmatprep.subr.mxu0 0.0
    %1922 = vmatpush1.msra.mxu0 %v1897
    %1923 = vmatprep.subr.mxu0 0.0
    %1924 = vmatpush1.msra.mxu0 %v1898
    %1925 = vmatprep.subr.mxu0 0.0
    %1926 = vmatpush1.msra.mxu0 %v1899
    %1927 = vmatprep.subr.mxu0 0.0
    %1928 = vmatpush1.msra.mxu0 %v1900
    %1929 = vmatprep.subr.mxu0 0.0
    %1930 = vmatpush1.msra.mxu0 %v1901
    %1931 = vmatprep.subr.mxu0 0.0
    %1932 = vmatpush1.msra.mxu0 %v1902
    %1933 = vmatprep.subr.mxu0 0.0
    %1934 = vmatpush1.msra.mxu0 %v1903
    %1935 = vmatprep.subr.mxu0 0.0
    %1936 = vmatpush1.msra.mxu0 %v1904
    %1937 = vmatprep.subr.mxu0 0.0
    %1938 = vmatpush1.msra.mxu0 0.0
    %1939 = vmatprep.subr.mxu0 0.0
    %1940 = vmatpush1.msra.mxu0 0.0
    %1941 = vmatprep.subr.mxu0 0.0
    %1942 = vmatpush1.msra.mxu0 0.0
    %1943 = vmatprep.subr.mxu0 0.0
    %1944 = vmatpush1.msra.mxu0 0.0
    %1945 = vmatprep.subr.mxu0 0.0
    %1946 = vmatpush1.msra.mxu0 0.0
    %1947 = vmatprep.subr.mxu0 0.0
    %1948 = vmatpush1.msra.mxu0 0.0
    %1949 = vmatprep.subr.mxu0 0.0
    %1950 = vmatpush1.msra.mxu0 0.0
    %1951 = vmatprep.subr.mxu0 0.0
    %1952 = vmatpush1.msra.mxu0 0.0
    %1953 = vmatprep.subr.mxu0 0.0
    %1954 = vmatpush1.msra.mxu0 0.0
    %1955 = vmatprep.subr.mxu0 0.0
    %1956 = vmatpush1.msra.mxu0 0.0
    %1957 = vmatprep.subr.mxu0 0.0
    %1958 = vmatpush1.msra.mxu0 0.0
    %1959 = vmatprep.subr.mxu0 0.0
    %1960 = vmatpush1.msra.mxu0 0.0
    %1961 = vmatprep.subr.mxu0 0.0
    %1962 = vmatpush1.msra.mxu0 0.0
    %1963 = vmatprep.subr.mxu0 0.0
    %1964 = vmatpush1.msra.mxu0 0.0
    %1965 = vmatprep.subr.mxu0 0.0
    %1966 = vmatpush1.msra.mxu0 0.0
    %1967 = vmatprep.subr.mxu0 0.0
    %1968 = vmatpush1.msra.mxu0 0.0
    %1969 = vmatprep.mubr.f32.mxu0 0.0
    %1970 = vmatmul.mubr.f32.gmra.mrb[0].mxu0 %v1875
    %v1971 = vpop.f32.mrb[0].mxu0
    %v1972 = vadd.f32 0.0, %v1971
    %v1973 = vpop.f32.mrb[0].mxu0
    %1974 = vmatprep.mubr.f32.mxu0 0.0
    %1975 = vmatmul.mubr.f32.gmra.mrb[0].mxu0 %v1876
    %v1976 = vpop.f32.mrb[0].mxu0
    %v1977 = vadd.f32 0.0, %v1976
    %v1978 = vpop.f32.mrb[0].mxu0
    %1979 = vmatprep.mubr.f32.mxu0 0.0
    %1980 = vmatmul.mubr.f32.gmra.mrb[0].mxu0 %v1877
    %v1981 = vpop.f32.mrb[0].mxu0
    %v1982 = vadd.f32 0.0, %v1981
    %v1983 = vpop.f32.mrb[0].mxu0
    %1984 = vmatprep.mubr.f32.mxu0 0.0
    %1985 = vmatmul.mubr.f32.gmra.mrb[0].mxu0 %v1878
    %v1986 = vpop.f32.mrb[0].mxu0
    %v1987 = vadd.f32 0.0, %v1986
    %v1988 = vpop.f32.mrb[0].mxu0
    %1989 = vmatprep.mubr.f32.mxu0 0.0
    %1990 = vmatmul.mubr.f32.gmra.mrb[0].mxu0 %v1879
    %v1991 = vpop.f32.mrb[0].mxu0
    %v1992 = vadd.f32 0.0, %v1991
    %v1993 = vpop.f32.mrb[0].mxu0
    %1994 = vmatprep.mubr.f32.mxu0 0.0
    %1995 = vmatmul.mubr.f32.gmra.mrb[0].mxu0 %v1880
    %v1996 = vpop.f32.mrb[0].mxu0
    %v1997 = vadd.f32 0.0, %v1996
    %v1998 = vpop.f32.mrb[0].mxu0
    %1999 = vmatprep.mubr.f32.mxu0 0.0
    %2000 = vmatmul.mubr.f32.gmra.mrb[0].mxu0 %v1881
    %v2001 = vpop.f32.mrb[0].mxu0
    %v2002 = vadd.f32 0.0, %v2001
    %v2003 = vpop.f32.mrb[0].mxu0
    %2004 = vmatprep.mubr.f32.mxu0 0.0
    %2005 = vmatmul.mubr.f32.gmra.mrb[0].mxu0 %v1882
    %v2006 = vpop.f32.mrb[0].mxu0
    %v2007 = vadd.f32 0.0, %v2006
    %v2008 = vpop.f32.mrb[0].mxu0
    %2009 = vmatprep.mubr.f32.mxu0 0.0
    %2010 = vmatmul.mubr.f32.gmra.mrb[0].mxu0 %v1883
    %v2011 = vpop.f32.mrb[0].mxu0
    %v2012 = vadd.f32 0.0, %v2011
    %v2013 = vpop.f32.mrb[0].mxu0
    %2014 = vmatprep.mubr.f32.mxu0 0.0
    %2015 = vmatmul.mubr.f32.gmra.mrb[0].mxu0 %v1884
    %v2016 = vpop.f32.mrb[0].mxu0
    %v2017 = vadd.f32 0.0, %v2016
    %v2018 = vpop.f32.mrb[0].mxu0
    %2019 = vmatprep.mubr.f32.mxu0 0.0
    %2020 = vmatmul.mubr.f32.gmra.mrb[0].mxu0 %v1885
    %v2021 = vpop.f32.mrb[0].mxu0
    %v2022 = vadd.f32 0.0, %v2021
    %v2023 = vpop.f32.mrb[0].mxu0
    %2024 = vmatprep.mubr.f32.mxu0 0.0
    %2025 = vmatmul.mubr.f32.gmra.mrb[0].mxu0 %v1886
    %v2026 = vpop.f32.mrb[0].mxu0
    %v2027 = vadd.f32 0.0, %v2026
    %v2028 = vpop.f32.mrb[0].mxu0
    %2029 = vmatprep.mubr.f32.mxu0 0.0
    %2030 = vmatmul.mubr.f32.gmra.mrb[0].mxu0 %v1887
    %v2031 = vpop.f32.mrb[0].mxu0
    %v2032 = vadd.f32 0.0, %v2031
    %v2033 = vpop.f32.mrb[0].mxu0
    %2034 = vdwg.mxu0
    %v2035 = vadd.f32 %v1862, %v1972
    %v2036 = vadd.f32 %v1863, %v1977
    %v2037 = vadd.f32 %v1864, %v1982
    %v2038 = vadd.f32 %v1865, %v1987
    %v2039 = vadd.f32 %v1866, %v1992
    %v2040 = vadd.f32 %v1867, %v1997
    %v2041 = vadd.f32 %v1868, %v2002
    %v2042 = vadd.f32 %v1869, %v2007
    %v2043 = vadd.f32 %v1870, %v2012
    %v2044 = vadd.f32 %v1871, %v2017
    %v2045 = vadd.f32 %v1872, %v2022
    %v2046 = vadd.f32 %v1873, %v2027
    %v2047 = vadd.f32 %v1874, %v2032
    %v2048 = vld [vmem:[#allocation3 + $0xa] sm:$0xff]
    %v2049 = vld [vmem:[#allocation3 + $0x12] sm:$0xff]
    %v2050 = vld [vmem:[#allocation3 + $0x1a] sm:$0xff]
    %v2051 = vld [vmem:[#allocation3 + $0x22] sm:$0xff]
    %v2052 = vld [vmem:[#allocation3 + $0x2a] sm:$0xff]
    %v2053 = vld [vmem:[#allocation3 + $0x32] sm:$0xff]
    %v2054 = vld [vmem:[#allocation3 + $0x3a] sm:$0xff]
    %v2055 = vld [vmem:[#allocation3 + $0x42] sm:$0xff]
    %v2056 = vld [vmem:[#allocation3 + $0x4a] sm:$0xff]
    %v2057 = vld [vmem:[#allocation3 + $0x52] sm:$0xff]
    %v2058 = vld [vmem:[#allocation3 + $0x5a] sm:$0xff]
    %v2059 = vld [vmem:[#allocation3 + $0x62] sm:$0xff]
    %v2060 = vld [vmem:[#allocation3 + $0x6a] sm:$0xff]
    %s2061 = scalar_lea.vmem %s3, 640
    %v2062 = vld [vmem:[%s2061] sm:$0xff]
    %v2063 = vld [vmem:[%s2061 + $0x8] sm:$0xff]
    %v2064 = vld [vmem:[%s2061 + $0x10] sm:$0xff]
    %v2065 = vld [vmem:[%s2061 + $0x18] sm:$0xff]
    %v2066 = vld [vmem:[%s2061 + $0x20] sm:$0xff]
    %v2067 = vld [vmem:[%s2061 + $0x28] sm:$0xff]
    %v2068 = vld [vmem:[%s2061 + $0x30] sm:$0xff]
    %v2069 = vld [vmem:[%s2061 + $0x38] sm:$0xff]
    %v2070 = vld [vmem:[%s2061 + $0x40] sm:$0xff]
    %v2071 = vld [vmem:[%s2061 + $0x48] sm:$0xff]
    %v2072 = vld [vmem:[%s2061 + $0x50] sm:$0xff]
    %v2073 = vld [vmem:[%s2061 + $0x58] sm:$0xff]
    %v2074 = vld [vmem:[%s2061 + $0x60] sm:$0xff]
    %v2075 = vld [vmem:[%s2061 + $0x68] sm:$0xff]
    %v2076 = vld [vmem:[%s2061 + $0x70] sm:$0xff]
    %v2077 = vld [vmem:[%s2061 + $0x78] sm:$0xff]
    %2078 = vmatprep.subr.mxu0 0.0
    %2079 = vmatpush1.msra.mxu0 %v2062
    %2080 = vmatprep.subr.mxu0 0.0
    %2081 = vmatpush1.msra.mxu0 %v2063
    %2082 = vmatprep.subr.mxu0 0.0
    %2083 = vmatpush1.msra.mxu0 %v2064
    %2084 = vmatprep.subr.mxu0 0.0
    %2085 = vmatpush1.msra.mxu0 %v2065
    %2086 = vmatprep.subr.mxu0 0.0
    %2087 = vmatpush1.msra.mxu0 %v2066
    %2088 = vmatprep.subr.mxu0 0.0
    %2089 = vmatpush1.msra.mxu0 %v2067
    %2090 = vmatprep.subr.mxu0 0.0
    %2091 = vmatpush1.msra.mxu0 %v2068
    %2092 = vmatprep.subr.mxu0 0.0
    %2093 = vmatpush1.msra.mxu0 %v2069
    %2094 = vmatprep.subr.mxu0 0.0
    %2095 = vmatpush1.msra.mxu0 %v2070
    %2096 = vmatprep.subr.mxu0 0.0
    %2097 = vmatpush1.msra.mxu0 %v2071
    %2098 = vmatprep.subr.mxu0 0.0
    %2099 = vmatpush1.msra.mxu0 %v2072
    %2100 = vmatprep.subr.mxu0 0.0
    %2101 = vmatpush1.msra.mxu0 %v2073
    %2102 = vmatprep.subr.mxu0 0.0
    %2103 = vmatpush1.msra.mxu0 %v2074
    %2104 = vmatprep.subr.mxu0 0.0
    %2105 = vmatpush1.msra.mxu0 %v2075
    %2106 = vmatprep.subr.mxu0 0.0
    %2107 = vmatpush1.msra.mxu0 %v2076
    %2108 = vmatprep.subr.mxu0 0.0
    %2109 = vmatpush1.msra.mxu0 %v2077
    %2110 = vmatprep.subr.mxu0 0.0
    %2111 = vmatpush1.msra.mxu0 0.0
    %2112 = vmatprep.subr.mxu0 0.0
    %2113 = vmatpush1.msra.mxu0 0.0
    %2114 = vmatprep.subr.mxu0 0.0
    %2115 = vmatpush1.msra.mxu0 0.0
    %2116 = vmatprep.subr.mxu0 0.0
    %2117 = vmatpush1.msra.mxu0 0.0
    %2118 = vmatprep.subr.mxu0 0.0
    %2119 = vmatpush1.msra.mxu0 0.0
    %2120 = vmatprep.subr.mxu0 0.0
    %2121 = vmatpush1.msra.mxu0 0.0
    %2122 = vmatprep.subr.mxu0 0.0
    %2123 = vmatpush1.msra.mxu0 0.0
    %2124 = vmatprep.subr.mxu0 0.0
    %2125 = vmatpush1.msra.mxu0 0.0
    %2126 = vmatprep.subr.mxu0 0.0
    %2127 = vmatpush1.msra.mxu0 0.0
    %2128 = vmatprep.subr.mxu0 0.0
    %2129 = vmatpush1.msra.mxu0 0.0
    %2130 = vmatprep.subr.mxu0 0.0
    %2131 = vmatpush1.msra.mxu0 0.0
    %2132 = vmatprep.subr.mxu0 0.0
    %2133 = vmatpush1.msra.mxu0 0.0
    %2134 = vmatprep.subr.mxu0 0.0
    %2135 = vmatpush1.msra.mxu0 0.0
    %2136 = vmatprep.subr.mxu0 0.0
    %2137 = vmatpush1.msra.mxu0 0.0
    %2138 = vmatprep.subr.mxu0 0.0
    %2139 = vmatpush1.msra.mxu0 0.0
    %2140 = vmatprep.subr.mxu0 0.0
    %2141 = vmatpush1.msra.mxu0 0.0
    %2142 = vmatprep.mubr.f32.mxu0 0.0
    %2143 = vmatmul.mubr.f32.gmra.mrb[0].mxu0 %v2048
    %v2144 = vpop.f32.mrb[0].mxu0
    %v2145 = vadd.f32 0.0, %v2144
    %v2146 = vpop.f32.mrb[0].mxu0
    %2147 = vmatprep.mubr.f32.mxu0 0.0
    %2148 = vmatmul.mubr.f32.gmra.mrb[0].mxu0 %v2049
    %v2149 = vpop.f32.mrb[0].mxu0
    %v2150 = vadd.f32 0.0, %v2149
    %v2151 = vpop.f32.mrb[0].mxu0
    %2152 = vmatprep.mubr.f32.mxu0 0.0
    %2153 = vmatmul.mubr.f32.gmra.mrb[0].mxu0 %v2050
    %v2154 = vpop.f32.mrb[0].mxu0
    %v2155 = vadd.f32 0.0, %v2154
    %v2156 = vpop.f32.mrb[0].mxu0
    %2157 = vmatprep.mubr.f32.mxu0 0.0
    %2158 = vmatmul.mubr.f32.gmra.mrb[0].mxu0 %v2051
    %v2159 = vpop.f32.mrb[0].mxu0
    %v2160 = vadd.f32 0.0, %v2159
    %v2161 = vpop.f32.mrb[0].mxu0
    %2162 = vmatprep.mubr.f32.mxu0 0.0
    %2163 = vmatmul.mubr.f32.gmra.mrb[0].mxu0 %v2052
    %v2164 = vpop.f32.mrb[0].mxu0
    %v2165 = vadd.f32 0.0, %v2164
    %v2166 = vpop.f32.mrb[0].mxu0
    %2167 = vmatprep.mubr.f32.mxu0 0.0
    %2168 = vmatmul.mubr.f32.gmra.mrb[0].mxu0 %v2053
    %v2169 = vpop.f32.mrb[0].mxu0
    %v2170 = vadd.f32 0.0, %v2169
    %v2171 = vpop.f32.mrb[0].mxu0
    %2172 = vmatprep.mubr.f32.mxu0 0.0
    %2173 = vmatmul.mubr.f32.gmra.mrb[0].mxu0 %v2054
    %v2174 = vpop.f32.mrb[0].mxu0
    %v2175 = vadd.f32 0.0, %v2174
    %v2176 = vpop.f32.mrb[0].mxu0
    %2177 = vmatprep.mubr.f32.mxu0 0.0
    %2178 = vmatmul.mubr.f32.gmra.mrb[0].mxu0 %v2055
    %v2179 = vpop.f32.mrb[0].mxu0
    %v2180 = vadd.f32 0.0, %v2179
    %v2181 = vpop.f32.mrb[0].mxu0
    %2182 = vmatprep.mubr.f32.mxu0 0.0
    %2183 = vmatmul.mubr.f32.gmra.mrb[0].mxu0 %v2056
    %v2184 = vpop.f32.mrb[0].mxu0
    %v2185 = vadd.f32 0.0, %v2184
    %v2186 = vpop.f32.mrb[0].mxu0
    %2187 = vmatprep.mubr.f32.mxu0 0.0
    %2188 = vmatmul.mubr.f32.gmra.mrb[0].mxu0 %v2057
    %v2189 = vpop.f32.mrb[0].mxu0
    %v2190 = vadd.f32 0.0, %v2189
    %v2191 = vpop.f32.mrb[0].mxu0
    %2192 = vmatprep.mubr.f32.mxu0 0.0
    %2193 = vmatmul.mubr.f32.gmra.mrb[0].mxu0 %v2058
    %v2194 = vpop.f32.mrb[0].mxu0
    %v2195 = vadd.f32 0.0, %v2194
    %v2196 = vpop.f32.mrb[0].mxu0
    %2197 = vmatprep.mubr.f32.mxu0 0.0
    %2198 = vmatmul.mubr.f32.gmra.mrb[0].mxu0 %v2059
    %v2199 = vpop.f32.mrb[0].mxu0
    %v2200 = vadd.f32 0.0, %v2199
    %v2201 = vpop.f32.mrb[0].mxu0
    %2202 = vmatprep.mubr.f32.mxu0 0.0
    %2203 = vmatmul.mubr.f32.gmra.mrb[0].mxu0 %v2060
    %v2204 = vpop.f32.mrb[0].mxu0
    %v2205 = vadd.f32 0.0, %v2204
    %v2206 = vpop.f32.mrb[0].mxu0
    %2207 = vdwg.mxu0
    %v2208 = vadd.f32 %v2035, %v2145
    %v2209 = vadd.f32 %v2036, %v2150
    %v2210 = vadd.f32 %v2037, %v2155
    %v2211 = vadd.f32 %v2038, %v2160
    %v2212 = vadd.f32 %v2039, %v2165
    %v2213 = vadd.f32 %v2040, %v2170
    %v2214 = vadd.f32 %v2041, %v2175
    %v2215 = vadd.f32 %v2042, %v2180
    %v2216 = vadd.f32 %v2043, %v2185
    %v2217 = vadd.f32 %v2044, %v2190
    %v2218 = vadd.f32 %v2045, %v2195
    %v2219 = vadd.f32 %v2046, %v2200
    %v2220 = vadd.f32 %v2047, %v2205
    %v2221 = vld [vmem:[#allocation3 + $0x10] sm:$0xff]
    %v2222 = vld [vmem:[#allocation3 + $0x18] sm:$0xff]
    %v2223 = vld [vmem:[#allocation3 + $0x20] sm:$0xff]
    %v2224 = vld [vmem:[#allocation3 + $0x28] sm:$0xff]
    %v2225 = vld [vmem:[#allocation3 + $0x30] sm:$0xff]
    %v2226 = vld [vmem:[#allocation3 + $0x38] sm:$0xff]
    %v2227 = vld [vmem:[#allocation3 + $0x40] sm:$0xff]
    %v2228 = vld [vmem:[#allocation3 + $0x48] sm:$0xff]
    %v2229 = vld [vmem:[#allocation3 + $0x50] sm:$0xff]
    %v2230 = vld [vmem:[#allocation3 + $0x58] sm:$0xff]
    %v2231 = vld [vmem:[#allocation3 + $0x60] sm:$0xff]
    %v2232 = vld [vmem:[#allocation3 + $0x68] sm:$0xff]
    %v2233 = vld [vmem:[#allocation3 + $0x70] sm:$0xff]
    %s2234 = scalar_lea.vmem %s3, 768
    %v2235 = vld [vmem:[%s2234] sm:$0xff]
    %v2236 = vld [vmem:[%s2234 + $0x8] sm:$0xff]
    %v2237 = vld [vmem:[%s2234 + $0x10] sm:$0xff]
    %v2238 = vld [vmem:[%s2234 + $0x18] sm:$0xff]
    %v2239 = vld [vmem:[%s2234 + $0x20] sm:$0xff]
    %v2240 = vld [vmem:[%s2234 + $0x28] sm:$0xff]
    %v2241 = vld [vmem:[%s2234 + $0x30] sm:$0xff]
    %v2242 = vld [vmem:[%s2234 + $0x38] sm:$0xff]
    %v2243 = vld [vmem:[%s2234 + $0x40] sm:$0xff]
    %v2244 = vld [vmem:[%s2234 + $0x48] sm:$0xff]
    %v2245 = vld [vmem:[%s2234 + $0x50] sm:$0xff]
    %v2246 = vld [vmem:[%s2234 + $0x58] sm:$0xff]
    %v2247 = vld [vmem:[%s2234 + $0x60] sm:$0xff]
    %v2248 = vld [vmem:[%s2234 + $0x68] sm:$0xff]
    %v2249 = vld [vmem:[%s2234 + $0x70] sm:$0xff]
    %v2250 = vld [vmem:[%s2234 + $0x78] sm:$0xff]
    %2251 = vmatprep.subr.mxu0 0.0
    %2252 = vmatpush1.msra.mxu0 %v2235
    %2253 = vmatprep.subr.mxu0 0.0
    %2254 = vmatpush1.msra.mxu0 %v2236
    %2255 = vmatprep.subr.mxu0 0.0
    %2256 = vmatpush1.msra.mxu0 %v2237
    %2257 = vmatprep.subr.mxu0 0.0
    %2258 = vmatpush1.msra.mxu0 %v2238
    %2259 = vmatprep.subr.mxu0 0.0
    %2260 = vmatpush1.msra.mxu0 %v2239
    %2261 = vmatprep.subr.mxu0 0.0
    %2262 = vmatpush1.msra.mxu0 %v2240
    %2263 = vmatprep.subr.mxu0 0.0
    %2264 = vmatpush1.msra.mxu0 %v2241
    %2265 = vmatprep.subr.mxu0 0.0
    %2266 = vmatpush1.msra.mxu0 %v2242
    %2267 = vmatprep.subr.mxu0 0.0
    %2268 = vmatpush1.msra.mxu0 %v2243
    %2269 = vmatprep.subr.mxu0 0.0
    %2270 = vmatpush1.msra.mxu0 %v2244
    %2271 = vmatprep.subr.mxu0 0.0
    %2272 = vmatpush1.msra.mxu0 %v2245
    %2273 = vmatprep.subr.mxu0 0.0
    %2274 = vmatpush1.msra.mxu0 %v2246
    %2275 = vmatprep.subr.mxu0 0.0
    %2276 = vmatpush1.msra.mxu0 %v2247
    %2277 = vmatprep.subr.mxu0 0.0
    %2278 = vmatpush1.msra.mxu0 %v2248
    %2279 = vmatprep.subr.mxu0 0.0
    %2280 = vmatpush1.msra.mxu0 %v2249
    %2281 = vmatprep.subr.mxu0 0.0
    %2282 = vmatpush1.msra.mxu0 %v2250
    %2283 = vmatprep.subr.mxu0 0.0
    %2284 = vmatpush1.msra.mxu0 0.0
    %2285 = vmatprep.subr.mxu0 0.0
    %2286 = vmatpush1.msra.mxu0 0.0
    %2287 = vmatprep.subr.mxu0 0.0
    %2288 = vmatpush1.msra.mxu0 0.0
    %2289 = vmatprep.subr.mxu0 0.0
    %2290 = vmatpush1.msra.mxu0 0.0
    %2291 = vmatprep.subr.mxu0 0.0
    %2292 = vmatpush1.msra.mxu0 0.0
    %2293 = vmatprep.subr.mxu0 0.0
    %2294 = vmatpush1.msra.mxu0 0.0
    %2295 = vmatprep.subr.mxu0 0.0
    %2296 = vmatpush1.msra.mxu0 0.0
    %2297 = vmatprep.subr.mxu0 0.0
    %2298 = vmatpush1.msra.mxu0 0.0
    %2299 = vmatprep.subr.mxu0 0.0
    %2300 = vmatpush1.msra.mxu0 0.0
    %2301 = vmatprep.subr.mxu0 0.0
    %2302 = vmatpush1.msra.mxu0 0.0
    %2303 = vmatprep.subr.mxu0 0.0
    %2304 = vmatpush1.msra.mxu0 0.0
    %2305 = vmatprep.subr.mxu0 0.0
    %2306 = vmatpush1.msra.mxu0 0.0
    %2307 = vmatprep.subr.mxu0 0.0
    %2308 = vmatpush1.msra.mxu0 0.0
    %2309 = vmatprep.subr.mxu0 0.0
    %2310 = vmatpush1.msra.mxu0 0.0
    %2311 = vmatprep.subr.mxu0 0.0
    %2312 = vmatpush1.msra.mxu0 0.0
    %2313 = vmatprep.subr.mxu0 0.0
    %2314 = vmatpush1.msra.mxu0 0.0
    %2315 = vmatprep.mubr.f32.mxu0 0.0
    %2316 = vmatmul.mubr.f32.gmra.mrb[0].mxu0 %v2221
    %v2317 = vpop.f32.mrb[0].mxu0
    %v2318 = vadd.f32 0.0, %v2317
    %v2319 = vpop.f32.mrb[0].mxu0
    %2320 = vmatprep.mubr.f32.mxu0 0.0
    %2321 = vmatmul.mubr.f32.gmra.mrb[0].mxu0 %v2222
    %v2322 = vpop.f32.mrb[0].mxu0
    %v2323 = vadd.f32 0.0, %v2322
    %v2324 = vpop.f32.mrb[0].mxu0
    %2325 = vmatprep.mubr.f32.mxu0 0.0
    %2326 = vmatmul.mubr.f32.gmra.mrb[0].mxu0 %v2223
    %v2327 = vpop.f32.mrb[0].mxu0
    %v2328 = vadd.f32 0.0, %v2327
    %v2329 = vpop.f32.mrb[0].mxu0
    %2330 = vmatprep.mubr.f32.mxu0 0.0
    %2331 = vmatmul.mubr.f32.gmra.mrb[0].mxu0 %v2224
    %v2332 = vpop.f32.mrb[0].mxu0
    %v2333 = vadd.f32 0.0, %v2332
    %v2334 = vpop.f32.mrb[0].mxu0
    %2335 = vmatprep.mubr.f32.mxu0 0.0
    %2336 = vmatmul.mubr.f32.gmra.mrb[0].mxu0 %v2225
    %v2337 = vpop.f32.mrb[0].mxu0
    %v2338 = vadd.f32 0.0, %v2337
    %v2339 = vpop.f32.mrb[0].mxu0
    %2340 = vmatprep.mubr.f32.mxu0 0.0
    %2341 = vmatmul.mubr.f32.gmra.mrb[0].mxu0 %v2226
    %v2342 = vpop.f32.mrb[0].mxu0
    %v2343 = vadd.f32 0.0, %v2342
    %v2344 = vpop.f32.mrb[0].mxu0
    %2345 = vmatprep.mubr.f32.mxu0 0.0
    %2346 = vmatmul.mubr.f32.gmra.mrb[0].mxu0 %v2227
    %v2347 = vpop.f32.mrb[0].mxu0
    %v2348 = vadd.f32 0.0, %v2347
    %v2349 = vpop.f32.mrb[0].mxu0
    %2350 = vmatprep.mubr.f32.mxu0 0.0
    %2351 = vmatmul.mubr.f32.gmra.mrb[0].mxu0 %v2228
    %v2352 = vpop.f32.mrb[0].mxu0
    %v2353 = vadd.f32 0.0, %v2352
    %v2354 = vpop.f32.mrb[0].mxu0
    %2355 = vmatprep.mubr.f32.mxu0 0.0
    %2356 = vmatmul.mubr.f32.gmra.mrb[0].mxu0 %v2229
    %v2357 = vpop.f32.mrb[0].mxu0
    %v2358 = vadd.f32 0.0, %v2357
    %v2359 = vpop.f32.mrb[0].mxu0
    %2360 = vmatprep.mubr.f32.mxu0 0.0
    %2361 = vmatmul.mubr.f32.gmra.mrb[0].mxu0 %v2230
    %v2362 = vpop.f32.mrb[0].mxu0
    %v2363 = vadd.f32 0.0, %v2362
    %v2364 = vpop.f32.mrb[0].mxu0
    %2365 = vmatprep.mubr.f32.mxu0 0.0
    %2366 = vmatmul.mubr.f32.gmra.mrb[0].mxu0 %v2231
    %v2367 = vpop.f32.mrb[0].mxu0
    %v2368 = vadd.f32 0.0, %v2367
    %v2369 = vpop.f32.mrb[0].mxu0
    %2370 = vmatprep.mubr.f32.mxu0 0.0
    %2371 = vmatmul.mubr.f32.gmra.mrb[0].mxu0 %v2232
    %v2372 = vpop.f32.mrb[0].mxu0
    %v2373 = vadd.f32 0.0, %v2372
    %v2374 = vpop.f32.mrb[0].mxu0
    %2375 = vmatprep.mubr.f32.mxu0 0.0
    %2376 = vmatmul.mubr.f32.gmra.mrb[0].mxu0 %v2233
    %v2377 = vpop.f32.mrb[0].mxu0
    %v2378 = vadd.f32 0.0, %v2377
    %v2379 = vpop.f32.mrb[0].mxu0
    %2380 = vdwg.mxu0
    %v2381 = vadd.f32 %v2208, %v2318
    %v2382 = vadd.f32 %v2209, %v2323
    %v2383 = vadd.f32 %v2210, %v2328
    %v2384 = vadd.f32 %v2211, %v2333
    %v2385 = vadd.f32 %v2212, %v2338
    %v2386 = vadd.f32 %v2213, %v2343
    %v2387 = vadd.f32 %v2214, %v2348
    %v2388 = vadd.f32 %v2215, %v2353
    %v2389 = vadd.f32 %v2216, %v2358
    %v2390 = vadd.f32 %v2217, %v2363
    %v2391 = vadd.f32 %v2218, %v2368
    %v2392 = vadd.f32 %v2219, %v2373
    %v2393 = vadd.f32 %v2220, %v2378
    %v2394 = vld [vmem:[#allocation3 + $0x11] sm:$0xff]
    %v2395 = vld [vmem:[#allocation3 + $0x19] sm:$0xff]
    %v2396 = vld [vmem:[#allocation3 + $0x21] sm:$0xff]
    %v2397 = vld [vmem:[#allocation3 + $0x29] sm:$0xff]
    %v2398 = vld [vmem:[#allocation3 + $0x31] sm:$0xff]
    %v2399 = vld [vmem:[#allocation3 + $0x39] sm:$0xff]
    %v2400 = vld [vmem:[#allocation3 + $0x41] sm:$0xff]
    %v2401 = vld [vmem:[#allocation3 + $0x49] sm:$0xff]
    %v2402 = vld [vmem:[#allocation3 + $0x51] sm:$0xff]
    %v2403 = vld [vmem:[#allocation3 + $0x59] sm:$0xff]
    %v2404 = vld [vmem:[#allocation3 + $0x61] sm:$0xff]
    %v2405 = vld [vmem:[#allocation3 + $0x69] sm:$0xff]
    %v2406 = vld [vmem:[#allocation3 + $0x71] sm:$0xff]
    %s2407 = scalar_lea.vmem %s3, 896
    %v2408 = vld [vmem:[%s2407] sm:$0xff]
    %v2409 = vld [vmem:[%s2407 + $0x8] sm:$0xff]
    %v2410 = vld [vmem:[%s2407 + $0x10] sm:$0xff]
    %v2411 = vld [vmem:[%s2407 + $0x18] sm:$0xff]
    %v2412 = vld [vmem:[%s2407 + $0x20] sm:$0xff]
    %v2413 = vld [vmem:[%s2407 + $0x28] sm:$0xff]
    %v2414 = vld [vmem:[%s2407 + $0x30] sm:$0xff]
    %v2415 = vld [vmem:[%s2407 + $0x38] sm:$0xff]
    %v2416 = vld [vmem:[%s2407 + $0x40] sm:$0xff]
    %v2417 = vld [vmem:[%s2407 + $0x48] sm:$0xff]
    %v2418 = vld [vmem:[%s2407 + $0x50] sm:$0xff]
    %v2419 = vld [vmem:[%s2407 + $0x58] sm:$0xff]
    %v2420 = vld [vmem:[%s2407 + $0x60] sm:$0xff]
    %v2421 = vld [vmem:[%s2407 + $0x68] sm:$0xff]
    %v2422 = vld [vmem:[%s2407 + $0x70] sm:$0xff]
    %v2423 = vld [vmem:[%s2407 + $0x78] sm:$0xff]
    %2424 = vmatprep.subr.mxu0 0.0
    %2425 = vmatpush1.msra.mxu0 %v2408
    %2426 = vmatprep.subr.mxu0 0.0
    %2427 = vmatpush1.msra.mxu0 %v2409
    %2428 = vmatprep.subr.mxu0 0.0
    %2429 = vmatpush1.msra.mxu0 %v2410
    %2430 = vmatprep.subr.mxu0 0.0
    %2431 = vmatpush1.msra.mxu0 %v2411
    %2432 = vmatprep.subr.mxu0 0.0
    %2433 = vmatpush1.msra.mxu0 %v2412
    %2434 = vmatprep.subr.mxu0 0.0
    %2435 = vmatpush1.msra.mxu0 %v2413
    %2436 = vmatprep.subr.mxu0 0.0
    %2437 = vmatpush1.msra.mxu0 %v2414
    %2438 = vmatprep.subr.mxu0 0.0
    %2439 = vmatpush1.msra.mxu0 %v2415
    %2440 = vmatprep.subr.mxu0 0.0
    %2441 = vmatpush1.msra.mxu0 %v2416
    %2442 = vmatprep.subr.mxu0 0.0
    %2443 = vmatpush1.msra.mxu0 %v2417
    %2444 = vmatprep.subr.mxu0 0.0
    %2445 = vmatpush1.msra.mxu0 %v2418
    %2446 = vmatprep.subr.mxu0 0.0
    %2447 = vmatpush1.msra.mxu0 %v2419
    %2448 = vmatprep.subr.mxu0 0.0
    %2449 = vmatpush1.msra.mxu0 %v2420
    %2450 = vmatprep.subr.mxu0 0.0
    %2451 = vmatpush1.msra.mxu0 %v2421
    %2452 = vmatprep.subr.mxu0 0.0
    %2453 = vmatpush1.msra.mxu0 %v2422
    %2454 = vmatprep.subr.mxu0 0.0
    %2455 = vmatpush1.msra.mxu0 %v2423
    %2456 = vmatprep.subr.mxu0 0.0
    %2457 = vmatpush1.msra.mxu0 0.0
    %2458 = vmatprep.subr.mxu0 0.0
    %2459 = vmatpush1.msra.mxu0 0.0
    %2460 = vmatprep.subr.mxu0 0.0
    %2461 = vmatpush1.msra.mxu0 0.0
    %2462 = vmatprep.subr.mxu0 0.0
    %2463 = vmatpush1.msra.mxu0 0.0
    %2464 = vmatprep.subr.mxu0 0.0
    %2465 = vmatpush1.msra.mxu0 0.0
    %2466 = vmatprep.subr.mxu0 0.0
    %2467 = vmatpush1.msra.mxu0 0.0
    %2468 = vmatprep.subr.mxu0 0.0
    %2469 = vmatpush1.msra.mxu0 0.0
    %2470 = vmatprep.subr.mxu0 0.0
    %2471 = vmatpush1.msra.mxu0 0.0
    %2472 = vmatprep.subr.mxu0 0.0
    %2473 = vmatpush1.msra.mxu0 0.0
    %2474 = vmatprep.subr.mxu0 0.0
    %2475 = vmatpush1.msra.mxu0 0.0
    %2476 = vmatprep.subr.mxu0 0.0
    %2477 = vmatpush1.msra.mxu0 0.0
    %2478 = vmatprep.subr.mxu0 0.0
    %2479 = vmatpush1.msra.mxu0 0.0
    %2480 = vmatprep.subr.mxu0 0.0
    %2481 = vmatpush1.msra.mxu0 0.0
    %2482 = vmatprep.subr.mxu0 0.0
    %2483 = vmatpush1.msra.mxu0 0.0
    %2484 = vmatprep.subr.mxu0 0.0
    %2485 = vmatpush1.msra.mxu0 0.0
    %2486 = vmatprep.subr.mxu0 0.0
    %2487 = vmatpush1.msra.mxu0 0.0
    %2488 = vmatprep.mubr.f32.mxu0 0.0
    %2489 = vmatmul.mubr.f32.gmra.mrb[0].mxu0 %v2394
    %v2490 = vpop.f32.mrb[0].mxu0
    %v2491 = vadd.f32 0.0, %v2490
    %v2492 = vpop.f32.mrb[0].mxu0
    %2493 = vmatprep.mubr.f32.mxu0 0.0
    %2494 = vmatmul.mubr.f32.gmra.mrb[0].mxu0 %v2395
    %v2495 = vpop.f32.mrb[0].mxu0
    %v2496 = vadd.f32 0.0, %v2495
    %v2497 = vpop.f32.mrb[0].mxu0
    %2498 = vmatprep.mubr.f32.mxu0 0.0
    %2499 = vmatmul.mubr.f32.gmra.mrb[0].mxu0 %v2396
    %v2500 = vpop.f32.mrb[0].mxu0
    %v2501 = vadd.f32 0.0, %v2500
    %v2502 = vpop.f32.mrb[0].mxu0
    %2503 = vmatprep.mubr.f32.mxu0 0.0
    %2504 = vmatmul.mubr.f32.gmra.mrb[0].mxu0 %v2397
    %v2505 = vpop.f32.mrb[0].mxu0
    %v2506 = vadd.f32 0.0, %v2505
    %v2507 = vpop.f32.mrb[0].mxu0
    %2508 = vmatprep.mubr.f32.mxu0 0.0
    %2509 = vmatmul.mubr.f32.gmra.mrb[0].mxu0 %v2398
    %v2510 = vpop.f32.mrb[0].mxu0
    %v2511 = vadd.f32 0.0, %v2510
    %v2512 = vpop.f32.mrb[0].mxu0
    %2513 = vmatprep.mubr.f32.mxu0 0.0
    %2514 = vmatmul.mubr.f32.gmra.mrb[0].mxu0 %v2399
    %v2515 = vpop.f32.mrb[0].mxu0
    %v2516 = vadd.f32 0.0, %v2515
    %v2517 = vpop.f32.mrb[0].mxu0
    %2518 = vmatprep.mubr.f32.mxu0 0.0
    %2519 = vmatmul.mubr.f32.gmra.mrb[0].mxu0 %v2400
    %v2520 = vpop.f32.mrb[0].mxu0
    %v2521 = vadd.f32 0.0, %v2520
    %v2522 = vpop.f32.mrb[0].mxu0
    %2523 = vmatprep.mubr.f32.mxu0 0.0
    %2524 = vmatmul.mubr.f32.gmra.mrb[0].mxu0 %v2401
    %v2525 = vpop.f32.mrb[0].mxu0
    %v2526 = vadd.f32 0.0, %v2525
    %v2527 = vpop.f32.mrb[0].mxu0
    %2528 = vmatprep.mubr.f32.mxu0 0.0
    %2529 = vmatmul.mubr.f32.gmra.mrb[0].mxu0 %v2402
    %v2530 = vpop.f32.mrb[0].mxu0
    %v2531 = vadd.f32 0.0, %v2530
    %v2532 = vpop.f32.mrb[0].mxu0
    %2533 = vmatprep.mubr.f32.mxu0 0.0
    %2534 = vmatmul.mubr.f32.gmra.mrb[0].mxu0 %v2403
    %v2535 = vpop.f32.mrb[0].mxu0
    %v2536 = vadd.f32 0.0, %v2535
    %v2537 = vpop.f32.mrb[0].mxu0
    %2538 = vmatprep.mubr.f32.mxu0 0.0
    %2539 = vmatmul.mubr.f32.gmra.mrb[0].mxu0 %v2404
    %v2540 = vpop.f32.mrb[0].mxu0
    %v2541 = vadd.f32 0.0, %v2540
    %v2542 = vpop.f32.mrb[0].mxu0
    %2543 = vmatprep.mubr.f32.mxu0 0.0
    %2544 = vmatmul.mubr.f32.gmra.mrb[0].mxu0 %v2405
    %v2545 = vpop.f32.mrb[0].mxu0
    %v2546 = vadd.f32 0.0, %v2545
    %v2547 = vpop.f32.mrb[0].mxu0
    %2548 = vmatprep.mubr.f32.mxu0 0.0
    %2549 = vmatmul.mubr.f32.gmra.mrb[0].mxu0 %v2406
    %v2550 = vpop.f32.mrb[0].mxu0
    %v2551 = vadd.f32 0.0, %v2550
    %v2552 = vpop.f32.mrb[0].mxu0
    %2553 = vdwg.mxu0
    %v2554 = vadd.f32 %v2381, %v2491
    %v2555 = vadd.f32 %v2382, %v2496
    %v2556 = vadd.f32 %v2383, %v2501
    %v2557 = vadd.f32 %v2384, %v2506
    %v2558 = vadd.f32 %v2385, %v2511
    %v2559 = vadd.f32 %v2386, %v2516
    %v2560 = vadd.f32 %v2387, %v2521
    %v2561 = vadd.f32 %v2388, %v2526
    %v2562 = vadd.f32 %v2389, %v2531
    %v2563 = vadd.f32 %v2390, %v2536
    %v2564 = vadd.f32 %v2391, %v2541
    %v2565 = vadd.f32 %v2392, %v2546
    %v2566 = vadd.f32 %v2393, %v2551
    %v2567 = vld [vmem:[#allocation3 + $0x12] sm:$0xff]
    %v2568 = vld [vmem:[#allocation3 + $0x1a] sm:$0xff]
    %v2569 = vld [vmem:[#allocation3 + $0x22] sm:$0xff]
    %v2570 = vld [vmem:[#allocation3 + $0x2a] sm:$0xff]
    %v2571 = vld [vmem:[#allocation3 + $0x32] sm:$0xff]
    %v2572 = vld [vmem:[#allocation3 + $0x3a] sm:$0xff]
    %v2573 = vld [vmem:[#allocation3 + $0x42] sm:$0xff]
    %v2574 = vld [vmem:[#allocation3 + $0x4a] sm:$0xff]
    %v2575 = vld [vmem:[#allocation3 + $0x52] sm:$0xff]
    %v2576 = vld [vmem:[#allocation3 + $0x5a] sm:$0xff]
    %v2577 = vld [vmem:[#allocation3 + $0x62] sm:$0xff]
    %v2578 = vld [vmem:[#allocation3 + $0x6a] sm:$0xff]
    %v2579 = vld [vmem:[#allocation3 + $0x72] sm:$0xff]
    %s2580 = scalar_lea.vmem %s3, 1024
    %v2581 = vld [vmem:[%s2580] sm:$0xff]
    %v2582 = vld [vmem:[%s2580 + $0x8] sm:$0xff]
    %v2583 = vld [vmem:[%s2580 + $0x10] sm:$0xff]
    %v2584 = vld [vmem:[%s2580 + $0x18] sm:$0xff]
    %v2585 = vld [vmem:[%s2580 + $0x20] sm:$0xff]
    %v2586 = vld [vmem:[%s2580 + $0x28] sm:$0xff]
    %v2587 = vld [vmem:[%s2580 + $0x30] sm:$0xff]
    %v2588 = vld [vmem:[%s2580 + $0x38] sm:$0xff]
    %v2589 = vld [vmem:[%s2580 + $0x40] sm:$0xff]
    %v2590 = vld [vmem:[%s2580 + $0x48] sm:$0xff]
    %v2591 = vld [vmem:[%s2580 + $0x50] sm:$0xff]
    %v2592 = vld [vmem:[%s2580 + $0x58] sm:$0xff]
    %v2593 = vld [vmem:[%s2580 + $0x60] sm:$0xff]
    %v2594 = vld [vmem:[%s2580 + $0x68] sm:$0xff]
    %v2595 = vld [vmem:[%s2580 + $0x70] sm:$0xff]
    %v2596 = vld [vmem:[%s2580 + $0x78] sm:$0xff]
    %2597 = vmatprep.subr.mxu0 0.0
    %2598 = vmatpush1.msra.mxu0 %v2581
    %2599 = vmatprep.subr.mxu0 0.0
    %2600 = vmatpush1.msra.mxu0 %v2582
    %2601 = vmatprep.subr.mxu0 0.0
    %2602 = vmatpush1.msra.mxu0 %v2583
    %2603 = vmatprep.subr.mxu0 0.0
    %2604 = vmatpush1.msra.mxu0 %v2584
    %2605 = vmatprep.subr.mxu0 0.0
    %2606 = vmatpush1.msra.mxu0 %v2585
    %2607 = vmatprep.subr.mxu0 0.0
    %2608 = vmatpush1.msra.mxu0 %v2586
    %2609 = vmatprep.subr.mxu0 0.0
    %2610 = vmatpush1.msra.mxu0 %v2587
    %2611 = vmatprep.subr.mxu0 0.0
    %2612 = vmatpush1.msra.mxu0 %v2588
    %2613 = vmatprep.subr.mxu0 0.0
    %2614 = vmatpush1.msra.mxu0 %v2589
    %2615 = vmatprep.subr.mxu0 0.0
    %2616 = vmatpush1.msra.mxu0 %v2590
    %2617 = vmatprep.subr.mxu0 0.0
    %2618 = vmatpush1.msra.mxu0 %v2591
    %2619 = vmatprep.subr.mxu0 0.0
    %2620 = vmatpush1.msra.mxu0 %v2592
    %2621 = vmatprep.subr.mxu0 0.0
    %2622 = vmatpush1.msra.mxu0 %v2593
    %2623 = vmatprep.subr.mxu0 0.0
    %2624 = vmatpush1.msra.mxu0 %v2594
    %2625 = vmatprep.subr.mxu0 0.0
    %2626 = vmatpush1.msra.mxu0 %v2595
    %2627 = vmatprep.subr.mxu0 0.0
    %2628 = vmatpush1.msra.mxu0 %v2596
    %2629 = vmatprep.subr.mxu0 0.0
    %2630 = vmatpush1.msra.mxu0 0.0
    %2631 = vmatprep.subr.mxu0 0.0
    %2632 = vmatpush1.msra.mxu0 0.0
    %2633 = vmatprep.subr.mxu0 0.0
    %2634 = vmatpush1.msra.mxu0 0.0
    %2635 = vmatprep.subr.mxu0 0.0
    %2636 = vmatpush1.msra.mxu0 0.0
    %2637 = vmatprep.subr.mxu0 0.0
    %2638 = vmatpush1.msra.mxu0 0.0
    %2639 = vmatprep.subr.mxu0 0.0
    %2640 = vmatpush1.msra.mxu0 0.0
    %2641 = vmatprep.subr.mxu0 0.0
    %2642 = vmatpush1.msra.mxu0 0.0
    %2643 = vmatprep.subr.mxu0 0.0
    %2644 = vmatpush1.msra.mxu0 0.0
    %2645 = vmatprep.subr.mxu0 0.0
    %2646 = vmatpush1.msra.mxu0 0.0
    %2647 = vmatprep.subr.mxu0 0.0
    %2648 = vmatpush1.msra.mxu0 0.0
    %2649 = vmatprep.subr.mxu0 0.0
    %2650 = vmatpush1.msra.mxu0 0.0
    %2651 = vmatprep.subr.mxu0 0.0
    %2652 = vmatpush1.msra.mxu0 0.0
    %2653 = vmatprep.subr.mxu0 0.0
    %2654 = vmatpush1.msra.mxu0 0.0
    %2655 = vmatprep.subr.mxu0 0.0
    %2656 = vmatpush1.msra.mxu0 0.0
    %2657 = vmatprep.subr.mxu0 0.0
    %2658 = vmatpush1.msra.mxu0 0.0
    %2659 = vmatprep.subr.mxu0 0.0
    %2660 = vmatpush1.msra.mxu0 0.0
    %2661 = vmatprep.mubr.f32.mxu0 0.0
    %2662 = vmatmul.mubr.f32.gmra.mrb[0].mxu0 %v2567
    %v2663 = vpop.f32.mrb[0].mxu0
    %v2664 = vadd.f32 0.0, %v2663
    %v2665 = vpop.f32.mrb[0].mxu0
    %2666 = vmatprep.mubr.f32.mxu0 0.0
    %2667 = vmatmul.mubr.f32.gmra.mrb[0].mxu0 %v2568
    %v2668 = vpop.f32.mrb[0].mxu0
    %v2669 = vadd.f32 0.0, %v2668
    %v2670 = vpop.f32.mrb[0].mxu0
    %2671 = vmatprep.mubr.f32.mxu0 0.0
    %2672 = vmatmul.mubr.f32.gmra.mrb[0].mxu0 %v2569
    %v2673 = vpop.f32.mrb[0].mxu0
    %v2674 = vadd.f32 0.0, %v2673
    %v2675 = vpop.f32.mrb[0].mxu0
    %2676 = vmatprep.mubr.f32.mxu0 0.0
    %2677 = vmatmul.mubr.f32.gmra.mrb[0].mxu0 %v2570
    %v2678 = vpop.f32.mrb[0].mxu0
    %v2679 = vadd.f32 0.0, %v2678
    %v2680 = vpop.f32.mrb[0].mxu0
    %2681 = vmatprep.mubr.f32.mxu0 0.0
    %2682 = vmatmul.mubr.f32.gmra.mrb[0].mxu0 %v2571
    %v2683 = vpop.f32.mrb[0].mxu0
    %v2684 = vadd.f32 0.0, %v2683
    %v2685 = vpop.f32.mrb[0].mxu0
    %2686 = vmatprep.mubr.f32.mxu0 0.0
    %2687 = vmatmul.mubr.f32.gmra.mrb[0].mxu0 %v2572
    %v2688 = vpop.f32.mrb[0].mxu0
    %v2689 = vadd.f32 0.0, %v2688
    %v2690 = vpop.f32.mrb[0].mxu0
    %2691 = vmatprep.mubr.f32.mxu0 0.0
    %2692 = vmatmul.mubr.f32.gmra.mrb[0].mxu0 %v2573
    %v2693 = vpop.f32.mrb[0].mxu0
    %v2694 = vadd.f32 0.0, %v2693
    %v2695 = vpop.f32.mrb[0].mxu0
    %2696 = vmatprep.mubr.f32.mxu0 0.0
    %2697 = vmatmul.mubr.f32.gmra.mrb[0].mxu0 %v2574
    %v2698 = vpop.f32.mrb[0].mxu0
    %v2699 = vadd.f32 0.0, %v2698
    %v2700 = vpop.f32.mrb[0].mxu0
    %2701 = vmatprep.mubr.f32.mxu0 0.0
    %2702 = vmatmul.mubr.f32.gmra.mrb[0].mxu0 %v2575
    %v2703 = vpop.f32.mrb[0].mxu0
    %v2704 = vadd.f32 0.0, %v2703
    %v2705 = vpop.f32.mrb[0].mxu0
    %2706 = vmatprep.mubr.f32.mxu0 0.0
    %2707 = vmatmul.mubr.f32.gmra.mrb[0].mxu0 %v2576
    %v2708 = vpop.f32.mrb[0].mxu0
    %v2709 = vadd.f32 0.0, %v2708
    %v2710 = vpop.f32.mrb[0].mxu0
    %2711 = vmatprep.mubr.f32.mxu0 0.0
    %2712 = vmatmul.mubr.f32.gmra.mrb[0].mxu0 %v2577
    %v2713 = vpop.f32.mrb[0].mxu0
    %v2714 = vadd.f32 0.0, %v2713
    %v2715 = vpop.f32.mrb[0].mxu0
    %2716 = vmatprep.mubr.f32.mxu0 0.0
    %2717 = vmatmul.mubr.f32.gmra.mrb[0].mxu0 %v2578
    %v2718 = vpop.f32.mrb[0].mxu0
    %v2719 = vadd.f32 0.0, %v2718
    %v2720 = vpop.f32.mrb[0].mxu0
    %2721 = vmatprep.mubr.f32.mxu0 0.0
    %2722 = vmatmul.mubr.f32.gmra.mrb[0].mxu0 %v2579
    %v2723 = vpop.f32.mrb[0].mxu0
    %v2724 = vadd.f32 0.0, %v2723
    %v2725 = vpop.f32.mrb[0].mxu0
    %2726 = vdwg.mxu0
    %v2727 = vadd.f32 %v2554, %v2664
    %v2728 = vadd.f32 %v2555, %v2669
    %v2729 = vadd.f32 %v2556, %v2674
    %v2730 = vadd.f32 %v2557, %v2679
    %v2731 = vadd.f32 %v2558, %v2684
    %v2732 = vadd.f32 %v2559, %v2689
    %v2733 = vadd.f32 %v2560, %v2694
    %v2734 = vadd.f32 %v2561, %v2699
    %v2735 = vadd.f32 %v2562, %v2704
    %v2736 = vadd.f32 %v2563, %v2709
    %v2737 = vadd.f32 %v2564, %v2714
    %v2738 = vadd.f32 %v2565, %v2719
    %v2739 = vadd.f32 %v2566, %v2724
    %v2741 = vlaneseq
    %v2742 = vshrl.u32 %v2741, 7
    %v2743 = vsub.s32 0, %v2742
    %v2744 = vrot.slane %v1209, %v2743
    %v2746 = vadd.f32 %v2727, %v2744
    %v2747 = vadd.f32 %v2728, %v2744
    %v2748 = vadd.f32 %v2729, %v2744
    %v2749 = vadd.f32 %v2730, %v2744
    %v2750 = vadd.f32 %v2731, %v2744
    %v2751 = vadd.f32 %v2732, %v2744
    %v2752 = vadd.f32 %v2733, %v2744
    %v2753 = vadd.f32 %v2734, %v2744
    %v2754 = vadd.f32 %v2735, %v2744
    %v2755 = vadd.f32 %v2736, %v2744
    %v2756 = vadd.f32 %v2737, %v2744
    %v2757 = vadd.f32 %v2738, %v2744
    %v2758 = vadd.f32 %v2739, %v2744
    %v2759 = vmax.f32 %v2746, 0.0
    %v2760 = vmax.f32 %v2747, 0.0
    %v2761 = vmax.f32 %v2748, 0.0
    %v2762 = vmax.f32 %v2749, 0.0
    %v2763 = vmax.f32 %v2750, 0.0
    %v2764 = vmax.f32 %v2751, 0.0
    %v2765 = vmax.f32 %v2752, 0.0
    %v2766 = vmax.f32 %v2753, 0.0
    %v2767 = vmax.f32 %v2754, 0.0
    %v2768 = vmax.f32 %v2755, 0.0
    %v2769 = vmax.f32 %v2756, 0.0
    %v2770 = vmax.f32 %v2757, 0.0
    %v2771 = vmax.f32 %v2758, 0.0
    %2772 = vst [vmem:[#allocation4] sm:$0xff] %v2759
    %2773 = vst [vmem:[#allocation4 + $0x8] sm:$0xff] %v2760
    %2774 = vst [vmem:[#allocation4 + $0x10] sm:$0xff] %v2761
    %2775 = vst [vmem:[#allocation4 + $0x18] sm:$0xff] %v2762
    %2776 = vst [vmem:[#allocation4 + $0x20] sm:$0xff] %v2763
    %2777 = vst [vmem:[#allocation4 + $0x28] sm:$0xff] %v2764
    %2778 = vst [vmem:[#allocation4 + $0x30] sm:$0xff] %v2765
    %2779 = vst [vmem:[#allocation4 + $0x38] sm:$0xff] %v2766
    %2780 = vst [vmem:[#allocation4 + $0x40] sm:$0xff] %v2767
    %2781 = vst [vmem:[#allocation4 + $0x48] sm:$0xff] %v2768
    %2782 = vst [vmem:[#allocation4 + $0x50] sm:$0xff] %v2769
    %2783 = vst [vmem:[#allocation4 + $0x58] sm:$0xff] %v2770
    %2784 = vst [vmem:[#allocation4 + $0x60] sm:$0xff] %v2771
    %v2785 = vld [vmem:[#allocation4] ss:$64 sm:$0x1]
    %v2786 = vld [vmem:[#allocation4] ss:$64 sm:$0x2]
    %v2787 = vor.u32 %v2785, %v2786
    %s2788 = scalar_lea.vmem [#allocation4], 1
    %v2789 = vld [vmem:[%s2788] ss:$64 sm:$0x1]
    %v2790 = vld [vmem:[%s2788] ss:$64 sm:$0x2]
    %v2791 = vor.u32 %v2789, %v2790
    %s2792 = scalar_lea.vmem [#allocation4], 8
    %v2793 = vld [vmem:[%s2792] ss:$64 sm:$0x1]
    %v2794 = vld [vmem:[%s2792] ss:$64 sm:$0x2]
    %v2795 = vor.u32 %v2793, %v2794
    %s2796 = scalar_lea.vmem [#allocation4], 9
    %v2797 = vld [vmem:[%s2796] ss:$64 sm:$0x1]
    %v2798 = vld [vmem:[%s2796] ss:$64 sm:$0x2]
    %v2799 = vor.u32 %v2797, %v2798
    %v2800 = vmax.f32 %v2787, %v2791
    %v2801 = vmax.f32 %v2795, %v2799
    %v2802 = vmax.f32 %v2800, %v2801
    %v2803 = vld [vmem:[%s5] sm:$0xff]
    %v2804 = vld [vmem:[%s5 + $0x8] sm:$0xff]
    %v2805 = vld [vmem:[%s5 + $0x10] sm:$0xff]
    %v2806 = vld [vmem:[%s5 + $0x18] sm:$0xff]
    %v2807 = vld [vmem:[%s5 + $0x20] sm:$0xff]
    %v2808 = vld [vmem:[%s5 + $0x28] sm:$0xff]
    %v2809 = vld [vmem:[%s5 + $0x30] sm:$0xff]
    %v2810 = vld [vmem:[%s5 + $0x38] sm:$0xff]
    %v2811 = vld [vmem:[%s5 + $0x40] sm:$0xff]
    %v2812 = vld [vmem:[%s5 + $0x48] sm:$0xff]
    %v2813 = vld [vmem:[%s5 + $0x50] sm:$0xff]
    %v2814 = vld [vmem:[%s5 + $0x58] sm:$0xff]
    %v2815 = vld [vmem:[%s5 + $0x60] sm:$0xff]
    %v2816 = vld [vmem:[%s5 + $0x68] sm:$0xff]
    %v2817 = vld [vmem:[%s5 + $0x70] sm:$0xff]
    %v2818 = vld [vmem:[%s5 + $0x78] sm:$0xff]
    %s2819 = scalar_lea.vmem [#allocation4], 2
    %v2820 = vld [vmem:[%s2819] ss:$64 sm:$0x1]
    %v2821 = vld [vmem:[%s2819] ss:$64 sm:$0x2]
    %v2822 = vor.u32 %v2820, %v2821
    %s2823 = scalar_lea.vmem [#allocation4], 3
    %v2824 = vld [vmem:[%s2823] ss:$64 sm:$0x1]
    %v2825 = vld [vmem:[%s2823] ss:$64 sm:$0x2]
    %v2826 = vor.u32 %v2824, %v2825
    %s2827 = scalar_lea.vmem [#allocation4], 10
    %v2828 = vld [vmem:[%s2827] ss:$64 sm:$0x1]
    %v2829 = vld [vmem:[%s2827] ss:$64 sm:$0x2]
    %v2830 = vor.u32 %v2828, %v2829
    %s2831 = scalar_lea.vmem [#allocation4], 11
    %v2832 = vld [vmem:[%s2831] ss:$64 sm:$0x1]
    %v2833 = vld [vmem:[%s2831] ss:$64 sm:$0x2]
    %v2834 = vor.u32 %v2832, %v2833
    %v2835 = vmax.f32 %v2822, %v2826
    %v2836 = vmax.f32 %v2830, %v2834
    %v2837 = vmax.f32 %v2835, %v2836
    %s2838 = scalar_lea.vmem %s5, 128
    %v2839 = vld [vmem:[%s2838] sm:$0xff]
    %v2840 = vld [vmem:[%s2838 + $0x8] sm:$0xff]
    %v2841 = vld [vmem:[%s2838 + $0x10] sm:$0xff]
    %v2842 = vld [vmem:[%s2838 + $0x18] sm:$0xff]
    %v2843 = vld [vmem:[%s2838 + $0x20] sm:$0xff]
    %v2844 = vld [vmem:[%s2838 + $0x28] sm:$0xff]
    %v2845 = vld [vmem:[%s2838 + $0x30] sm:$0xff]
    %v2846 = vld [vmem:[%s2838 + $0x38] sm:$0xff]
    %v2847 = vld [vmem:[%s2838 + $0x40] sm:$0xff]
    %v2848 = vld [vmem:[%s2838 + $0x48] sm:$0xff]
    %v2849 = vld [vmem:[%s2838 + $0x50] sm:$0xff]
    %v2850 = vld [vmem:[%s2838 + $0x58] sm:$0xff]
    %v2851 = vld [vmem:[%s2838 + $0x60] sm:$0xff]
    %v2852 = vld [vmem:[%s2838 + $0x68] sm:$0xff]
    %v2853 = vld [vmem:[%s2838 + $0x70] sm:$0xff]
    %v2854 = vld [vmem:[%s2838 + $0x78] sm:$0xff]
    %2855 = vmatprep.subr.mxu0 0.0
    %2856 = vmatpush1.msra.mxu0 %v2839
    %2857 = vmatprep.subr.mxu0 0.0
    %2858 = vmatpush1.msra.mxu0 %v2840
    %2859 = vmatprep.subr.mxu0 0.0
    %2860 = vmatpush1.msra.mxu0 %v2841
    %2861 = vmatprep.subr.mxu0 0.0
    %2862 = vmatpush1.msra.mxu0 %v2842
    %2863 = vmatprep.subr.mxu0 0.0
    %2864 = vmatpush1.msra.mxu0 %v2843
    %2865 = vmatprep.subr.mxu0 0.0
    %2866 = vmatpush1.msra.mxu0 %v2844
    %2867 = vmatprep.subr.mxu0 0.0
    %2868 = vmatpush1.msra.mxu0 %v2845
    %2869 = vmatprep.subr.mxu0 0.0
    %2870 = vmatpush1.msra.mxu0 %v2846
    %2871 = vmatprep.subr.mxu0 0.0
    %2872 = vmatpush1.msra.mxu0 %v2847
    %2873 = vmatprep.subr.mxu0 0.0
    %2874 = vmatpush1.msra.mxu0 %v2848
    %2875 = vmatprep.subr.mxu0 0.0
    %2876 = vmatpush1.msra.mxu0 %v2849
    %2877 = vmatprep.subr.mxu0 0.0
    %2878 = vmatpush1.msra.mxu0 %v2850
    %2879 = vmatprep.subr.mxu0 0.0
    %2880 = vmatpush1.msra.mxu0 %v2851
    %2881 = vmatprep.subr.mxu0 0.0
    %2882 = vmatpush1.msra.mxu0 %v2852
    %2883 = vmatprep.subr.mxu0 0.0
    %2884 = vmatpush1.msra.mxu0 %v2853
    %2885 = vmatprep.subr.mxu0 0.0
    %2886 = vmatpush1.msra.mxu0 %v2854
    %2887 = vmatprep.subr.mxu0 0.0
    %2888 = vmatpush1.msra.mxu0 0.0
    %2889 = vmatprep.subr.mxu0 0.0
    %2890 = vmatpush1.msra.mxu0 0.0
    %2891 = vmatprep.subr.mxu0 0.0
    %2892 = vmatpush1.msra.mxu0 0.0
    %2893 = vmatprep.subr.mxu0 0.0
    %2894 = vmatpush1.msra.mxu0 0.0
    %2895 = vmatprep.subr.mxu0 0.0
    %2896 = vmatpush1.msra.mxu0 0.0
    %2897 = vmatprep.subr.mxu0 0.0
    %2898 = vmatpush1.msra.mxu0 0.0
    %2899 = vmatprep.subr.mxu0 0.0
    %2900 = vmatpush1.msra.mxu0 0.0
    %2901 = vmatprep.subr.mxu0 0.0
    %2902 = vmatpush1.msra.mxu0 0.0
    %2903 = vmatprep.subr.mxu0 0.0
    %2904 = vmatpush1.msra.mxu0 0.0
    %2905 = vmatprep.subr.mxu0 0.0
    %2906 = vmatpush1.msra.mxu0 0.0
    %2907 = vmatprep.subr.mxu0 0.0
    %2908 = vmatpush1.msra.mxu0 0.0
    %2909 = vmatprep.subr.mxu0 0.0
    %2910 = vmatpush1.msra.mxu0 0.0
    %2911 = vmatprep.subr.mxu0 0.0
    %2912 = vmatpush1.msra.mxu0 0.0
    %2913 = vmatprep.subr.mxu0 0.0
    %2914 = vmatpush1.msra.mxu0 0.0
    %2915 = vmatprep.subr.mxu0 0.0
    %2916 = vmatpush1.msra.mxu0 0.0
    %2917 = vmatprep.subr.mxu0 0.0
    %2918 = vmatpush1.msra.mxu0 0.0
    %2919 = vmatprep.mubr.f32.mxu0 0.0
    %2920 = vmatmul.mubr.f32.gmra.mrb[0].mxu0 %v2837
    %v2921 = vpop.f32.mrb[0].mxu0
    %v2922 = vadd.f32 0.0, %v2921
    %v2923 = vpop.f32.mrb[0].mxu0
    %2924 = vdwg.mxu0
    %2925 = vmatprep.subr.mxu0 0.0
    %2926 = vmatpush1.msra.mxu0 %v2803
    %2927 = vmatprep.subr.mxu0 0.0
    %2928 = vmatpush1.msra.mxu0 %v2804
    %2929 = vmatprep.subr.mxu0 0.0
    %2930 = vmatpush1.msra.mxu0 %v2805
    %2931 = vmatprep.subr.mxu0 0.0
    %2932 = vmatpush1.msra.mxu0 %v2806
    %2933 = vmatprep.subr.mxu0 0.0
    %2934 = vmatpush1.msra.mxu0 %v2807
    %2935 = vmatprep.subr.mxu0 0.0
    %2936 = vmatpush1.msra.mxu0 %v2808
    %2937 = vmatprep.subr.mxu0 0.0
    %2938 = vmatpush1.msra.mxu0 %v2809
    %2939 = vmatprep.subr.mxu0 0.0
    %2940 = vmatpush1.msra.mxu0 %v2810
    %2941 = vmatprep.subr.mxu0 0.0
    %2942 = vmatpush1.msra.mxu0 %v2811
    %2943 = vmatprep.subr.mxu0 0.0
    %2944 = vmatpush1.msra.mxu0 %v2812
    %2945 = vmatprep.subr.mxu0 0.0
    %2946 = vmatpush1.msra.mxu0 %v2813
    %2947 = vmatprep.subr.mxu0 0.0
    %2948 = vmatpush1.msra.mxu0 %v2814
    %2949 = vmatprep.subr.mxu0 0.0
    %2950 = vmatpush1.msra.mxu0 %v2815
    %2951 = vmatprep.subr.mxu0 0.0
    %2952 = vmatpush1.msra.mxu0 %v2816
    %2953 = vmatprep.subr.mxu0 0.0
    %2954 = vmatpush1.msra.mxu0 %v2817
    %2955 = vmatprep.subr.mxu0 0.0
    %2956 = vmatpush1.msra.mxu0 %v2818
    %2957 = vmatprep.subr.mxu0 0.0
    %2958 = vmatpush1.msra.mxu0 0.0
    %2959 = vmatprep.subr.mxu0 0.0
    %2960 = vmatpush1.msra.mxu0 0.0
    %2961 = vmatprep.subr.mxu0 0.0
    %2962 = vmatpush1.msra.mxu0 0.0
    %2963 = vmatprep.subr.mxu0 0.0
    %2964 = vmatpush1.msra.mxu0 0.0
    %2965 = vmatprep.subr.mxu0 0.0
    %2966 = vmatpush1.msra.mxu0 0.0
    %2967 = vmatprep.subr.mxu0 0.0
    %2968 = vmatpush1.msra.mxu0 0.0
    %2969 = vmatprep.subr.mxu0 0.0
    %2970 = vmatpush1.msra.mxu0 0.0
    %2971 = vmatprep.subr.mxu0 0.0
    %2972 = vmatpush1.msra.mxu0 0.0
    %2973 = vmatprep.subr.mxu0 0.0
    %2974 = vmatpush1.msra.mxu0 0.0
    %2975 = vmatprep.subr.mxu0 0.0
    %2976 = vmatpush1.msra.mxu0 0.0
    %2977 = vmatprep.subr.mxu0 0.0
    %2978 = vmatpush1.msra.mxu0 0.0
    %2979 = vmatprep.subr.mxu0 0.0
    %2980 = vmatpush1.msra.mxu0 0.0
    %2981 = vmatprep.subr.mxu0 0.0
    %2982 = vmatpush1.msra.mxu0 0.0
    %2983 = vmatprep.subr.mxu0 0.0
    %2984 = vmatpush1.msra.mxu0 0.0
    %2985 = vmatprep.subr.mxu0 0.0
    %2986 = vmatpush1.msra.mxu0 0.0
    %2987 = vmatprep.subr.mxu0 0.0
    %2988 = vmatpush1.msra.mxu0 0.0
    %2989 = vmatprep.mubr.f32.mxu0 0.0
    %2990 = vmatmul.mubr.f32.gmra.mrb[0].mxu0 %v2802
    %v2991 = vpop.f32.mrb[0].mxu0
    %v2992 = vadd.f32 %v2922, %v2991
    %v2993 = vpop.f32.mrb[0].mxu0
    %2994 = vdwg.mxu0
    %s2995 = scalar_lea.vmem [#allocation4], 16
    %v2996 = vld [vmem:[%s2995] ss:$64 sm:$0x1]
    %v2997 = vld [vmem:[%s2995] ss:$64 sm:$0x2]
    %v2998 = vor.u32 %v2996, %v2997
    %s2999 = scalar_lea.vmem [#allocation4], 17
    %v3000 = vld [vmem:[%s2999] ss:$64 sm:$0x1]
    %v3001 = vld [vmem:[%s2999] ss:$64 sm:$0x2]
    %v3002 = vor.u32 %v3000, %v3001
    %s3003 = scalar_lea.vmem [#allocation4], 24
    %v3004 = vld [vmem:[%s3003] ss:$64 sm:$0x1]
    %v3005 = vld [vmem:[%s3003] ss:$64 sm:$0x2]
    %v3006 = vor.u32 %v3004, %v3005
    %s3007 = scalar_lea.vmem [#allocation4], 25
    %v3008 = vld [vmem:[%s3007] ss:$64 sm:$0x1]
    %v3009 = vld [vmem:[%s3007] ss:$64 sm:$0x2]
    %v3010 = vor.u32 %v3008, %v3009
    %v3011 = vmax.f32 %v2998, %v3002
    %v3012 = vmax.f32 %v3006, %v3010
    %v3013 = vmax.f32 %v3011, %v3012
    %s3014 = scalar_lea.vmem %s5, 256
    %v3015 = vld [vmem:[%s3014] sm:$0xff]
    %v3016 = vld [vmem:[%s3014 + $0x8] sm:$0xff]
    %v3017 = vld [vmem:[%s3014 + $0x10] sm:$0xff]
    %v3018 = vld [vmem:[%s3014 + $0x18] sm:$0xff]
    %v3019 = vld [vmem:[%s3014 + $0x20] sm:$0xff]
    %v3020 = vld [vmem:[%s3014 + $0x28] sm:$0xff]
    %v3021 = vld [vmem:[%s3014 + $0x30] sm:$0xff]
    %v3022 = vld [vmem:[%s3014 + $0x38] sm:$0xff]
    %v3023 = vld [vmem:[%s3014 + $0x40] sm:$0xff]
    %v3024 = vld [vmem:[%s3014 + $0x48] sm:$0xff]
    %v3025 = vld [vmem:[%s3014 + $0x50] sm:$0xff]
    %v3026 = vld [vmem:[%s3014 + $0x58] sm:$0xff]
    %v3027 = vld [vmem:[%s3014 + $0x60] sm:$0xff]
    %v3028 = vld [vmem:[%s3014 + $0x68] sm:$0xff]
    %v3029 = vld [vmem:[%s3014 + $0x70] sm:$0xff]
    %v3030 = vld [vmem:[%s3014 + $0x78] sm:$0xff]
    %3031 = vmatprep.subr.mxu0 0.0
    %3032 = vmatpush1.msra.mxu0 %v3015
    %3033 = vmatprep.subr.mxu0 0.0
    %3034 = vmatpush1.msra.mxu0 %v3016
    %3035 = vmatprep.subr.mxu0 0.0
    %3036 = vmatpush1.msra.mxu0 %v3017
    %3037 = vmatprep.subr.mxu0 0.0
    %3038 = vmatpush1.msra.mxu0 %v3018
    %3039 = vmatprep.subr.mxu0 0.0
    %3040 = vmatpush1.msra.mxu0 %v3019
    %3041 = vmatprep.subr.mxu0 0.0
    %3042 = vmatpush1.msra.mxu0 %v3020
    %3043 = vmatprep.subr.mxu0 0.0
    %3044 = vmatpush1.msra.mxu0 %v3021
    %3045 = vmatprep.subr.mxu0 0.0
    %3046 = vmatpush1.msra.mxu0 %v3022
    %3047 = vmatprep.subr.mxu0 0.0
    %3048 = vmatpush1.msra.mxu0 %v3023
    %3049 = vmatprep.subr.mxu0 0.0
    %3050 = vmatpush1.msra.mxu0 %v3024
    %3051 = vmatprep.subr.mxu0 0.0
    %3052 = vmatpush1.msra.mxu0 %v3025
    %3053 = vmatprep.subr.mxu0 0.0
    %3054 = vmatpush1.msra.mxu0 %v3026
    %3055 = vmatprep.subr.mxu0 0.0
    %3056 = vmatpush1.msra.mxu0 %v3027
    %3057 = vmatprep.subr.mxu0 0.0
    %3058 = vmatpush1.msra.mxu0 %v3028
    %3059 = vmatprep.subr.mxu0 0.0
    %3060 = vmatpush1.msra.mxu0 %v3029
    %3061 = vmatprep.subr.mxu0 0.0
    %3062 = vmatpush1.msra.mxu0 %v3030
    %3063 = vmatprep.subr.mxu0 0.0
    %3064 = vmatpush1.msra.mxu0 0.0
    %3065 = vmatprep.subr.mxu0 0.0
    %3066 = vmatpush1.msra.mxu0 0.0
    %3067 = vmatprep.subr.mxu0 0.0
    %3068 = vmatpush1.msra.mxu0 0.0
    %3069 = vmatprep.subr.mxu0 0.0
    %3070 = vmatpush1.msra.mxu0 0.0
    %3071 = vmatprep.subr.mxu0 0.0
    %3072 = vmatpush1.msra.mxu0 0.0
    %3073 = vmatprep.subr.mxu0 0.0
    %3074 = vmatpush1.msra.mxu0 0.0
    %3075 = vmatprep.subr.mxu0 0.0
    %3076 = vmatpush1.msra.mxu0 0.0
    %3077 = vmatprep.subr.mxu0 0.0
    %3078 = vmatpush1.msra.mxu0 0.0
    %3079 = vmatprep.subr.mxu0 0.0
    %3080 = vmatpush1.msra.mxu0 0.0
    %3081 = vmatprep.subr.mxu0 0.0
    %3082 = vmatpush1.msra.mxu0 0.0
    %3083 = vmatprep.subr.mxu0 0.0
    %3084 = vmatpush1.msra.mxu0 0.0
    %3085 = vmatprep.subr.mxu0 0.0
    %3086 = vmatpush1.msra.mxu0 0.0
    %3087 = vmatprep.subr.mxu0 0.0
    %3088 = vmatpush1.msra.mxu0 0.0
    %3089 = vmatprep.subr.mxu0 0.0
    %3090 = vmatpush1.msra.mxu0 0.0
    %3091 = vmatprep.subr.mxu0 0.0
    %3092 = vmatpush1.msra.mxu0 0.0
    %3093 = vmatprep.subr.mxu0 0.0
    %3094 = vmatpush1.msra.mxu0 0.0
    %3095 = vmatprep.mubr.f32.mxu0 0.0
    %3096 = vmatmul.mubr.f32.gmra.mrb[0].mxu0 %v3013
    %v3097 = vpop.f32.mrb[0].mxu0
    %v3098 = vadd.f32 0.0, %v3097
    %v3099 = vpop.f32.mrb[0].mxu0
    %3100 = vdwg.mxu0
    %v3101 = vadd.f32 %v2992, %v3098
    %s3102 = scalar_lea.vmem [#allocation4], 18
    %v3103 = vld [vmem:[%s3102] ss:$64 sm:$0x1]
    %v3104 = vld [vmem:[%s3102] ss:$64 sm:$0x2]
    %v3105 = vor.u32 %v3103, %v3104
    %s3106 = scalar_lea.vmem [#allocation4], 19
    %v3107 = vld [vmem:[%s3106] ss:$64 sm:$0x1]
    %v3108 = vld [vmem:[%s3106] ss:$64 sm:$0x2]
    %v3109 = vor.u32 %v3107, %v3108
    %s3110 = scalar_lea.vmem [#allocation4], 26
    %v3111 = vld [vmem:[%s3110] ss:$64 sm:$0x1]
    %v3112 = vld [vmem:[%s3110] ss:$64 sm:$0x2]
    %v3113 = vor.u32 %v3111, %v3112
    %s3114 = scalar_lea.vmem [#allocation4], 27
    %v3115 = vld [vmem:[%s3114] ss:$64 sm:$0x1]
    %v3116 = vld [vmem:[%s3114] ss:$64 sm:$0x2]
    %v3117 = vor.u32 %v3115, %v3116
    %v3118 = vmax.f32 %v3105, %v3109
    %v3119 = vmax.f32 %v3113, %v3117
    %v3120 = vmax.f32 %v3118, %v3119
    %s3121 = scalar_lea.vmem %s5, 384
    %v3122 = vld [vmem:[%s3121] sm:$0xff]
    %v3123 = vld [vmem:[%s3121 + $0x8] sm:$0xff]
    %v3124 = vld [vmem:[%s3121 + $0x10] sm:$0xff]
    %v3125 = vld [vmem:[%s3121 + $0x18] sm:$0xff]
    %v3126 = vld [vmem:[%s3121 + $0x20] sm:$0xff]
    %v3127 = vld [vmem:[%s3121 + $0x28] sm:$0xff]
    %v3128 = vld [vmem:[%s3121 + $0x30] sm:$0xff]
    %v3129 = vld [vmem:[%s3121 + $0x38] sm:$0xff]
    %v3130 = vld [vmem:[%s3121 + $0x40] sm:$0xff]
    %v3131 = vld [vmem:[%s3121 + $0x48] sm:$0xff]
    %v3132 = vld [vmem:[%s3121 + $0x50] sm:$0xff]
    %v3133 = vld [vmem:[%s3121 + $0x58] sm:$0xff]
    %v3134 = vld [vmem:[%s3121 + $0x60] sm:$0xff]
    %v3135 = vld [vmem:[%s3121 + $0x68] sm:$0xff]
    %v3136 = vld [vmem:[%s3121 + $0x70] sm:$0xff]
    %v3137 = vld [vmem:[%s3121 + $0x78] sm:$0xff]
    %3138 = vmatprep.subr.mxu0 0.0
    %3139 = vmatpush1.msra.mxu0 %v3122
    %3140 = vmatprep.subr.mxu0 0.0
    %3141 = vmatpush1.msra.mxu0 %v3123
    %3142 = vmatprep.subr.mxu0 0.0
    %3143 = vmatpush1.msra.mxu0 %v3124
    %3144 = vmatprep.subr.mxu0 0.0
    %3145 = vmatpush1.msra.mxu0 %v3125
    %3146 = vmatprep.subr.mxu0 0.0
    %3147 = vmatpush1.msra.mxu0 %v3126
    %3148 = vmatprep.subr.mxu0 0.0
    %3149 = vmatpush1.msra.mxu0 %v3127
    %3150 = vmatprep.subr.mxu0 0.0
    %3151 = vmatpush1.msra.mxu0 %v3128
    %3152 = vmatprep.subr.mxu0 0.0
    %3153 = vmatpush1.msra.mxu0 %v3129
    %3154 = vmatprep.subr.mxu0 0.0
    %3155 = vmatpush1.msra.mxu0 %v3130
    %3156 = vmatprep.subr.mxu0 0.0
    %3157 = vmatpush1.msra.mxu0 %v3131
    %3158 = vmatprep.subr.mxu0 0.0
    %3159 = vmatpush1.msra.mxu0 %v3132
    %3160 = vmatprep.subr.mxu0 0.0
    %3161 = vmatpush1.msra.mxu0 %v3133
    %3162 = vmatprep.subr.mxu0 0.0
    %3163 = vmatpush1.msra.mxu0 %v3134
    %3164 = vmatprep.subr.mxu0 0.0
    %3165 = vmatpush1.msra.mxu0 %v3135
    %3166 = vmatprep.subr.mxu0 0.0
    %3167 = vmatpush1.msra.mxu0 %v3136
    %3168 = vmatprep.subr.mxu0 0.0
    %3169 = vmatpush1.msra.mxu0 %v3137
    %3170 = vmatprep.subr.mxu0 0.0
    %3171 = vmatpush1.msra.mxu0 0.0
    %3172 = vmatprep.subr.mxu0 0.0
    %3173 = vmatpush1.msra.mxu0 0.0
    %3174 = vmatprep.subr.mxu0 0.0
    %3175 = vmatpush1.msra.mxu0 0.0
    %3176 = vmatprep.subr.mxu0 0.0
    %3177 = vmatpush1.msra.mxu0 0.0
    %3178 = vmatprep.subr.mxu0 0.0
    %3179 = vmatpush1.msra.mxu0 0.0
    %3180 = vmatprep.subr.mxu0 0.0
    %3181 = vmatpush1.msra.mxu0 0.0
    %3182 = vmatprep.subr.mxu0 0.0
    %3183 = vmatpush1.msra.mxu0 0.0
    %3184 = vmatprep.subr.mxu0 0.0
    %3185 = vmatpush1.msra.mxu0 0.0
    %3186 = vmatprep.subr.mxu0 0.0
    %3187 = vmatpush1.msra.mxu0 0.0
    %3188 = vmatprep.subr.mxu0 0.0
    %3189 = vmatpush1.msra.mxu0 0.0
    %3190 = vmatprep.subr.mxu0 0.0
    %3191 = vmatpush1.msra.mxu0 0.0
    %3192 = vmatprep.subr.mxu0 0.0
    %3193 = vmatpush1.msra.mxu0 0.0
    %3194 = vmatprep.subr.mxu0 0.0
    %3195 = vmatpush1.msra.mxu0 0.0
    %3196 = vmatprep.subr.mxu0 0.0
    %3197 = vmatpush1.msra.mxu0 0.0
    %3198 = vmatprep.subr.mxu0 0.0
    %3199 = vmatpush1.msra.mxu0 0.0
    %3200 = vmatprep.subr.mxu0 0.0
    %3201 = vmatpush1.msra.mxu0 0.0
    %3202 = vmatprep.mubr.f32.mxu0 0.0
    %3203 = vmatmul.mubr.f32.gmra.mrb[0].mxu0 %v3120
    %v3204 = vpop.f32.mrb[0].mxu0
    %v3205 = vadd.f32 0.0, %v3204
    %v3206 = vpop.f32.mrb[0].mxu0
    %3207 = vdwg.mxu0
    %v3208 = vadd.f32 %v3101, %v3205
    %v3209 = vld [vmem:[%s6] sm:$0x1]
    %v3211 = vlaneseq
    %v3212 = vshrl.u32 %v3211, 7
    %v3213 = vsub.s32 0, %v3212
    %v3214 = vrot.slane %v3209, %v3213
    %v3216 = vadd.f32 %v3208, %v3214
    %v3217 = vmax.f32 %v3216, 0.0
    %v3218 = vld [vmem:[%s7] sm:$0xff]
    %v3219 = vld [vmem:[%s7 + $0x8] sm:$0xff]
    %v3220 = vld [vmem:[%s7 + $0x10] sm:$0xff]
    %v3221 = vld [vmem:[%s7 + $0x18] sm:$0xff]
    %v3222 = vld [vmem:[%s7 + $0x20] sm:$0xff]
    %v3223 = vld [vmem:[%s7 + $0x28] sm:$0xff]
    %v3224 = vld [vmem:[%s7 + $0x30] sm:$0xff]
    %v3225 = vld [vmem:[%s7 + $0x38] sm:$0xff]
    %v3226 = vld [vmem:[%s7 + $0x40] sm:$0xff]
    %v3227 = vld [vmem:[%s7 + $0x48] sm:$0xff]
    %v3228 = vld [vmem:[%s7 + $0x50] sm:$0xff]
    %v3229 = vld [vmem:[%s7 + $0x58] sm:$0xff]
    %v3230 = vld [vmem:[%s7 + $0x60] sm:$0xff]
    %v3231 = vld [vmem:[%s7 + $0x68] sm:$0xff]
    %v3232 = vld [vmem:[%s7 + $0x70] sm:$0xff]
    %v3233 = vld [vmem:[%s7 + $0x78] sm:$0xff]
    %v3234 = vld [vmem:[%s8] sm:$0x1]
    %v3236 = vlaneseq
    %v3237 = vshrl.u32 %v3236, 7
    %v3238 = vsub.s32 0, %v3237
    %v3239 = vrot.slane %v3234, %v3238
    %3241 = vmatprep.subr.mxu0 0.0
    %3242 = vmatpush1.msra.mxu0 %v3218
    %3243 = vmatprep.subr.mxu0 0.0
    %3244 = vmatpush1.msra.mxu0 %v3219
    %3245 = vmatprep.subr.mxu0 0.0
    %3246 = vmatpush1.msra.mxu0 %v3220
    %3247 = vmatprep.subr.mxu0 0.0
    %3248 = vmatpush1.msra.mxu0 %v3221
    %3249 = vmatprep.subr.mxu0 0.0
    %3250 = vmatpush1.msra.mxu0 %v3222
    %3251 = vmatprep.subr.mxu0 0.0
    %3252 = vmatpush1.msra.mxu0 %v3223
    %3253 = vmatprep.subr.mxu0 0.0
    %3254 = vmatpush1.msra.mxu0 %v3224
    %3255 = vmatprep.subr.mxu0 0.0
    %3256 = vmatpush1.msra.mxu0 %v3225
    %3257 = vmatprep.subr.mxu0 0.0
    %3258 = vmatpush1.msra.mxu0 %v3226
    %3259 = vmatprep.subr.mxu0 0.0
    %3260 = vmatpush1.msra.mxu0 %v3227
    %3261 = vmatprep.subr.mxu0 0.0
    %3262 = vmatpush1.msra.mxu0 %v3228
    %3263 = vmatprep.subr.mxu0 0.0
    %3264 = vmatpush1.msra.mxu0 %v3229
    %3265 = vmatprep.subr.mxu0 0.0
    %3266 = vmatpush1.msra.mxu0 %v3230
    %3267 = vmatprep.subr.mxu0 0.0
    %3268 = vmatpush1.msra.mxu0 %v3231
    %3269 = vmatprep.subr.mxu0 0.0
    %3270 = vmatpush1.msra.mxu0 %v3232
    %3271 = vmatprep.subr.mxu0 0.0
    %3272 = vmatpush1.msra.mxu0 %v3233
    %3273 = vmatprep.subr.mxu0 0.0
    %3274 = vmatpush1.msra.mxu0 0.0
    %3275 = vmatprep.subr.mxu0 0.0
    %3276 = vmatpush1.msra.mxu0 0.0
    %3277 = vmatprep.subr.mxu0 0.0
    %3278 = vmatpush1.msra.mxu0 0.0
    %3279 = vmatprep.subr.mxu0 0.0
    %3280 = vmatpush1.msra.mxu0 0.0
    %3281 = vmatprep.subr.mxu0 0.0
    %3282 = vmatpush1.msra.mxu0 0.0
    %3283 = vmatprep.subr.mxu0 0.0
    %3284 = vmatpush1.msra.mxu0 0.0
    %3285 = vmatprep.subr.mxu0 0.0
    %3286 = vmatpush1.msra.mxu0 0.0
    %3287 = vmatprep.subr.mxu0 0.0
    %3288 = vmatpush1.msra.mxu0 0.0
    %3289 = vmatprep.subr.mxu0 0.0
    %3290 = vmatpush1.msra.mxu0 0.0
    %3291 = vmatprep.subr.mxu0 0.0
    %3292 = vmatpush1.msra.mxu0 0.0
    %3293 = vmatprep.subr.mxu0 0.0
    %3294 = vmatpush1.msra.mxu0 0.0
    %3295 = vmatprep.subr.mxu0 0.0
    %3296 = vmatpush1.msra.mxu0 0.0
    %3297 = vmatprep.subr.mxu0 0.0
    %3298 = vmatpush1.msra.mxu0 0.0
    %3299 = vmatprep.subr.mxu0 0.0
    %3300 = vmatpush1.msra.mxu0 0.0
    %3301 = vmatprep.subr.mxu0 0.0
    %3302 = vmatpush1.msra.mxu0 0.0
    %3303 = vmatprep.subr.mxu0 0.0
    %3304 = vmatpush1.msra.mxu0 0.0
    %3305 = vmatprep.mubr.f32.mxu0 0.0
    %3306 = vmatmul.mubr.f32.gmra.mrb[0].mxu0 %v3217
    %v3307 = vpop.f32.mrb[0].mxu0
    %v3308 = vadd.f32 %v3239, %v3307
    %v3309 = vpop.f32.mrb[0].mxu0
    %3310 = vdwg.mxu0
    %v3311 = vlaneseq
    %v3312 = vand.u32 %v3311, 127
    %vm3313 = vcmp.lt.s32.totalorder %v3312, 10
    %v3314 = vsel %vm3313, %v3308, -1e+30
    %vm3315 = vcmask 1041408
    %v3316 = vsel %vm3315, %v3314, -inf
    %3317 = vmax.xlane.f32.xlu0 %v3316
    %v3318 = vpop.xlane.xlu0 %3317
    %v3319 = vsub.f32 %v3314, %v3318
    %v3320 = vmul.f32 %v3319, 1.442695
    %v3321 = vpow.pop %v3320
    %v3322 = vsel %vm3315, %v3321, 0.0
    %3323 = vadd.xlane.f32.xlu0 %v3322
    %v3324 = vpop.xlane.xlu0 %3323
    %v3325 = vlog2.pop %v3324
    %v3326 = vmul.f32 %v3325, 0.6931472
    %v3327 = vsub.f32 %v3319, %v3326
    %3328 = vst [vmem:[#allocation5] sm:$0x3] %v3327
    // Predicated region
    $region38: #{cnn_forward.1} parent=1 // pred_check
      _
    $region39: #{cnn_forward.1} parent=1 // pred_check_branch
      %3330 = sbr.rel (0) target = $region41
    $region40: #{cnn_forward.1} parent=1 // pred_region
      %s3332 = ssub.s32 32, 32
      %3333 = vsyncadd [#allocation6], %s3332
      %s3335 = sshll.u32 [#allocation5], 4
      %s3336 = int_to_ptr.vmem [resolvable:$true] %s3335
      %3338 = dma.vmem_to_hbm [thread:$0]  %s3336, 32, %s9, [#allocation6]
    $region41: #{cnn_forward.1} parent=1 // pred_fallthru
      _
    // Predicated region
    $region42: #{cnn_forward.1} parent=1 // pred_check
      _
    $region43: #{cnn_forward.1} parent=1 // pred_check_branch
      %3340 = sbr.rel (0) target = $region45
    $region44: #{cnn_forward.1} parent=1 // pred_region
      %3341 = dma.done [#allocation6], 32
    $region45: #{cnn_forward.1} parent=1 // pred_fallthru
      _
    %3342 = vsyncpa [#allocation6], 1

</llo_original>
